<compile_context>
chip_gen: v5e
topology: v5e:2x2
jax: 0.10.0
libtpu: 0.0.40
codegen_flags: <defaults>
</compile_context>

<pallas_src>
import functools

import numpy as np
import jax
import jax.numpy as jnp
from jax.experimental import pallas as pl
from jax.experimental.pallas import tpu as pltpu

EPS = 1e-5
MLP_RATIO = 4
_SQRT2_INV = 0.7071067811865476
_NEG_INF = -1e9   # cross-window mask for the block-diagonal full-M attention


# ----------------------------- shared math helpers ----------------------------

def _ln(x, g, b):
    mu = jnp.mean(x, axis=-1, keepdims=True)
    var = jnp.mean(jnp.square(x - mu), axis=-1, keepdims=True)
    return (x - mu) * jax.lax.rsqrt(var + EPS) * g + b


def _gelu_exact(x):
    return 0.5 * x * (1.0 + jax.lax.erf(x * _SQRT2_INV))   # nn.GELU default


# ----------------------------- Pallas kernels --------------------------------

def _swin_block_kernel(xw_ref, bias_ref, g1_ref, b1_ref,
                       wqkv_ref, bqkv_ref, wp_ref, bp_ref,
                       g2_ref, b2_ref, w1_ref, b1m_ref, w2_ref, b2m_ref,
                       o_ref):
    """Fused Swin block for one batch element (all windows in one grid step).

    xw_ref  : (1, M, C)   window-partitioned tokens (M = nW * N), pre-LN
    bias_ref: (nh, M, M)  block-diagonal bias: rel-pos + shift mask on the
                          diagonal window blocks, -1e9 on cross-window entries
    wqkv_ref: (C, 3C)     fused QKV weight;  wp_ref: (C, C) output projection
    o_ref   : (1, C, M)   output stored transposed (lane-dense store)
    """
    _, M, C = xw_ref.shape
    nh = bias_ref.shape[0]
    hd = C // nh
    scale = float(hd) ** -0.5

    x = xw_ref[0].astype(jnp.float32)                        # (M, C)
    y = _ln(x, g1_ref[...], b1_ref[...])                     # LN1 (per token)

    # One fused QKV matmul (contraction K=C) instead of 3*nh K=C/hd slivers.
    qkv = jnp.dot(y, wqkv_ref[...], preferred_element_type=jnp.float32) + bqkv_ref[...]

    # Per-head block-diagonal attention over all M tokens: one (M,hd)@(hd,M)
    # and one (M,M)@(M,hd) matmul per head.  nh is small (<=4) and each (M,M)
    # f32 tile is <=256 KB, so the static unroll stays well inside VMEM.
    heads = []
    for h in range(nh):
        q = qkv[:, h * hd:(h + 1) * hd] * scale              # matches torch q*scale
        k = qkv[:, C + h * hd: C + (h + 1) * hd]
        v = qkv[:, 2 * C + h * hd: 2 * C + (h + 1) * hd]
        s = jax.lax.dot_general(q, k, (((1,), (1,)), ((), ())),
                                preferred_element_type=jnp.float32)   # (M, M)
        s = s + bias_ref[h]
        s = s - jnp.max(s, axis=-1, keepdims=True)
        p = jnp.exp(s)                                       # masked entries -> 0
        # exact reciprocal keeps 1e-4 parity with the fp32 reference
        # (approx=True would move it to the EUP at a numerics cost).
        p = p * pl.reciprocal(jnp.sum(p, axis=-1, keepdims=True), approx=False)
        heads.append(jnp.dot(p, v, preferred_element_type=jnp.float32))  # (M, hd)
    o = jnp.concatenate(heads, axis=-1)                      # (M, C), head-major

    # Single fused output projection (K=C) instead of nh K=hd matmuls.
    attn = jnp.dot(o, wp_ref[...], preferred_element_type=jnp.float32) + bp_ref[...]
    u = x + attn                                             # residual 1

    # ---- MLP branch ----------------------------------------------------------
    z = _ln(u, g2_ref[...], b2_ref[...])
    hact = jnp.dot(z, w1_ref[...], preferred_element_type=jnp.float32) + b1m_ref[...]
    hact = _gelu_exact(hact)
    z2 = jnp.dot(hact, w2_ref[...], preferred_element_type=jnp.float32) + b2m_ref[...]

    out = u + z2                                             # (M, C)
    # Lane-dense store: with C=32 on lanes every vst would be 32/128 masked;
    # one XLU transpose gives an M-wide (>=128 on layer 2) last dim instead.
    o_ref[0] = out.T.astype(o_ref.dtype)


def _ln_linear_kernel(x_ref, g_ref, b_ref, w_ref, o_ref):
    x = x_ref[...].astype(jnp.float32)
    y = _ln(x, g_ref[...], b_ref[...])
    o_ref[...] = jnp.dot(y, w_ref[...],
                         preferred_element_type=jnp.float32).astype(o_ref.dtype)


# ----------------------------- kernel wrappers --------------------------------

def _row_block(m):
    # Biggest block that (a) amortizes the ~0.35us/step pipeline overhead and
    # (b) still leaves >=2 grid steps so dual-TC v7x can shard rows.
    if m < 16:
        return m
    target = min(2048, m // 2)
    for cand in (2048, 1024, 512, 256, 128, 64, 32, 16, 8):
        if cand <= target and m % cand == 0:
            return cand
    return m


def apply_ln_linear(x2d, g, b, w, use_pallas):
    M, C = x2d.shape
    Oc = w.shape[1]
    if not use_pallas:
        y = _ln(x2d.astype(jnp.float32), g, b)
        return (y @ w).astype(x2d.dtype)
    bm = _row_block(M)
    return pl.pallas_call(
        _ln_linear_kernel,
        out_shape=jax.ShapeDtypeStruct((M, Oc), x2d.dtype),
        grid=(M // bm,),
        in_specs=[pl.BlockSpec((bm, C), lambda i: (i, 0)),
                  pl.BlockSpec((1, C), lambda i: (0, 0)),
                  pl.BlockSpec((1, C), lambda i: (0, 0)),
                  pl.BlockSpec((C, Oc), lambda i: (0, 0))],
        out_specs=pl.BlockSpec((bm, Oc), lambda i: (i, 0)),
        compiler_params=pltpu.CompilerParams(dimension_semantics=("parallel",)),
    )(x2d, g.reshape(1, C), b.reshape(1, C), w)


# ----------------------------- Swin glue (plain JAX / numpy) ------------------

def _window_partition(x, ws):
    B, H, W, C = x.shape
    x = x.reshape(B, H // ws, ws, W // ws, ws, C)
    x = x.transpose(0, 1, 3, 2, 4, 5)
    return x.reshape(B, (H // ws) * (W // ws), ws * ws, C)


def _window_reverse(wins, ws, H, W):
    B, nW, N, C = wins.shape
    x = wins.reshape(B, H // ws, W // ws, ws, ws, C)
    x = x.transpose(0, 1, 3, 2, 4, 5)
    return x.reshape(B, H, W, C)


@functools.lru_cache(maxsize=None)
def _relative_position_index(ws):
    coords = np.stack(np.meshgrid(np.arange(ws), np.arange(ws), indexing="ij"))
    flat = coords.reshape(2, -1)
    rel = (flat[:, :, None] - flat[:, None, :]).transpose(1, 2, 0).astype(np.int64)
    rel[:, :, 0] += ws - 1
    rel[:, :, 1] += ws - 1
    rel[:, :, 0] *= 2 * ws - 1
    return rel.sum(-1)                                   # (N, N)


@functools.lru_cache(maxsize=None)
def _attn_mask(H, W, ws, shift):
    N = ws * ws
    nW = (H // ws) * (W // ws)
    if shift == 0:
        return np.zeros((nW, N, N), np.float32)
    img = np.zeros((H, W), np.float32)
    cnt = 0
    for hs in (slice(0, -ws), slice(-ws, -shift), slice(-shift, None)):
        for wsl in (slice(0, -ws), slice(-ws, -shift), slice(-shift, None)):
            img[hs, wsl] = cnt
            cnt += 1
    mw = img.reshape(H // ws, ws, W // ws, ws).transpose(0, 2, 1, 3).reshape(nW, N)
    diff = mw[:, None, :] - mw[:, :, None]
    return np.where(diff != 0, -100.0, 0.0).astype(np.float32)


@functools.lru_cache(maxsize=None)
def _block_diag_meta(H, W, ws):
    N = ws * ws
    nW = (H // ws) * (W // ws)
    win_id = np.repeat(np.arange(nW), N)                 # token -> window
    pos = np.tile(np.arange(N), nW)                      # token -> pos in window
    same = win_id[:, None] == win_id[None, :]            # (M, M) bool
    return win_id, pos, same


def _attn_bias_full(rpb_table, H, W, ws, shift, nh):
    """Block-diagonal (nh, M, M) bias: rel-pos + shift mask per window on the
    diagonal, -1e9 (exp -> 0) on cross-window entries.  Lane-dense last dim."""
    N = ws * ws
    rel = _relative_position_index(ws).reshape(-1)
    rpb = rpb_table[rel].reshape(N, N, nh).transpose(2, 0, 1)      # (nh, N, N)
    mask = jnp.asarray(_attn_mask(H, W, ws, shift))                # (nW, N, N)
    per_win = rpb[:, None] + mask[None]                            # (nh, nW, N, N)
    win_id, pos, same = _block_diag_meta(H, W, ws)
    full = per_win[:, win_id[:, None], pos[:, None], pos[None, :]]  # (nh, M, M)
    return jnp.where(same[None], full, jnp.float32(_NEG_INF))


def _const_spec(shape):
    zeros = (0,) * len(shape)
    return pl.BlockSpec(shape, lambda b, _z=zeros: _z)             # VMEM-resident


# ----------------------------- Swin block --------------------------------------

def _pallas_swin_block(x, p, ws, shift, head_dim):
    B, H, W, C = x.shape
    nh = C // head_dim
    N = ws * ws
    Hdn = p["fc1_w"].shape[1]

    xs = jnp.roll(x, (-shift, -shift), (1, 2)) if shift > 0 else x
    xw = _window_partition(xs, ws)                                 # (B, nW, N, C)
    nW = xw.shape[1]
    M = nW * N
    xw2 = xw.reshape(B, M, C)

    bias = _attn_bias_full(p["rpb_table"], H, W, ws, shift, nh)    # (nh, M, M)

    out_t = pl.pallas_call(
        _swin_block_kernel,
        out_shape=jax.ShapeDtypeStruct((B, C, M), x.dtype),
        grid=(B,),
        in_specs=[
            pl.BlockSpec((1, M, C), lambda b: (b, 0, 0)),
            _const_spec((nh, M, M)),
            _const_spec((1, C)), _const_spec((1, C)),
            _const_spec((C, 3 * C)), _const_spec((1, 3 * C)),
            _const_spec((C, C)), _const_spec((1, C)),
            _const_spec((1, C)), _const_spec((1, C)),
            _const_spec((C, Hdn)), _const_spec((1, Hdn)),
            _const_spec((Hdn, C)), _const_spec((1, C)),
        ],
        out_specs=pl.BlockSpec((1, C, M), lambda b: (b, 0, 0)),
        compiler_params=pltpu.CompilerParams(dimension_semantics=("parallel",)),
    )(xw2, bias,
      p["ln1_g"].reshape(1, C), p["ln1_b"].reshape(1, C),
      p["qkv_w"], p["qkv_b"].reshape(1, 3 * C),
      p["proj_w"], p["proj_b"].reshape(1, C),
      p["ln2_g"].reshape(1, C), p["ln2_b"].reshape(1, C),
      p["fc1_w"], p["fc1_b"].reshape(1, Hdn),
      p["fc2_w"], p["fc2_b"].reshape(1, C))

    # fold the (C, M) -> (M, C) transpose into the window-reverse permutation
    yw = jnp.transpose(out_t, (0, 2, 1)).reshape(B, nW, N, C)
    ys = _window_reverse(yw, ws, H, W)
    return jnp.roll(ys, (shift, shift), (1, 2)) if shift > 0 else ys


def _ref_swin_block(x, p, ws, shift, head_dim):
    """Plain-JAX reference mirroring the PyTorch op order exactly."""
    B, H, W, C = x.shape
    nh = C // head_dim
    N = ws * ws
    scale = float(head_dim) ** -0.5
    shortcut = x
    xn = _ln(x.reshape(-1, C).astype(jnp.float32),
             p["ln1_g"], p["ln1_b"]).reshape(B, H, W, C)
    if shift > 0:
        xn = jnp.roll(xn, (-shift, -shift), (1, 2))
    xw = _window_partition(xn, ws)                                 # (B, nW, N, C)
    rel = _relative_position_index(ws).reshape(-1)
    rpb = p["rpb_table"][rel].reshape(N, N, nh).transpose(2, 0, 1)
    mask = jnp.asarray(_attn_mask(H, W, ws, shift))
    qkv = xw.astype(jnp.float32) @ p["qkv_w"] + p["qkv_b"]
    qkv = qkv.reshape(B, -1, N, 3, nh, head_dim)
    q = jnp.moveaxis(qkv[..., 0, :, :], 3, 2)                      # (B,nW,nh,N,hd)
    k = jnp.moveaxis(qkv[..., 1, :, :], 3, 2)
    v = jnp.moveaxis(qkv[..., 2, :, :], 3, 2)
    a = jnp.einsum("bwhnd,bwhmd->bwhnm", q, k) * scale
    a = a + rpb[None, None] + mask[None, :, None]
    a = jax.nn.softmax(a, axis=-1)
    o = jnp.einsum("bwhnm,bwhmd->bwhnd", a, v)
    o = jnp.moveaxis(o, 2, 3).reshape(B, -1, N, C)
    aw = o @ p["proj_w"] + p["proj_b"]
    xr = _window_reverse(aw, ws, H, W)
    if shift > 0:
        xr = jnp.roll(xr, (shift, shift), (1, 2))
    x = shortcut + xr.astype(shortcut.dtype)
    x2 = x.reshape(-1, C).astype(jnp.float32)
    y = _ln(x2, p["ln2_g"], p["ln2_b"])
    h = _gelu_exact(y @ p["fc1_w"] + p["fc1_b"])
    x2 = x2 + h @ p["fc2_w"] + p["fc2_b"]
    return x2.reshape(B, H, W, C).astype(x.dtype)


def swin_block(x, p, ws, shift, head_dim, use_pallas):
    if use_pallas:
        return _pallas_swin_block(x, p, ws, shift, head_dim)
    return _ref_swin_block(x, p, ws, shift, head_dim)


def patch_splitting(x, layer, use_pallas):
    B, H, W, C = x.shape
    y = apply_ln_linear(x.reshape(-1, C), layer["ps_g"], layer["ps_b"],
                        layer["ps_w"], use_pallas)
    out_dim = layer["ps_w"].shape[1] // 4
    y = y.reshape(B, H, W, 2, 2, out_dim)
    y = y.transpose(0, 1, 3, 2, 4, 5).reshape(B, 2 * H, 2 * W, out_dim)
    return y


def swin_t_hyper_synthesis(x_nchw, params, cfg, use_pallas=True):
    x = jnp.transpose(x_nchw, (0, 2, 3, 1))          # NCHW -> NHWC (permute(0,2,3,1))
    for i, layer in enumerate(params):
        ws = cfg["window_size"][i]
        hd = cfg["head_dim"][i]
        for d, blk in enumerate(layer["blocks"]):
            shift = 0 if d % 2 == 0 else ws // 2
            x = swin_block(x, blk, ws, shift, hd, use_pallas)
        x = patch_splitting(x, layer, use_pallas)    # PatchSplitting: 2x upsample
    return jnp.transpose(x, (0, 3, 1, 2))            # NHWC -> NCHW (permute(0,3,1,2))


# ----------------------------- deterministic params ---------------------------

def init_params(key, cfg):
    params = []
    for i, depth in enumerate(cfg["depths"]):
        dim = cfg["embed_dim"][i]
        out_dim = cfg["embed_out_dim"][i]
        hd = cfg["head_dim"][i]
        ws = cfg["window_size"][i]
        nh = dim // hd
        hidden = MLP_RATIO * dim
        blocks = []
        for _ in range(depth):
            key, k1, k2, k3, k4, k5 = jax.random.split(key, 6)
            blocks.append(dict(
                ln1_g=jnp.ones((dim,), jnp.float32),
                ln1_b=jnp.zeros((dim,), jnp.float32),
                qkv_w=0.02 * jax.random.normal(k1, (dim, 3 * dim), jnp.float32),
                qkv_b=jnp.zeros((3 * dim,), jnp.float32),
                rpb_table=0.02 * jax.random.normal(k2, ((2 * ws - 1) ** 2, nh), jnp.float32),
                proj_w=0.02 * jax.random.normal(k3, (dim, dim), jnp.float32),
                proj_b=jnp.zeros((dim,), jnp.float32),
                ln2_g=jnp.ones((dim,), jnp.float32),
                ln2_b=jnp.zeros((dim,), jnp.float32),
                fc1_w=0.02 * jax.random.normal(k4, (dim, hidden), jnp.float32),
                fc1_b=jnp.zeros((hidden,), jnp.float32),
                fc2_w=0.02 * jax.random.normal(k5, (hidden, dim), jnp.float32),
                fc2_b=jnp.zeros((dim,), jnp.float32),
            ))
        key, kps = jax.random.split(key)
        params.append(dict(
            blocks=blocks,
            ps_g=jnp.ones((dim,), jnp.float32),
            ps_b=jnp.zeros((dim,), jnp.float32),
            ps_w=0.02 * jax.random.normal(kps, (dim, 4 * out_dim), jnp.float32),
        ))
    return params


if __name__ == "__main__":
    cfg = dict(embed_dim=[32, 32], embed_out_dim=[32, 16],
               depths=[2, 2], head_dim=[8, 8], window_size=[4, 4])
    key = jax.random.PRNGKey(0)
    kx, kp = jax.random.split(key)
    x = jax.random.normal(kx, (2, cfg["embed_dim"][0], 8, 8), jnp.float32)  # NCHW
    params = init_params(kp, cfg)

    out = swin_t_hyper_synthesis(x, params, cfg, use_pallas=True)
    out = jax.block_until_ready(out)

    ref = swin_t_hyper_synthesis(x, params, cfg, use_pallas=False)
    ref = jax.block_until_ready(ref)

    assert out.shape == (2, cfg["embed_out_dim"][-1], 32, 32), out.shape
    np.testing.assert_allclose(np.asarray(out), np.asarray(ref), rtol=1e-4, atol=1e-4)
    print("KERNEL_OK")
</pallas_src>

<mosaic_0001>
module attributes {stable_mosaic.version = 11 : i64} {
  func.func @_swin_block_kernel(%arg0: i32, %arg1: memref<1x64x32xf32, #tpu.memory_space<vmem>>, %arg2: memref<4x64x64xf32, #tpu.memory_space<vmem>>, %arg3: memref<1x32xf32, #tpu.memory_space<vmem>>, %arg4: memref<1x32xf32, #tpu.memory_space<vmem>>, %arg5: memref<32x96xf32, #tpu.memory_space<vmem>>, %arg6: memref<1x96xf32, #tpu.memory_space<vmem>>, %arg7: memref<32x32xf32, #tpu.memory_space<vmem>>, %arg8: memref<1x32xf32, #tpu.memory_space<vmem>>, %arg9: memref<1x32xf32, #tpu.memory_space<vmem>>, %arg10: memref<1x32xf32, #tpu.memory_space<vmem>>, %arg11: memref<32x128xf32, #tpu.memory_space<vmem>>, %arg12: memref<1x128xf32, #tpu.memory_space<vmem>>, %arg13: memref<128x32xf32, #tpu.memory_space<vmem>>, %arg14: memref<1x32xf32, #tpu.memory_space<vmem>>, %arg15: memref<1x32x64xf32, #tpu.memory_space<vmem>>) attributes {dimension_semantics = [#tpu.dimension_semantics<parallel>], iteration_bounds = array<i64: 2>, scalar_prefetch = 0 : i64, scratch_operands = 0 : i64, tpu.core_type = #tpu.core_type<tc>, window_params = [{transform_indices = @transform_0, window_bounds = array<i64: 1, 64, 32>}, {pipeline_mode = #tpu.pipeline_mode<synchronous>, transform_indices = @transform_1, window_bounds = array<i64: 4, 64, 64>}, {pipeline_mode = #tpu.pipeline_mode<synchronous>, transform_indices = @transform_2, window_bounds = array<i64: 1, 32>}, {pipeline_mode = #tpu.pipeline_mode<synchronous>, transform_indices = @transform_3, window_bounds = array<i64: 1, 32>}, {pipeline_mode = #tpu.pipeline_mode<synchronous>, transform_indices = @transform_4, window_bounds = array<i64: 32, 96>}, {pipeline_mode = #tpu.pipeline_mode<synchronous>, transform_indices = @transform_5, window_bounds = array<i64: 1, 96>}, {pipeline_mode = #tpu.pipeline_mode<synchronous>, transform_indices = @transform_6, window_bounds = array<i64: 32, 32>}, {pipeline_mode = #tpu.pipeline_mode<synchronous>, transform_indices = @transform_7, window_bounds = array<i64: 1, 32>}, {pipeline_mode = #tpu.pipeline_mode<synchronous>, transform_indices = @transform_8, window_bounds = array<i64: 1, 32>}, {pipeline_mode = #tpu.pipeline_mode<synchronous>, transform_indices = @transform_9, window_bounds = array<i64: 1, 32>}, {pipeline_mode = #tpu.pipeline_mode<synchronous>, transform_indices = @transform_10, window_bounds = array<i64: 32, 128>}, {pipeline_mode = #tpu.pipeline_mode<synchronous>, transform_indices = @transform_11, window_bounds = array<i64: 1, 128>}, {pipeline_mode = #tpu.pipeline_mode<synchronous>, transform_indices = @transform_12, window_bounds = array<i64: 128, 32>}, {pipeline_mode = #tpu.pipeline_mode<synchronous>, transform_indices = @transform_13, window_bounds = array<i64: 1, 32>}, {transform_indices = @transform_14, window_bounds = array<i64: 1, 32, 64>}]} {
    %c0 = arith.constant 0 : index
    %c0_0 = arith.constant 0 : index
    %c0_1 = arith.constant 0 : index
    %0 = vector.load %arg1[%c0, %c0_0, %c0_1] : memref<1x64x32xf32, #tpu.memory_space<vmem>>, vector<1x64x32xf32>
    %1 = vector.shape_cast %0 : vector<1x64x32xf32> to vector<64x32xf32>
    %c0_2 = arith.constant 0 : index
    %c0_3 = arith.constant 0 : index
    %2 = vector.load %arg3[%c0_2, %c0_3] : memref<1x32xf32, #tpu.memory_space<vmem>>, vector<1x32xf32>
    %c0_4 = arith.constant 0 : index
    %c0_5 = arith.constant 0 : index
    %3 = vector.load %arg4[%c0_4, %c0_5] : memref<1x32xf32, #tpu.memory_space<vmem>>, vector<1x32xf32>
    %cst = arith.constant dense<0.000000e+00> : vector<64xf32>
    %4 = vector.multi_reduction <add>, %1, %cst [1] : vector<64x32xf32> to vector<64xf32>
    %5 = vector.shape_cast %4 : vector<64xf32> to vector<64x1xf32>
    %cst_6 = arith.constant 3.200000e+01 : f32
    %6 = vector.broadcast %cst_6 : f32 to vector<64x1xf32>
    %7 = arith.divf %5, %6 : vector<64x1xf32>
    %8 = vector.broadcast %7 : vector<64x1xf32> to vector<64x32xf32>
    %9 = arith.subf %1, %8 : vector<64x32xf32>
    %10 = arith.mulf %9, %9 : vector<64x32xf32>
    %cst_7 = arith.constant dense<0.000000e+00> : vector<64xf32>
    %11 = vector.multi_reduction <add>, %10, %cst_7 [1] : vector<64x32xf32> to vector<64xf32>
    %12 = vector.shape_cast %11 : vector<64xf32> to vector<64x1xf32>
    %cst_8 = arith.constant 3.200000e+01 : f32
    %13 = vector.broadcast %cst_8 : f32 to vector<64x1xf32>
    %14 = arith.divf %12, %13 : vector<64x1xf32>
    %15 = vector.broadcast %7 : vector<64x1xf32> to vector<64x32xf32>
    %16 = arith.subf %1, %15 : vector<64x32xf32>
    %cst_9 = arith.constant 9.99999974E-6 : f32
    %17 = vector.broadcast %cst_9 : f32 to vector<64x1xf32>
    %18 = arith.addf %14, %17 : vector<64x1xf32>
    %19 = math.rsqrt %18 : vector<64x1xf32>
    %20 = vector.broadcast %19 : vector<64x1xf32> to vector<64x32xf32>
    %21 = arith.mulf %16, %20 : vector<64x32xf32>
    %22 = vector.broadcast %2 : vector<1x32xf32> to vector<64x32xf32>
    %23 = arith.mulf %21, %22 : vector<64x32xf32>
    %24 = vector.broadcast %3 : vector<1x32xf32> to vector<64x32xf32>
    %25 = arith.addf %23, %24 : vector<64x32xf32>
    %c0_10 = arith.constant 0 : index
    %c0_11 = arith.constant 0 : index
    %26 = vector.load %arg5[%c0_10, %c0_11] : memref<32x96xf32, #tpu.memory_space<vmem>>, vector<32x96xf32>
    %cst_12 = arith.constant dense<0.000000e+00> : vector<64x96xf32>
    %27 = tpu.matmul %25, %26, %cst_12 {dimension_numbers = #tpu.dot_dimension_numbers<[1], [0], [0], [1], [0, 0, 1, 1], [], []>} : vector<64x32xf32>, vector<32x96xf32>, vector<64x96xf32> -> vector<64x96xf32>
    %c0_13 = arith.constant 0 : index
    %c0_14 = arith.constant 0 : index
    %28 = vector.load %arg6[%c0_13, %c0_14] : memref<1x96xf32, #tpu.memory_space<vmem>>, vector<1x96xf32>
    %29 = vector.broadcast %28 : vector<1x96xf32> to vector<64x96xf32>
    %30 = arith.addf %27, %29 : vector<64x96xf32>
    %31 = vector.extract_strided_slice %30 {offsets = [0, 0], sizes = [64, 8], strides = [1, 1]} : vector<64x96xf32> to vector<64x8xf32>
    %cst_15 = arith.constant 0.353553385 : f32
    %32 = vector.broadcast %cst_15 : f32 to vector<64x8xf32>
    %33 = arith.mulf %31, %32 : vector<64x8xf32>
    %34 = vector.extract_strided_slice %30 {offsets = [0, 32], sizes = [64, 8], strides = [1, 1]} : vector<64x96xf32> to vector<64x8xf32>
    %35 = vector.extract_strided_slice %30 {offsets = [0, 64], sizes = [64, 8], strides = [1, 1]} : vector<64x96xf32> to vector<64x8xf32>
    %cst_16 = arith.constant dense<0.000000e+00> : vector<64x64xf32>
    %36 = tpu.matmul %33, %34, %cst_16 {dimension_numbers = #tpu.dot_dimension_numbers<[1], [1], [0], [0], [0, 0, 1, 0], [], []>} : vector<64x8xf32>, vector<64x8xf32>, vector<64x64xf32> -> vector<64x64xf32>
    %c0_17 = arith.constant 0 : index
    %c0_18 = arith.constant 0 : index
    %c0_19 = arith.constant 0 : index
    %37 = vector.load %arg2[%c0_17, %c0_18, %c0_19] : memref<4x64x64xf32, #tpu.memory_space<vmem>>, vector<1x64x64xf32>
    %38 = vector.shape_cast %37 : vector<1x64x64xf32> to vector<64x64xf32>
    %39 = arith.addf %36, %38 : vector<64x64xf32>
    %cst_20 = arith.constant dense<0xFF800000> : vector<64xf32>
    %40 = vector.multi_reduction <maximumf>, %39, %cst_20 [1] : vector<64x64xf32> to vector<64xf32>
    %41 = vector.shape_cast %40 : vector<64xf32> to vector<64x1xf32>
    %42 = vector.broadcast %41 : vector<64x1xf32> to vector<64x64xf32>
    %43 = arith.subf %39, %42 : vector<64x64xf32>
    %44 = math.exp %43 : vector<64x64xf32>
    %cst_21 = arith.constant dense<0.000000e+00> : vector<64xf32>
    %45 = vector.multi_reduction <add>, %44, %cst_21 [1] : vector<64x64xf32> to vector<64xf32>
    %46 = vector.shape_cast %45 : vector<64xf32> to vector<64x1xf32>
    %47 = tpu.reciprocal %46 : vector<64x1xf32> -> vector<64x1xf32>
    %48 = vector.broadcast %47 : vector<64x1xf32> to vector<64x64xf32>
    %49 = arith.mulf %44, %48 : vector<64x64xf32>
    %cst_22 = arith.constant dense<0.000000e+00> : vector<64x8xf32>
    %50 = tpu.matmul %49, %35, %cst_22 {dimension_numbers = #tpu.dot_dimension_numbers<[1], [0], [0], [1], [0, 0, 1, 1], [], []>} : vector<64x64xf32>, vector<64x8xf32>, vector<64x8xf32> -> vector<64x8xf32>
    %51 = vector.extract_strided_slice %30 {offsets = [0, 8], sizes = [64, 8], strides = [1, 1]} : vector<64x96xf32> to vector<64x8xf32>
    %cst_23 = arith.constant 0.353553385 : f32
    %52 = vector.broadcast %cst_23 : f32 to vector<64x8xf32>
    %53 = arith.mulf %51, %52 : vector<64x8xf32>
    %54 = vector.extract_strided_slice %30 {offsets = [0, 40], sizes = [64, 8], strides = [1, 1]} : vector<64x96xf32> to vector<64x8xf32>
    %55 = vector.extract_strided_slice %30 {offsets = [0, 72], sizes = [64, 8], strides = [1, 1]} : vector<64x96xf32> to vector<64x8xf32>
    %cst_24 = arith.constant dense<0.000000e+00> : vector<64x64xf32>
    %56 = tpu.matmul %53, %54, %cst_24 {dimension_numbers = #tpu.dot_dimension_numbers<[1], [1], [0], [0], [0, 0, 1, 0], [], []>} : vector<64x8xf32>, vector<64x8xf32>, vector<64x64xf32> -> vector<64x64xf32>
    %c1 = arith.constant 1 : index
    %c0_25 = arith.constant 0 : index
    %c0_26 = arith.constant 0 : index
    %57 = vector.load %arg2[%c1, %c0_25, %c0_26] : memref<4x64x64xf32, #tpu.memory_space<vmem>>, vector<1x64x64xf32>
    %58 = vector.shape_cast %57 : vector<1x64x64xf32> to vector<64x64xf32>
    %59 = arith.addf %56, %58 : vector<64x64xf32>
    %cst_27 = arith.constant dense<0xFF800000> : vector<64xf32>
    %60 = vector.multi_reduction <maximumf>, %59, %cst_27 [1] : vector<64x64xf32> to vector<64xf32>
    %61 = vector.shape_cast %60 : vector<64xf32> to vector<64x1xf32>
    %62 = vector.broadcast %61 : vector<64x1xf32> to vector<64x64xf32>
    %63 = arith.subf %59, %62 : vector<64x64xf32>
    %64 = math.exp %63 : vector<64x64xf32>
    %cst_28 = arith.constant dense<0.000000e+00> : vector<64xf32>
    %65 = vector.multi_reduction <add>, %64, %cst_28 [1] : vector<64x64xf32> to vector<64xf32>
    %66 = vector.shape_cast %65 : vector<64xf32> to vector<64x1xf32>
    %67 = tpu.reciprocal %66 : vector<64x1xf32> -> vector<64x1xf32>
    %68 = vector.broadcast %67 : vector<64x1xf32> to vector<64x64xf32>
    %69 = arith.mulf %64, %68 : vector<64x64xf32>
    %cst_29 = arith.constant dense<0.000000e+00> : vector<64x8xf32>
    %70 = tpu.matmul %69, %55, %cst_29 {dimension_numbers = #tpu.dot_dimension_numbers<[1], [0], [0], [1], [0, 0, 1, 1], [], []>} : vector<64x64xf32>, vector<64x8xf32>, vector<64x8xf32> -> vector<64x8xf32>
    %71 = vector.extract_strided_slice %30 {offsets = [0, 16], sizes = [64, 8], strides = [1, 1]} : vector<64x96xf32> to vector<64x8xf32>
    %cst_30 = arith.constant 0.353553385 : f32
    %72 = vector.broadcast %cst_30 : f32 to vector<64x8xf32>
    %73 = arith.mulf %71, %72 : vector<64x8xf32>
    %74 = vector.extract_strided_slice %30 {offsets = [0, 48], sizes = [64, 8], strides = [1, 1]} : vector<64x96xf32> to vector<64x8xf32>
    %75 = vector.extract_strided_slice %30 {offsets = [0, 80], sizes = [64, 8], strides = [1, 1]} : vector<64x96xf32> to vector<64x8xf32>
    %cst_31 = arith.constant dense<0.000000e+00> : vector<64x64xf32>
    %76 = tpu.matmul %73, %74, %cst_31 {dimension_numbers = #tpu.dot_dimension_numbers<[1], [1], [0], [0], [0, 0, 1, 0], [], []>} : vector<64x8xf32>, vector<64x8xf32>, vector<64x64xf32> -> vector<64x64xf32>
    %c2 = arith.constant 2 : index
    %c0_32 = arith.constant 0 : index
    %c0_33 = arith.constant 0 : index
    %77 = vector.load %arg2[%c2, %c0_32, %c0_33] : memref<4x64x64xf32, #tpu.memory_space<vmem>>, vector<1x64x64xf32>
    %78 = vector.shape_cast %77 : vector<1x64x64xf32> to vector<64x64xf32>
    %79 = arith.addf %76, %78 : vector<64x64xf32>
    %cst_34 = arith.constant dense<0xFF800000> : vector<64xf32>
    %80 = vector.multi_reduction <maximumf>, %79, %cst_34 [1] : vector<64x64xf32> to vector<64xf32>
    %81 = vector.shape_cast %80 : vector<64xf32> to vector<64x1xf32>
    %82 = vector.broadcast %81 : vector<64x1xf32> to vector<64x64xf32>
    %83 = arith.subf %79, %82 : vector<64x64xf32>
    %84 = math.exp %83 : vector<64x64xf32>
    %cst_35 = arith.constant dense<0.000000e+00> : vector<64xf32>
    %85 = vector.multi_reduction <add>, %84, %cst_35 [1] : vector<64x64xf32> to vector<64xf32>
    %86 = vector.shape_cast %85 : vector<64xf32> to vector<64x1xf32>
    %87 = tpu.reciprocal %86 : vector<64x1xf32> -> vector<64x1xf32>
    %88 = vector.broadcast %87 : vector<64x1xf32> to vector<64x64xf32>
    %89 = arith.mulf %84, %88 : vector<64x64xf32>
    %cst_36 = arith.constant dense<0.000000e+00> : vector<64x8xf32>
    %90 = tpu.matmul %89, %75, %cst_36 {dimension_numbers = #tpu.dot_dimension_numbers<[1], [0], [0], [1], [0, 0, 1, 1], [], []>} : vector<64x64xf32>, vector<64x8xf32>, vector<64x8xf32> -> vector<64x8xf32>
    %91 = vector.extract_strided_slice %30 {offsets = [0, 24], sizes = [64, 8], strides = [1, 1]} : vector<64x96xf32> to vector<64x8xf32>
    %cst_37 = arith.constant 0.353553385 : f32
    %92 = vector.broadcast %cst_37 : f32 to vector<64x8xf32>
    %93 = arith.mulf %91, %92 : vector<64x8xf32>
    %94 = vector.extract_strided_slice %30 {offsets = [0, 56], sizes = [64, 8], strides = [1, 1]} : vector<64x96xf32> to vector<64x8xf32>
    %95 = vector.extract_strided_slice %30 {offsets = [0, 88], sizes = [64, 8], strides = [1, 1]} : vector<64x96xf32> to vector<64x8xf32>
    %cst_38 = arith.constant dense<0.000000e+00> : vector<64x64xf32>
    %96 = tpu.matmul %93, %94, %cst_38 {dimension_numbers = #tpu.dot_dimension_numbers<[1], [1], [0], [0], [0, 0, 1, 0], [], []>} : vector<64x8xf32>, vector<64x8xf32>, vector<64x64xf32> -> vector<64x64xf32>
    %c3 = arith.constant 3 : index
    %c0_39 = arith.constant 0 : index
    %c0_40 = arith.constant 0 : index
    %97 = vector.load %arg2[%c3, %c0_39, %c0_40] : memref<4x64x64xf32, #tpu.memory_space<vmem>>, vector<1x64x64xf32>
    %98 = vector.shape_cast %97 : vector<1x64x64xf32> to vector<64x64xf32>
    %99 = arith.addf %96, %98 : vector<64x64xf32>
    %cst_41 = arith.constant dense<0xFF800000> : vector<64xf32>
    %100 = vector.multi_reduction <maximumf>, %99, %cst_41 [1] : vector<64x64xf32> to vector<64xf32>
    %101 = vector.shape_cast %100 : vector<64xf32> to vector<64x1xf32>
    %102 = vector.broadcast %101 : vector<64x1xf32> to vector<64x64xf32>
    %103 = arith.subf %99, %102 : vector<64x64xf32>
    %104 = math.exp %103 : vector<64x64xf32>
    %cst_42 = arith.constant dense<0.000000e+00> : vector<64xf32>
    %105 = vector.multi_reduction <add>, %104, %cst_42 [1] : vector<64x64xf32> to vector<64xf32>
    %106 = vector.shape_cast %105 : vector<64xf32> to vector<64x1xf32>
    %107 = tpu.reciprocal %106 : vector<64x1xf32> -> vector<64x1xf32>
    %108 = vector.broadcast %107 : vector<64x1xf32> to vector<64x64xf32>
    %109 = arith.mulf %104, %108 : vector<64x64xf32>
    %cst_43 = arith.constant dense<0.000000e+00> : vector<64x8xf32>
    %110 = tpu.matmul %109, %95, %cst_43 {dimension_numbers = #tpu.dot_dimension_numbers<[1], [0], [0], [1], [0, 0, 1, 1], [], []>} : vector<64x64xf32>, vector<64x8xf32>, vector<64x8xf32> -> vector<64x8xf32>
    %111 = tpu.concatenate %50, %70, %90, %110 in 1 : vector<64x8xf32>, vector<64x8xf32>, vector<64x8xf32>, vector<64x8xf32> -> vector<64x32xf32>
    %c0_44 = arith.constant 0 : index
    %c0_45 = arith.constant 0 : index
    %112 = vector.load %arg7[%c0_44, %c0_45] : memref<32x32xf32, #tpu.memory_space<vmem>>, vector<32x32xf32>
    %cst_46 = arith.constant dense<0.000000e+00> : vector<64x32xf32>
    %113 = tpu.matmul %111, %112, %cst_46 {dimension_numbers = #tpu.dot_dimension_numbers<[1], [0], [0], [1], [0, 0, 1, 1], [], []>} : vector<64x32xf32>, vector<32x32xf32>, vector<64x32xf32> -> vector<64x32xf32>
    %c0_47 = arith.constant 0 : index
    %c0_48 = arith.constant 0 : index
    %114 = vector.load %arg8[%c0_47, %c0_48] : memref<1x32xf32, #tpu.memory_space<vmem>>, vector<1x32xf32>
    %115 = vector.broadcast %114 : vector<1x32xf32> to vector<64x32xf32>
    %116 = arith.addf %113, %115 : vector<64x32xf32>
    %117 = arith.addf %1, %116 : vector<64x32xf32>
    %c0_49 = arith.constant 0 : index
    %c0_50 = arith.constant 0 : index
    %118 = vector.load %arg9[%c0_49, %c0_50] : memref<1x32xf32, #tpu.memory_space<vmem>>, vector<1x32xf32>
    %c0_51 = arith.constant 0 : index
    %c0_52 = arith.constant 0 : index
    %119 = vector.load %arg10[%c0_51, %c0_52] : memref<1x32xf32, #tpu.memory_space<vmem>>, vector<1x32xf32>
    %cst_53 = arith.constant dense<0.000000e+00> : vector<64xf32>
    %120 = vector.multi_reduction <add>, %117, %cst_53 [1] : vector<64x32xf32> to vector<64xf32>
    %121 = vector.shape_cast %120 : vector<64xf32> to vector<64x1xf32>
    %cst_54 = arith.constant 3.200000e+01 : f32
    %122 = vector.broadcast %cst_54 : f32 to vector<64x1xf32>
    %123 = arith.divf %121, %122 : vector<64x1xf32>
    %124 = vector.broadcast %123 : vector<64x1xf32> to vector<64x32xf32>
    %125 = arith.subf %117, %124 : vector<64x32xf32>
    %126 = arith.mulf %125, %125 : vector<64x32xf32>
    %cst_55 = arith.constant dense<0.000000e+00> : vector<64xf32>
    %127 = vector.multi_reduction <add>, %126, %cst_55 [1] : vector<64x32xf32> to vector<64xf32>
    %128 = vector.shape_cast %127 : vector<64xf32> to vector<64x1xf32>
    %cst_56 = arith.constant 3.200000e+01 : f32
    %129 = vector.broadcast %cst_56 : f32 to vector<64x1xf32>
    %130 = arith.divf %128, %129 : vector<64x1xf32>
    %131 = vector.broadcast %123 : vector<64x1xf32> to vector<64x32xf32>
    %132 = arith.subf %117, %131 : vector<64x32xf32>
    %cst_57 = arith.constant 9.99999974E-6 : f32
    %133 = vector.broadcast %cst_57 : f32 to vector<64x1xf32>
    %134 = arith.addf %130, %133 : vector<64x1xf32>
    %135 = math.rsqrt %134 : vector<64x1xf32>
    %136 = vector.broadcast %135 : vector<64x1xf32> to vector<64x32xf32>
    %137 = arith.mulf %132, %136 : vector<64x32xf32>
    %138 = vector.broadcast %118 : vector<1x32xf32> to vector<64x32xf32>
    %139 = arith.mulf %137, %138 : vector<64x32xf32>
    %140 = vector.broadcast %119 : vector<1x32xf32> to vector<64x32xf32>
    %141 = arith.addf %139, %140 : vector<64x32xf32>
    %c0_58 = arith.constant 0 : index
    %c0_59 = arith.constant 0 : index
    %142 = vector.load %arg11[%c0_58, %c0_59] : memref<32x128xf32, #tpu.memory_space<vmem>>, vector<32x128xf32>
    %cst_60 = arith.constant dense<0.000000e+00> : vector<64x128xf32>
    %143 = tpu.matmul %141, %142, %cst_60 {dimension_numbers = #tpu.dot_dimension_numbers<[1], [0], [0], [1], [0, 0, 1, 1], [], []>} : vector<64x32xf32>, vector<32x128xf32>, vector<64x128xf32> -> vector<64x128xf32>
    %c0_61 = arith.constant 0 : index
    %c0_62 = arith.constant 0 : index
    %144 = vector.load %arg12[%c0_61, %c0_62] : memref<1x128xf32, #tpu.memory_space<vmem>>, vector<1x128xf32>
    %145 = vector.broadcast %144 : vector<1x128xf32> to vector<64x128xf32>
    %146 = arith.addf %143, %145 : vector<64x128xf32>
    %cst_63 = arith.constant 5.000000e-01 : f32
    %147 = vector.broadcast %cst_63 : f32 to vector<64x128xf32>
    %148 = arith.mulf %147, %146 : vector<64x128xf32>
    %cst_64 = arith.constant 0.707106769 : f32
    %149 = vector.broadcast %cst_64 : f32 to vector<64x128xf32>
    %150 = arith.mulf %146, %149 : vector<64x128xf32>
    %151 = math.erf %150 : vector<64x128xf32>
    %cst_65 = arith.constant 1.000000e+00 : f32
    %152 = vector.broadcast %cst_65 : f32 to vector<64x128xf32>
    %153 = arith.addf %152, %151 : vector<64x128xf32>
    %154 = arith.mulf %148, %153 : vector<64x128xf32>
    %c0_66 = arith.constant 0 : index
    %c0_67 = arith.constant 0 : index
    %155 = vector.load %arg13[%c0_66, %c0_67] : memref<128x32xf32, #tpu.memory_space<vmem>>, vector<128x32xf32>
    %cst_68 = arith.constant dense<0.000000e+00> : vector<64x32xf32>
    %156 = tpu.matmul %154, %155, %cst_68 {dimension_numbers = #tpu.dot_dimension_numbers<[1], [0], [0], [1], [0, 0, 1, 1], [], []>} : vector<64x128xf32>, vector<128x32xf32>, vector<64x32xf32> -> vector<64x32xf32>
    %c0_69 = arith.constant 0 : index
    %c0_70 = arith.constant 0 : index
    %157 = vector.load %arg14[%c0_69, %c0_70] : memref<1x32xf32, #tpu.memory_space<vmem>>, vector<1x32xf32>
    %158 = vector.broadcast %157 : vector<1x32xf32> to vector<64x32xf32>
    %159 = arith.addf %156, %158 : vector<64x32xf32>
    %160 = arith.addf %117, %159 : vector<64x32xf32>
    %161 = tpu.transpose %160, [1, 0] : vector<64x32xf32> -> vector<32x64xf32>
    %c0_71 = arith.constant 0 : index
    %c0_72 = arith.constant 0 : index
    %c0_73 = arith.constant 0 : index
    %162 = vector.load %arg15[%c0_71, %c0_72, %c0_73] : memref<1x32x64xf32, #tpu.memory_space<vmem>>, vector<1x32x64xf32>
    %163 = vector.shape_cast %162 : vector<1x32x64xf32> to vector<32x64xf32>
    %164 = vector.shape_cast %161 : vector<32x64xf32> to vector<1x32x64xf32>
    tpu.vector_store %arg15[%c0_71, %c0_72, %c0_73], %164 {strides = array<i32>} : memref<1x32x64xf32, #tpu.memory_space<vmem>>, vector<1x32x64xf32>,
    return
  }
  func.func @transform_0(%arg0: i32) -> (i32, i32, i32) {
    %c0_i32 = arith.constant 0 : i32
    %c0_i32_0 = arith.constant 0 : i32
    %c0_i32_1 = arith.constant 0 : i32
    return %arg0, %c0_i32, %c0_i32_0 : i32, i32, i32
  }
  func.func @transform_1(%arg0: i32) -> (i32, i32, i32) {
    %c0_i32 = arith.constant 0 : i32
    %c0_i32_0 = arith.constant 0 : i32
    %c0_i32_1 = arith.constant 0 : i32
    %c0_i32_2 = arith.constant 0 : i32
    return %c0_i32, %c0_i32_0, %c0_i32_1 : i32, i32, i32
  }
  func.func @transform_2(%arg0: i32) -> (i32, i32) {
    %c0_i32 = arith.constant 0 : i32
    %c0_i32_0 = arith.constant 0 : i32
    %c0_i32_1 = arith.constant 0 : i32
    return %c0_i32, %c0_i32_0 : i32, i32
  }
  func.func @transform_3(%arg0: i32) -> (i32, i32) {
    %c0_i32 = arith.constant 0 : i32
    %c0_i32_0 = arith.constant 0 : i32
    %c0_i32_1 = arith.constant 0 : i32
    return %c0_i32, %c0_i32_0 : i32, i32
  }
  func.func @transform_4(%arg0: i32) -> (i32, i32) {
    %c0_i32 = arith.constant 0 : i32
    %c0_i32_0 = arith.constant 0 : i32
    %c0_i32_1 = arith.constant 0 : i32
    return %c0_i32, %c0_i32_0 : i32, i32
  }
  func.func @transform_5(%arg0: i32) -> (i32, i32) {
    %c0_i32 = arith.constant 0 : i32
    %c0_i32_0 = arith.constant 0 : i32
    %c0_i32_1 = arith.constant 0 : i32
    return %c0_i32, %c0_i32_0 : i32, i32
  }
  func.func @transform_6(%arg0: i32) -> (i32, i32) {
    %c0_i32 = arith.constant 0 : i32
    %c0_i32_0 = arith.constant 0 : i32
    %c0_i32_1 = arith.constant 0 : i32
    return %c0_i32, %c0_i32_0 : i32, i32
  }
  func.func @transform_7(%arg0: i32) -> (i32, i32) {
    %c0_i32 = arith.constant 0 : i32
    %c0_i32_0 = arith.constant 0 : i32
    %c0_i32_1 = arith.constant 0 : i32
    return %c0_i32, %c0_i32_0 : i32, i32
  }
  func.func @transform_8(%arg0: i32) -> (i32, i32) {
    %c0_i32 = arith.constant 0 : i32
    %c0_i32_0 = arith.constant 0 : i32
    %c0_i32_1 = arith.constant 0 : i32
    return %c0_i32, %c0_i32_0 : i32, i32
  }
  func.func @transform_9(%arg0: i32) -> (i32, i32) {
    %c0_i32 = arith.constant 0 : i32
    %c0_i32_0 = arith.constant 0 : i32
    %c0_i32_1 = arith.constant 0 : i32
    return %c0_i32, %c0_i32_0 : i32, i32
  }
  func.func @transform_10(%arg0: i32) -> (i32, i32) {
    %c0_i32 = arith.constant 0 : i32
    %c0_i32_0 = arith.constant 0 : i32
    %c0_i32_1 = arith.constant 0 : i32
    return %c0_i32, %c0_i32_0 : i32, i32
  }
  func.func @transform_11(%arg0: i32) -> (i32, i32) {
    %c0_i32 = arith.constant 0 : i32
    %c0_i32_0 = arith.constant 0 : i32
    %c0_i32_1 = arith.constant 0 : i32
    return %c0_i32, %c0_i32_0 : i32, i32
  }
  func.func @transform_12(%arg0: i32) -> (i32, i32) {
    %c0_i32 = arith.constant 0 : i32
    %c0_i32_0 = arith.constant 0 : i32
    %c0_i32_1 = arith.constant 0 : i32
    return %c0_i32, %c0_i32_0 : i32, i32
  }
  func.func @transform_13(%arg0: i32) -> (i32, i32) {
    %c0_i32 = arith.constant 0 : i32
    %c0_i32_0 = arith.constant 0 : i32
    %c0_i32_1 = arith.constant 0 : i32
    return %c0_i32, %c0_i32_0 : i32, i32
  }
  func.func @transform_14(%arg0: i32) -> (i32, i32, i32) {
    %c0_i32 = arith.constant 0 : i32
    %c0_i32_0 = arith.constant 0 : i32
    %c0_i32_1 = arith.constant 0 : i32
    return %arg0, %c0_i32, %c0_i32_0 : i32, i32, i32
  }
}

</mosaic_0001>

<llo_original>
// kernel: tpu_custom_call.1
$region0: #{tpu_custom_call.1}
  #allocation0 [shape = 'u32[]', space=smem, size = 0x4, offset = 0x4, fixed_abs, tag = 'smem constant byte address 0x4 - core index']
  #allocation1 [shape = 'u32[72,128]{1,0:T(1,128)}', space=vmem, size = 0x9000, scoped, tag = 'internal scratch']
  %s0 = inlined_call_operand.vmem [shape: f32[2,64,32], index: 0, kind: input, shape index: {}]
  %s1 = inlined_call_operand.vmem [shape: f32[4,64,64], index: 1, kind: input, shape index: {}]
  %s2 = inlined_call_operand.hbm [shape: f32[1,32], index: 2, kind: input, shape index: {}]
  %s3 = inlined_call_operand.hbm [shape: f32[1,32], index: 3, kind: input, shape index: {}]
  %s4 = inlined_call_operand.vmem [shape: f32[32,96], index: 4, kind: input, shape index: {}]
  %s5 = inlined_call_operand.vmem [shape: f32[1,96], index: 5, kind: input, shape index: {}]
  %s6 = inlined_call_operand.vmem [shape: f32[32,32], index: 6, kind: input, shape index: {}]
  %s7 = inlined_call_operand.vmem [shape: f32[1,32], index: 7, kind: input, shape index: {}]
  %s8 = inlined_call_operand.vmem [shape: f32[1,32], index: 8, kind: input, shape index: {}]
  %s9 = inlined_call_operand.vmem [shape: f32[1,32], index: 9, kind: input, shape index: {}]
  %s10 = inlined_call_operand.hbm [shape: f32[32,128], index: 10, kind: input, shape index: {}]
  %s11 = inlined_call_operand.vmem [shape: f32[1,128], index: 11, kind: input, shape index: {}]
  %s12 = inlined_call_operand.vmem [shape: f32[128,32], index: 12, kind: input, shape index: {}]
  %s13 = inlined_call_operand.vmem [shape: f32[1,32], index: 13, kind: input, shape index: {}]
  %s14 = inlined_call_operand.hbm [shape: f32[2,32,64], index: 14, kind: output, shape index: {}]
  %s15 = sld [smem:[#allocation0]]
  $region101: #{tpu_custom_call.1} parent=0
    _
  %s17 = ssub.s32 1, %s15
  %s18 = scalar_select 0, %s17, %s15
  $region1: #{tpu_custom_call.1} parent=0
    #allocation2 [shape = 'u8[512]{0}', space=vmem, size = 0x400, scoped, tag = 'input window, operand 2, single buffered']
    #allocation3 [shape = 's32[2]{0}', space=sflag, size = 0x8, scoped, tag = 'scoped memory for tpu_custom_call.1']
    #allocation4 [shape = 's32[2]{0}', space=sflag, size = 0x8, scoped, tag = 'scoped memory for tpu_custom_call.1']
    #allocation5 [shape = 'u8[512]{0}', space=vmem, size = 0x400, scoped, tag = 'input window, operand 3, single buffered']
    #allocation6 [shape = 's32[1]{0}', space=sflag, size = 0x4, scoped, tag = 'scoped memory for tpu_custom_call.1']
    #allocation7 [shape = 'u8[16384]{0}', space=vmem, size = 0x4000, scoped, tag = 'input window, operand 10, single buffered']
    #allocation8 [shape = 'u8[32768]{0}', space=vmem, size = 0x8000, scoped, tag = 'output window, operand 0']
    %19 = vsyncpa [#allocation3], 0
    %20 = vsyncpa [#allocation6], 0
    %21 = vsyncpa [#allocation4], 0
    %s22 = scalar_lea.sflag [#allocation4], 1
    %23 = vsyncpa %s22, 0
    loop: start=0, step=1, limit=4
    $region2: #{tpu_custom_call.1} parent=1 // loop_pre_header
      _
    $region3: #{tpu_custom_call.1} parent=1 // loop_header
      %s25 = sphi 0, %s29
      %p26 = scmp.ge.s32.totalorder %s25, 4
      %s35 = sphi 0, %s37
      %s38 = sphi 0, %s35
      %s39 = sphi 0, %s38
      %s55 = sphi 0, %s39
      %s59 = sphi 0, %s59
      %s61 = sphi 0, %s59
      %s62 = sphi 0, %s61
      %s76 = sphi 0, %s62
      %s80 = sphi 0, %s80
      %s82 = sphi 0, %s80
      %s83 = sphi 0, %s82
      %s97 = sphi 0, %s83
      %s101 = sphi 0, %s101
      %s103 = sphi 0, %s101
      %s104 = sphi 0, %s103
      %s118 = sphi 0, %s104
      %s122 = sphi 0, %s122
      %s124 = sphi 0, %s122
      %s125 = sphi 0, %s124
      %s139 = sphi 0, %s125
      %s143 = sphi 0, %s143
      %s145 = sphi 0, %s143
      %s146 = sphi 0, %s145
      %s160 = sphi 0, %s146
      %s164 = sphi 0, %s164
      %s166 = sphi 0, %s164
      %s167 = sphi 0, %s166
      %s181 = sphi 0, %s167
      %s185 = sphi 0, %s185
      %s187 = sphi 0, %s185
      %s188 = sphi 0, %s187
      %s202 = sphi 0, %s188
      %s206 = sphi 0, %s206
      %s208 = sphi 0, %s206
      %s209 = sphi 0, %s208
      %s223 = sphi 0, %s209
      %s227 = sphi 0, %s227
      %s229 = sphi 0, %s227
      %s230 = sphi 0, %s229
      %s244 = sphi 0, %s230
      %s248 = sphi 0, %s248
      %s250 = sphi 0, %s248
      %s251 = sphi 0, %s250
      %s265 = sphi 0, %s251
      %s269 = sphi 0, %s269
      %s271 = sphi 0, %s269
      %s272 = sphi 0, %s271
      %s286 = sphi 0, %s272
      %s290 = sphi 0, %s290
      %s292 = sphi 0, %s290
      %s293 = sphi 0, %s292
      %s307 = sphi 0, %s293
      %s311 = sphi 0, %s311
      %s313 = sphi 0, %s311
      %s314 = sphi 0, %s313
      %s328 = sphi 0, %s314
      %s334 = sphi 0, %s336
      %s337 = sphi 0, %s334
      %s338 = sphi 0, %s337
      %s354 = sphi 0, %s338
    $region4: #{tpu_custom_call.1} parent=1 // loop_header_branch
      %28 = sbr.rel (%p26) target = $region8
    $region5: #{tpu_custom_call.1} parent=1 // loop_body
      %s30 = ssub.s32 %s25, 1
      %s31 = ssub.s32 %s25, 2
      %s32 = sadd.s32 %s25, 1
      %s33 = ssub.s32 %s25, %s32
      %p34 = scmp.eq.s32.totalorder %s33, 0
      %s36 = sadd.s32 %s35, 1
      %s37 = scalar_select %p34, %s35, %s36
      %p40 = pneg %p34
      %p41 = scmp.eq.s32.totalorder %s25, 1
      %p42 = por %p40, %p41
      %p43 = scmp.ne.s32.totalorder %s35, %s38
      %p44 = scmp.eq.s32.totalorder %s25, 0
      %p45 = por %p43, %p44
      %p46 = scmp.ne.s32.totalorder %s35, %s38
      %p47 = scmp.eq.s32.totalorder %s30, 1
      %p48 = por %p46, %p47
      %p49 = scmp.ne.s32.totalorder %s38, %s39
      %p50 = scmp.eq.s32.totalorder %s30, 0
      %p51 = por %p49, %p50
      %p52 = scmp.ne.s32.totalorder %s38, %s39
      %p53 = scmp.eq.s32.totalorder %s31, 1
      %p54 = por %p52, %p53
      %p56 = scmp.ne.s32.totalorder %s39, %s55
      %p57 = scmp.eq.s32.totalorder %s31, 0
      %p58 = por %p56, %p57
      %s60 = sadd.s32 %s59, 1
      %p63 = scmp.eq.s32.totalorder %s25, 1
      %p64 = scmp.ne.s32.totalorder %s59, %s61
      %p65 = scmp.eq.s32.totalorder %s25, 0
      %p66 = por %p64, %p65
      %p67 = scmp.ne.s32.totalorder %s59, %s61
      %p68 = scmp.eq.s32.totalorder %s30, 1
      %p69 = por %p67, %p68
      %p70 = scmp.ne.s32.totalorder %s61, %s62
      %p71 = scmp.eq.s32.totalorder %s30, 0
      %p72 = por %p70, %p71
      %p73 = scmp.ne.s32.totalorder %s61, %s62
      %p74 = scmp.eq.s32.totalorder %s31, 1
      %p75 = por %p73, %p74
      %p77 = scmp.ne.s32.totalorder %s62, %s76
      %p78 = scmp.eq.s32.totalorder %s31, 0
      %p79 = por %p77, %p78
      %s81 = sadd.s32 %s80, 1
      %p84 = scmp.eq.s32.totalorder %s25, 1
      %p85 = scmp.ne.s32.totalorder %s80, %s82
      %p86 = scmp.eq.s32.totalorder %s25, 0
      %p87 = por %p85, %p86
      %p88 = scmp.ne.s32.totalorder %s80, %s82
      %p89 = scmp.eq.s32.totalorder %s30, 1
      %p90 = por %p88, %p89
      %p91 = scmp.ne.s32.totalorder %s82, %s83
      %p92 = scmp.eq.s32.totalorder %s30, 0
      %p93 = por %p91, %p92
      %p94 = scmp.ne.s32.totalorder %s82, %s83
      %p95 = scmp.eq.s32.totalorder %s31, 1
      %p96 = por %p94, %p95
      %p98 = scmp.ne.s32.totalorder %s83, %s97
      %p99 = scmp.eq.s32.totalorder %s31, 0
      %p100 = por %p98, %p99
      %s102 = sadd.s32 %s101, 1
      %p105 = scmp.eq.s32.totalorder %s25, 1
      %p106 = scmp.ne.s32.totalorder %s101, %s103
      %p107 = scmp.eq.s32.totalorder %s25, 0
      %p108 = por %p106, %p107
      %p109 = scmp.ne.s32.totalorder %s101, %s103
      %p110 = scmp.eq.s32.totalorder %s30, 1
      %p111 = por %p109, %p110
      %p112 = scmp.ne.s32.totalorder %s103, %s104
      %p113 = scmp.eq.s32.totalorder %s30, 0
      %p114 = por %p112, %p113
      %p115 = scmp.ne.s32.totalorder %s103, %s104
      %p116 = scmp.eq.s32.totalorder %s31, 1
      %p117 = por %p115, %p116
      %p119 = scmp.ne.s32.totalorder %s104, %s118
      %p120 = scmp.eq.s32.totalorder %s31, 0
      %p121 = por %p119, %p120
      %s123 = sadd.s32 %s122, 1
      %p126 = scmp.eq.s32.totalorder %s25, 1
      %p127 = scmp.ne.s32.totalorder %s122, %s124
      %p128 = scmp.eq.s32.totalorder %s25, 0
      %p129 = por %p127, %p128
      %p130 = scmp.ne.s32.totalorder %s122, %s124
      %p131 = scmp.eq.s32.totalorder %s30, 1
      %p132 = por %p130, %p131
      %p133 = scmp.ne.s32.totalorder %s124, %s125
      %p134 = scmp.eq.s32.totalorder %s30, 0
      %p135 = por %p133, %p134
      %p136 = scmp.ne.s32.totalorder %s124, %s125
      %p137 = scmp.eq.s32.totalorder %s31, 1
      %p138 = por %p136, %p137
      %p140 = scmp.ne.s32.totalorder %s125, %s139
      %p141 = scmp.eq.s32.totalorder %s31, 0
      %p142 = por %p140, %p141
      %s144 = sadd.s32 %s143, 1
      %p147 = scmp.eq.s32.totalorder %s25, 1
      %p148 = scmp.ne.s32.totalorder %s143, %s145
      %p149 = scmp.eq.s32.totalorder %s25, 0
      %p150 = por %p148, %p149
      %p151 = scmp.ne.s32.totalorder %s143, %s145
      %p152 = scmp.eq.s32.totalorder %s30, 1
      %p153 = por %p151, %p152
      %p154 = scmp.ne.s32.totalorder %s145, %s146
      %p155 = scmp.eq.s32.totalorder %s30, 0
      %p156 = por %p154, %p155
      %p157 = scmp.ne.s32.totalorder %s145, %s146
      %p158 = scmp.eq.s32.totalorder %s31, 1
      %p159 = por %p157, %p158
      %p161 = scmp.ne.s32.totalorder %s146, %s160
      %p162 = scmp.eq.s32.totalorder %s31, 0
      %p163 = por %p161, %p162
      %s165 = sadd.s32 %s164, 1
      %p168 = scmp.eq.s32.totalorder %s25, 1
      %p169 = scmp.ne.s32.totalorder %s164, %s166
      %p170 = scmp.eq.s32.totalorder %s25, 0
      %p171 = por %p169, %p170
      %p172 = scmp.ne.s32.totalorder %s164, %s166
      %p173 = scmp.eq.s32.totalorder %s30, 1
      %p174 = por %p172, %p173
      %p175 = scmp.ne.s32.totalorder %s166, %s167
      %p176 = scmp.eq.s32.totalorder %s30, 0
      %p177 = por %p175, %p176
      %p178 = scmp.ne.s32.totalorder %s166, %s167
      %p179 = scmp.eq.s32.totalorder %s31, 1
      %p180 = por %p178, %p179
      %p182 = scmp.ne.s32.totalorder %s167, %s181
      %p183 = scmp.eq.s32.totalorder %s31, 0
      %p184 = por %p182, %p183
      %s186 = sadd.s32 %s185, 1
      %p189 = scmp.eq.s32.totalorder %s25, 1
      %p190 = scmp.ne.s32.totalorder %s185, %s187
      %p191 = scmp.eq.s32.totalorder %s25, 0
      %p192 = por %p190, %p191
      %p193 = scmp.ne.s32.totalorder %s185, %s187
      %p194 = scmp.eq.s32.totalorder %s30, 1
      %p195 = por %p193, %p194
      %p196 = scmp.ne.s32.totalorder %s187, %s188
      %p197 = scmp.eq.s32.totalorder %s30, 0
      %p198 = por %p196, %p197
      %p199 = scmp.ne.s32.totalorder %s187, %s188
      %p200 = scmp.eq.s32.totalorder %s31, 1
      %p201 = por %p199, %p200
      %p203 = scmp.ne.s32.totalorder %s188, %s202
      %p204 = scmp.eq.s32.totalorder %s31, 0
      %p205 = por %p203, %p204
      %s207 = sadd.s32 %s206, 1
      %p210 = scmp.eq.s32.totalorder %s25, 1
      %p211 = scmp.ne.s32.totalorder %s206, %s208
      %p212 = scmp.eq.s32.totalorder %s25, 0
      %p213 = por %p211, %p212
      %p214 = scmp.ne.s32.totalorder %s206, %s208
      %p215 = scmp.eq.s32.totalorder %s30, 1
      %p216 = por %p214, %p215
      %p217 = scmp.ne.s32.totalorder %s208, %s209
      %p218 = scmp.eq.s32.totalorder %s30, 0
      %p219 = por %p217, %p218
      %p220 = scmp.ne.s32.totalorder %s208, %s209
      %p221 = scmp.eq.s32.totalorder %s31, 1
      %p222 = por %p220, %p221
      %p224 = scmp.ne.s32.totalorder %s209, %s223
      %p225 = scmp.eq.s32.totalorder %s31, 0
      %p226 = por %p224, %p225
      %s228 = sadd.s32 %s227, 1
      %p231 = scmp.eq.s32.totalorder %s25, 1
      %p232 = scmp.ne.s32.totalorder %s227, %s229
      %p233 = scmp.eq.s32.totalorder %s25, 0
      %p234 = por %p232, %p233
      %p235 = scmp.ne.s32.totalorder %s227, %s229
      %p236 = scmp.eq.s32.totalorder %s30, 1
      %p237 = por %p235, %p236
      %p238 = scmp.ne.s32.totalorder %s229, %s230
      %p239 = scmp.eq.s32.totalorder %s30, 0
      %p240 = por %p238, %p239
      %p241 = scmp.ne.s32.totalorder %s229, %s230
      %p242 = scmp.eq.s32.totalorder %s31, 1
      %p243 = por %p241, %p242
      %p245 = scmp.ne.s32.totalorder %s230, %s244
      %p246 = scmp.eq.s32.totalorder %s31, 0
      %p247 = por %p245, %p246
      %s249 = sadd.s32 %s248, 1
      %p252 = scmp.eq.s32.totalorder %s25, 1
      %p253 = scmp.ne.s32.totalorder %s248, %s250
      %p254 = scmp.eq.s32.totalorder %s25, 0
      %p255 = por %p253, %p254
      %p256 = scmp.ne.s32.totalorder %s248, %s250
      %p257 = scmp.eq.s32.totalorder %s30, 1
      %p258 = por %p256, %p257
      %p259 = scmp.ne.s32.totalorder %s250, %s251
      %p260 = scmp.eq.s32.totalorder %s30, 0
      %p261 = por %p259, %p260
      %p262 = scmp.ne.s32.totalorder %s250, %s251
      %p263 = scmp.eq.s32.totalorder %s31, 1
      %p264 = por %p262, %p263
      %p266 = scmp.ne.s32.totalorder %s251, %s265
      %p267 = scmp.eq.s32.totalorder %s31, 0
      %p268 = por %p266, %p267
      %s270 = sadd.s32 %s269, 1
      %p273 = scmp.eq.s32.totalorder %s25, 1
      %p274 = scmp.ne.s32.totalorder %s269, %s271
      %p275 = scmp.eq.s32.totalorder %s25, 0
      %p276 = por %p274, %p275
      %p277 = scmp.ne.s32.totalorder %s269, %s271
      %p278 = scmp.eq.s32.totalorder %s30, 1
      %p279 = por %p277, %p278
      %p280 = scmp.ne.s32.totalorder %s271, %s272
      %p281 = scmp.eq.s32.totalorder %s30, 0
      %p282 = por %p280, %p281
      %p283 = scmp.ne.s32.totalorder %s271, %s272
      %p284 = scmp.eq.s32.totalorder %s31, 1
      %p285 = por %p283, %p284
      %p287 = scmp.ne.s32.totalorder %s272, %s286
      %p288 = scmp.eq.s32.totalorder %s31, 0
      %p289 = por %p287, %p288
      %s291 = sadd.s32 %s290, 1
      %p294 = scmp.eq.s32.totalorder %s25, 1
      %p295 = scmp.ne.s32.totalorder %s290, %s292
      %p296 = scmp.eq.s32.totalorder %s25, 0
      %p297 = por %p295, %p296
      %p298 = scmp.ne.s32.totalorder %s290, %s292
      %p299 = scmp.eq.s32.totalorder %s30, 1
      %p300 = por %p298, %p299
      %p301 = scmp.ne.s32.totalorder %s292, %s293
      %p302 = scmp.eq.s32.totalorder %s30, 0
      %p303 = por %p301, %p302
      %p304 = scmp.ne.s32.totalorder %s292, %s293
      %p305 = scmp.eq.s32.totalorder %s31, 1
      %p306 = por %p304, %p305
      %p308 = scmp.ne.s32.totalorder %s293, %s307
      %p309 = scmp.eq.s32.totalorder %s31, 0
      %p310 = por %p308, %p309
      %s312 = sadd.s32 %s311, 1
      %p315 = scmp.eq.s32.totalorder %s25, 1
      %p316 = scmp.ne.s32.totalorder %s311, %s313
      %p317 = scmp.eq.s32.totalorder %s25, 0
      %p318 = por %p316, %p317
      %p319 = scmp.ne.s32.totalorder %s311, %s313
      %p320 = scmp.eq.s32.totalorder %s30, 1
      %p321 = por %p319, %p320
      %p322 = scmp.ne.s32.totalorder %s313, %s314
      %p323 = scmp.eq.s32.totalorder %s30, 0
      %p324 = por %p322, %p323
      %p325 = scmp.ne.s32.totalorder %s313, %s314
      %p326 = scmp.eq.s32.totalorder %s31, 1
      %p327 = por %p325, %p326
      %p329 = scmp.ne.s32.totalorder %s314, %s328
      %p330 = scmp.eq.s32.totalorder %s31, 0
      %p331 = por %p329, %p330
      %s332 = ssub.s32 %s25, %s32
      %p333 = scmp.eq.s32.totalorder %s332, 0
      %s335 = sadd.s32 %s334, 1
      %s336 = scalar_select %p333, %s334, %s335
      %p339 = pneg %p333
      %p340 = scmp.eq.s32.totalorder %s25, 1
      %p341 = por %p339, %p340
      %p342 = scmp.ne.s32.totalorder %s334, %s337
      %p343 = scmp.eq.s32.totalorder %s25, 0
      %p344 = por %p342, %p343
      %p345 = scmp.ne.s32.totalorder %s334, %s337
      %p346 = scmp.eq.s32.totalorder %s30, 1
      %p347 = por %p345, %p346
      %p348 = scmp.ne.s32.totalorder %s337, %s338
      %p349 = scmp.eq.s32.totalorder %s30, 0
      %p350 = por %p348, %p349
      %p351 = scmp.ne.s32.totalorder %s337, %s338
      %p352 = scmp.eq.s32.totalorder %s31, 1
      %p353 = por %p351, %p352
      %p355 = scmp.ne.s32.totalorder %s338, %s354
      %p356 = scmp.eq.s32.totalorder %s31, 0
      %p357 = por %p355, %p356
      %p358 = scmp.le.s32.totalorder 1, %s25
      %p359 = scmp.lt.s32.totalorder %s25, 3
      %p360 = pnand %p358, %p359
      %p361 = pneg %p360
      // Predicated region
      $region9: #{tpu_custom_call.1} parent=5 // pred_check
        _
      $region10: #{tpu_custom_call.1} parent=5 // pred_check_branch
        %363 = sbr.rel (%p360) target = $region12
      $region11: #{tpu_custom_call.1} parent=5 // pred_region
        %s364 = ssub.s32 %s25, 1
        // Predicated region
        $region13: #{tpu_custom_call.1} parent=11 // pred_check
          %p365 = pneg %p72
        $region14: #{tpu_custom_call.1} parent=11 // pred_check_branch
          %367 = sbr.rel (%p365) target = $region16
        $region15: #{tpu_custom_call.1} parent=11 // pred_region
          _
        $region16: #{tpu_custom_call.1} parent=11 // pred_fallthru
          _
        // Predicated region
        $region17: #{tpu_custom_call.1} parent=11 // pred_check
          %p368 = pneg %p93
        $region18: #{tpu_custom_call.1} parent=11 // pred_check_branch
          %370 = sbr.rel (%p368) target = $region20
        $region19: #{tpu_custom_call.1} parent=11 // pred_region
          %372 = vsyncadd [#allocation3], 0
          %s374 = sshll.u32 %s2, 4
          %s375 = int_to_ptr.hbm [resolvable:$true] %s374
          %s376 = sshll.u32 [#allocation2], 4
          %s377 = int_to_ptr.vmem [resolvable:$true] %s376
          %379 = dma.hbm_to_vmem [thread:$0]  %s375, 16, %s377, [#allocation3]
        $region20: #{tpu_custom_call.1} parent=11 // pred_fallthru
          _
        // Predicated region
        $region21: #{tpu_custom_call.1} parent=11 // pred_check
          %p380 = pneg %p114
        $region22: #{tpu_custom_call.1} parent=11 // pred_check_branch
          %382 = sbr.rel (%p380) target = $region24
        $region23: #{tpu_custom_call.1} parent=11 // pred_region
          %384 = vsyncadd [#allocation6], 0
          %s386 = sshll.u32 %s3, 4
          %s387 = int_to_ptr.hbm [resolvable:$true] %s386
          %s388 = sshll.u32 [#allocation5], 4
          %s389 = int_to_ptr.vmem [resolvable:$true] %s388
          %391 = dma.hbm_to_vmem [thread:$0]  %s387, 16, %s389, [#allocation6]
        $region24: #{tpu_custom_call.1} parent=11 // pred_fallthru
          _
        // Predicated region
        $region25: #{tpu_custom_call.1} parent=11 // pred_check
          %p392 = pneg %p135
        $region26: #{tpu_custom_call.1} parent=11 // pred_check_branch
          %394 = sbr.rel (%p392) target = $region28
        $region27: #{tpu_custom_call.1} parent=11 // pred_region
          _
        $region28: #{tpu_custom_call.1} parent=11 // pred_fallthru
          _
        // Predicated region
        $region29: #{tpu_custom_call.1} parent=11 // pred_check
          %p395 = pneg %p156
        $region30: #{tpu_custom_call.1} parent=11 // pred_check_branch
          %397 = sbr.rel (%p395) target = $region32
        $region31: #{tpu_custom_call.1} parent=11 // pred_region
          _
        $region32: #{tpu_custom_call.1} parent=11 // pred_fallthru
          _
        // Predicated region
        $region33: #{tpu_custom_call.1} parent=11 // pred_check
          %p398 = pneg %p177
        $region34: #{tpu_custom_call.1} parent=11 // pred_check_branch
          %400 = sbr.rel (%p398) target = $region36
        $region35: #{tpu_custom_call.1} parent=11 // pred_region
          _
        $region36: #{tpu_custom_call.1} parent=11 // pred_fallthru
          _
        // Predicated region
        $region37: #{tpu_custom_call.1} parent=11 // pred_check
          %p401 = pneg %p198
        $region38: #{tpu_custom_call.1} parent=11 // pred_check_branch
          %403 = sbr.rel (%p401) target = $region40
        $region39: #{tpu_custom_call.1} parent=11 // pred_region
          _
        $region40: #{tpu_custom_call.1} parent=11 // pred_fallthru
          _
        // Predicated region
        $region41: #{tpu_custom_call.1} parent=11 // pred_check
          %p404 = pneg %p219
        $region42: #{tpu_custom_call.1} parent=11 // pred_check_branch
          %406 = sbr.rel (%p404) target = $region44
        $region43: #{tpu_custom_call.1} parent=11 // pred_region
          _
        $region44: #{tpu_custom_call.1} parent=11 // pred_fallthru
          _
        // Predicated region
        $region45: #{tpu_custom_call.1} parent=11 // pred_check
          %p407 = pneg %p240
        $region46: #{tpu_custom_call.1} parent=11 // pred_check_branch
          %409 = sbr.rel (%p407) target = $region48
        $region47: #{tpu_custom_call.1} parent=11 // pred_region
          _
        $region48: #{tpu_custom_call.1} parent=11 // pred_fallthru
          _
        // Predicated region
        $region49: #{tpu_custom_call.1} parent=11 // pred_check
          %p410 = pneg %p261
        $region50: #{tpu_custom_call.1} parent=11 // pred_check_branch
          %412 = sbr.rel (%p410) target = $region52
        $region51: #{tpu_custom_call.1} parent=11 // pred_region
          %414 = vsyncadd [#allocation6], 0
          %s415 = sshll.u32 %s10, 4
          %s416 = int_to_ptr.hbm [resolvable:$true] %s415
          %s417 = sshll.u32 [#allocation7], 4
          %s418 = int_to_ptr.vmem [resolvable:$true] %s417
          %423 = dma.hbm_to_vmem [thread:$0]  %s416, 512, %s418, [#allocation6], 128, 128, 8
        $region52: #{tpu_custom_call.1} parent=11 // pred_fallthru
          _
        // Predicated region
        $region53: #{tpu_custom_call.1} parent=11 // pred_check
          %p424 = pneg %p282
        $region54: #{tpu_custom_call.1} parent=11 // pred_check_branch
          %426 = sbr.rel (%p424) target = $region56
        $region55: #{tpu_custom_call.1} parent=11 // pred_region
          _
        $region56: #{tpu_custom_call.1} parent=11 // pred_fallthru
          _
        // Predicated region
        $region57: #{tpu_custom_call.1} parent=11 // pred_check
          %p427 = pneg %p303
        $region58: #{tpu_custom_call.1} parent=11 // pred_check_branch
          %429 = sbr.rel (%p427) target = $region60
        $region59: #{tpu_custom_call.1} parent=11 // pred_region
          _
        $region60: #{tpu_custom_call.1} parent=11 // pred_fallthru
          _
        // Predicated region
        $region61: #{tpu_custom_call.1} parent=11 // pred_check
          %p430 = pneg %p324
        $region62: #{tpu_custom_call.1} parent=11 // pred_check_branch
          %432 = sbr.rel (%p430) target = $region64
        $region63: #{tpu_custom_call.1} parent=11 // pred_region
          _
        $region64: #{tpu_custom_call.1} parent=11 // pred_fallthru
          _
      $region12: #{tpu_custom_call.1} parent=5 // pred_fallthru
        _
      %p433 = scmp.lt.s32.totalorder %s25, 2
      // Predicated region
      $region65: #{tpu_custom_call.1} parent=5 // pred_check
        %p434 = pneg %p433
      $region66: #{tpu_custom_call.1} parent=5 // pred_check_branch
        %436 = sbr.rel (%p434) target = $region68
      $region67: #{tpu_custom_call.1} parent=5 // pred_region
        // Predicated region
        $region69: #{tpu_custom_call.1} parent=67 // pred_check
          %p437 = pneg %p45
        $region70: #{tpu_custom_call.1} parent=67 // pred_check_branch
          %439 = sbr.rel (%p437) target = $region72
        $region71: #{tpu_custom_call.1} parent=67 // pred_region
          %p440 = scmp.lt.s32.totalorder %s25, 1
          %s441 = scalar_select %p440, %s25, 1
          %s442 = smul.addr %s441, 8
          %s443 = smul.addr %s442, 8
          %s444 = scalar_lea.vmem %s0, %s443
        $region72: #{tpu_custom_call.1} parent=67 // pred_fallthru
          _
      $region68: #{tpu_custom_call.1} parent=5 // pred_fallthru
        _
      %p445 = scmp.le.s32.totalorder 1, %s25
      %p446 = scmp.lt.s32.totalorder %s25, 3
      %p447 = pnand %p445, %p446
      %p448 = pneg %p447
      // Predicated region
      $region73: #{tpu_custom_call.1} parent=5 // pred_check
        _
      $region74: #{tpu_custom_call.1} parent=5 // pred_check_branch
        %450 = sbr.rel (%p447) target = $region76
      $region75: #{tpu_custom_call.1} parent=5 // pred_region
        %s451 = ssub.s32 %s25, 1
        // Predicated region
        $region77: #{tpu_custom_call.1} parent=75 // pred_check
          %p452 = pneg %p93
        $region78: #{tpu_custom_call.1} parent=75 // pred_check_branch
          %454 = sbr.rel (%p452) target = $region80
        $region79: #{tpu_custom_call.1} parent=75 // pred_region
          %456 = dma.done [#allocation3], 16
        $region80: #{tpu_custom_call.1} parent=75 // pred_fallthru
          _
        // Predicated region
        $region81: #{tpu_custom_call.1} parent=75 // pred_check
          %p457 = pneg %p114
        $region82: #{tpu_custom_call.1} parent=75 // pred_check_branch
          %459 = sbr.rel (%p457) target = $region84
        $region83: #{tpu_custom_call.1} parent=75 // pred_region
          %461 = dma.done [#allocation6], 16
        $region84: #{tpu_custom_call.1} parent=75 // pred_fallthru
          _
        // Predicated region
        $region85: #{tpu_custom_call.1} parent=75 // pred_check
          %p462 = pneg %p261
        $region86: #{tpu_custom_call.1} parent=75 // pred_check_branch
          %464 = sbr.rel (%p462) target = $region88
        $region87: #{tpu_custom_call.1} parent=75 // pred_region
          %466 = dma.done [#allocation6], 512
        $region88: #{tpu_custom_call.1} parent=75 // pred_fallthru
          _
        %p467 = scmp.lt.s32.totalorder %s30, 1
        %s468 = scalar_select %p467, %s30, 1
        %s469 = smul.addr %s468, 8
        %s470 = smul.addr %s469, 8
        %s471 = scalar_lea.vmem %s0, %s470
        %p472 = pneg %p51
        %p473 = pneg %p48
        %p474 = pneg %p72
        %p475 = pneg %p69
        %p476 = pneg %p93
        %p477 = pneg %p90
        %p478 = pneg %p114
        %p479 = pneg %p111
        %p480 = pneg %p135
        %p481 = pneg %p132
        %p482 = pneg %p156
        %p483 = pneg %p153
        %p484 = pneg %p177
        %p485 = pneg %p174
        %p486 = pneg %p198
        %p487 = pneg %p195
        %p488 = pneg %p219
        %p489 = pneg %p216
        %p490 = pneg %p240
        %p491 = pneg %p237
        %p492 = pneg %p261
        %p493 = pneg %p258
        %p494 = pneg %p282
        %p495 = pneg %p279
        %p496 = pneg %p303
        %p497 = pneg %p300
        %p498 = pneg %p324
        %p499 = pneg %p321
        %p500 = pneg %p350
        %p501 = pneg %p347
        %s502 = sand.u32 %s337, 1
        %s503 = scalar_lea.sflag [#allocation4], %s502
        %s504 = sand.u32 %s337, 1
        %s505 = smul.addr %s504, 32
        %s506 = scalar_lea.vmem [#allocation8], %s505
        %p507 = scmp.lt.s32.totalorder %s30, 1
        %s508 = scalar_select %p507, %s30, 1
        %s509 = smul.addr %s508, 8
        %s510 = smul.addr %s509, 8
        %s511 = scalar_lea.vmem %s0, %s510
        %v512 = vld [vmem:[%s511] sm:$0xff]
        %v513 = vld [vmem:[%s511 + $0x8] sm:$0xff]
        %v514 = vld [vmem:[%s511 + $0x10] sm:$0xff]
        %v515 = vld [vmem:[%s511 + $0x18] sm:$0xff]
        %v516 = vld [vmem:[%s511 + $0x20] sm:$0xff]
        %v517 = vld [vmem:[%s511 + $0x28] sm:$0xff]
        %v518 = vld [vmem:[%s511 + $0x30] sm:$0xff]
        %v519 = vld [vmem:[%s511 + $0x38] sm:$0xff]
        %v520 = vld [vmem:[#allocation2] sm:$0x1]
        %v521 = vld [vmem:[#allocation5] sm:$0x1]
        %vm522 = vcmask 261120
        %v523 = vsel %vm522, %v512, 0.0
        %524 = vadd.xlane.f32.xlu0 %v523
        %v525 = vpop.xlane.xlu0 %524
        %v526 = vsel %vm522, %v513, 0.0
        %527 = vadd.xlane.f32.xlu0 %v526
        %v528 = vpop.xlane.xlu0 %527
        %v529 = vsel %vm522, %v514, 0.0
        %530 = vadd.xlane.f32.xlu0 %v529
        %v531 = vpop.xlane.xlu0 %530
        %v532 = vsel %vm522, %v515, 0.0
        %533 = vadd.xlane.f32.xlu0 %v532
        %v534 = vpop.xlane.xlu0 %533
        %v535 = vsel %vm522, %v516, 0.0
        %536 = vadd.xlane.f32.xlu0 %v535
        %v537 = vpop.xlane.xlu0 %536
        %v538 = vsel %vm522, %v517, 0.0
        %539 = vadd.xlane.f32.xlu0 %v538
        %v540 = vpop.xlane.xlu0 %539
        %v541 = vsel %vm522, %v518, 0.0
        %542 = vadd.xlane.f32.xlu0 %v541
        %v543 = vpop.xlane.xlu0 %542
        %v544 = vsel %vm522, %v519, 0.0
        %545 = vadd.xlane.f32.xlu0 %v544
        %v546 = vpop.xlane.xlu0 %545
        %v547 = vrcp.pop 32.0
        %v548 = vmul.f32 32.0, %v547
        %v549 = vsub.f32 1.0, %v548
        %v550 = vmul.f32 %v547, %v549
        %v551 = vadd.f32 %v547, %v550
        %vm552 = vweird.f32 %v547
        %v553 = vsel %vm552, %v547, %v551
        %v554 = vmul.f32 %v525, %v553
        %v555 = vmul.f32 %v528, %v553
        %v556 = vmul.f32 %v531, %v553
        %v557 = vmul.f32 %v534, %v553
        %v558 = vmul.f32 %v537, %v553
        %v559 = vmul.f32 %v540, %v553
        %v560 = vmul.f32 %v543, %v553
        %v561 = vmul.f32 %v546, %v553
        %v562 = vsub.f32 %v512, %v554
        %v563 = vsub.f32 %v513, %v555
        %v564 = vsub.f32 %v514, %v556
        %v565 = vsub.f32 %v515, %v557
        %v566 = vsub.f32 %v516, %v558
        %v567 = vsub.f32 %v517, %v559
        %v568 = vsub.f32 %v518, %v560
        %v569 = vsub.f32 %v519, %v561
        %v570 = vmul.f32 %v562, %v562
        %v571 = vmul.f32 %v563, %v563
        %v572 = vmul.f32 %v564, %v564
        %v573 = vmul.f32 %v565, %v565
        %v574 = vmul.f32 %v566, %v566
        %v575 = vmul.f32 %v567, %v567
        %v576 = vmul.f32 %v568, %v568
        %v577 = vmul.f32 %v569, %v569
        %v578 = vsel %vm522, %v570, 0.0
        %579 = vadd.xlane.f32.xlu0 %v578
        %v580 = vpop.xlane.xlu0 %579
        %v581 = vsel %vm522, %v571, 0.0
        %582 = vadd.xlane.f32.xlu0 %v581
        %v583 = vpop.xlane.xlu0 %582
        %v584 = vsel %vm522, %v572, 0.0
        %585 = vadd.xlane.f32.xlu0 %v584
        %v586 = vpop.xlane.xlu0 %585
        %v587 = vsel %vm522, %v573, 0.0
        %588 = vadd.xlane.f32.xlu0 %v587
        %v589 = vpop.xlane.xlu0 %588
        %v590 = vsel %vm522, %v574, 0.0
        %591 = vadd.xlane.f32.xlu0 %v590
        %v592 = vpop.xlane.xlu0 %591
        %v593 = vsel %vm522, %v575, 0.0
        %594 = vadd.xlane.f32.xlu0 %v593
        %v595 = vpop.xlane.xlu0 %594
        %v596 = vsel %vm522, %v576, 0.0
        %597 = vadd.xlane.f32.xlu0 %v596
        %v598 = vpop.xlane.xlu0 %597
        %v599 = vsel %vm522, %v577, 0.0
        %600 = vadd.xlane.f32.xlu0 %v599
        %v601 = vpop.xlane.xlu0 %600
        %v602 = vmul.f32 %v580, %v553
        %v603 = vmul.f32 %v583, %v553
        %v604 = vmul.f32 %v586, %v553
        %v605 = vmul.f32 %v589, %v553
        %v606 = vmul.f32 %v592, %v553
        %v607 = vmul.f32 %v595, %v553
        %v608 = vmul.f32 %v598, %v553
        %v609 = vmul.f32 %v601, %v553
        %v610 = vadd.f32 %v602, 1e-05
        %v611 = vadd.f32 %v603, 1e-05
        %v612 = vadd.f32 %v604, 1e-05
        %v613 = vadd.f32 %v605, 1e-05
        %v614 = vadd.f32 %v606, 1e-05
        %v615 = vadd.f32 %v607, 1e-05
        %v616 = vadd.f32 %v608, 1e-05
        %v617 = vadd.f32 %v609, 1e-05
        %v618 = vrsqrt.pop %v610
        %v619 = vmul.f32 %v618, %v610
        %v620 = vmul.f32 %v619, %v618
        %v621 = vmul.f32 0.5, %v620
        %v622 = vsub.f32 1.5, %v621
        %v623 = vmul.f32 %v618, %v622
        %vm624 = vweird.f32 %v610
        %vm625 = vweird.f32 %v618
        %vm626 = vmor %vm624, %vm625
        %v627 = vsel %vm626, %v618, %v623
        %v628 = vrsqrt.pop %v611
        %v629 = vmul.f32 %v628, %v611
        %v630 = vmul.f32 %v629, %v628
        %v631 = vmul.f32 0.5, %v630
        %v632 = vsub.f32 1.5, %v631
        %v633 = vmul.f32 %v628, %v632
        %vm634 = vweird.f32 %v611
        %vm635 = vweird.f32 %v628
        %vm636 = vmor %vm634, %vm635
        %v637 = vsel %vm636, %v628, %v633
        %v638 = vrsqrt.pop %v612
        %v639 = vmul.f32 %v638, %v612
        %v640 = vmul.f32 %v639, %v638
        %v641 = vmul.f32 0.5, %v640
        %v642 = vsub.f32 1.5, %v641
        %v643 = vmul.f32 %v638, %v642
        %vm644 = vweird.f32 %v612
        %vm645 = vweird.f32 %v638
        %vm646 = vmor %vm644, %vm645
        %v647 = vsel %vm646, %v638, %v643
        %v648 = vrsqrt.pop %v613
        %v649 = vmul.f32 %v648, %v613
        %v650 = vmul.f32 %v649, %v648
        %v651 = vmul.f32 0.5, %v650
        %v652 = vsub.f32 1.5, %v651
        %v653 = vmul.f32 %v648, %v652
        %vm654 = vweird.f32 %v613
        %vm655 = vweird.f32 %v648
        %vm656 = vmor %vm654, %vm655
        %v657 = vsel %vm656, %v648, %v653
        %v658 = vrsqrt.pop %v614
        %v659 = vmul.f32 %v658, %v614
        %v660 = vmul.f32 %v659, %v658
        %v661 = vmul.f32 0.5, %v660
        %v662 = vsub.f32 1.5, %v661
        %v663 = vmul.f32 %v658, %v662
        %vm664 = vweird.f32 %v614
        %vm665 = vweird.f32 %v658
        %vm666 = vmor %vm664, %vm665
        %v667 = vsel %vm666, %v658, %v663
        %v668 = vrsqrt.pop %v615
        %v669 = vmul.f32 %v668, %v615
        %v670 = vmul.f32 %v669, %v668
        %v671 = vmul.f32 0.5, %v670
        %v672 = vsub.f32 1.5, %v671
        %v673 = vmul.f32 %v668, %v672
        %vm674 = vweird.f32 %v615
        %vm675 = vweird.f32 %v668
        %vm676 = vmor %vm674, %vm675
        %v677 = vsel %vm676, %v668, %v673
        %v678 = vrsqrt.pop %v616
        %v679 = vmul.f32 %v678, %v616
        %v680 = vmul.f32 %v679, %v678
        %v681 = vmul.f32 0.5, %v680
        %v682 = vsub.f32 1.5, %v681
        %v683 = vmul.f32 %v678, %v682
        %vm684 = vweird.f32 %v616
        %vm685 = vweird.f32 %v678
        %vm686 = vmor %vm684, %vm685
        %v687 = vsel %vm686, %v678, %v683
        %v688 = vrsqrt.pop %v617
        %v689 = vmul.f32 %v688, %v617
        %v690 = vmul.f32 %v689, %v688
        %v691 = vmul.f32 0.5, %v690
        %v692 = vsub.f32 1.5, %v691
        %v693 = vmul.f32 %v688, %v692
        %vm694 = vweird.f32 %v617
        %vm695 = vweird.f32 %v688
        %vm696 = vmor %vm694, %vm695
        %v697 = vsel %vm696, %v688, %v693
        %v698 = vmul.f32 %v562, %v627
        %v699 = vmul.f32 %v563, %v637
        %v700 = vmul.f32 %v564, %v647
        %v701 = vmul.f32 %v565, %v657
        %v702 = vmul.f32 %v566, %v667
        %v703 = vmul.f32 %v567, %v677
        %v704 = vmul.f32 %v568, %v687
        %v705 = vmul.f32 %v569, %v697
        %v707 = vperm.slane %v520, 0
        %v709 = vmul.f32 %v698, %v707
        %v710 = vmul.f32 %v699, %v707
        %v711 = vmul.f32 %v700, %v707
        %v712 = vmul.f32 %v701, %v707
        %v713 = vmul.f32 %v702, %v707
        %v714 = vmul.f32 %v703, %v707
        %v715 = vmul.f32 %v704, %v707
        %v716 = vmul.f32 %v705, %v707
        %v718 = vperm.slane %v521, 0
        %v720 = vadd.f32 %v709, %v718
        %v721 = vadd.f32 %v710, %v718
        %v722 = vadd.f32 %v711, %v718
        %v723 = vadd.f32 %v712, %v718
        %v724 = vadd.f32 %v713, %v718
        %v725 = vadd.f32 %v714, %v718
        %v726 = vadd.f32 %v715, %v718
        %v727 = vadd.f32 %v716, %v718
        %v728 = vld [vmem:[%s4] sm:$0xff]
        %v729 = vld [vmem:[%s4 + $0x8] sm:$0xff]
        %v730 = vld [vmem:[%s4 + $0x10] sm:$0xff]
        %v731 = vld [vmem:[%s4 + $0x18] sm:$0xff]
        %v732 = vld [vmem:[%s5] sm:$0x1]
        %v734 = vperm.slane %v732, 0
        %v737 = vsel %vm522, %v720, 0
        %v740 = vsel %vm522, %v721, 0
        %v743 = vsel %vm522, %v722, 0
        %v746 = vsel %vm522, %v723, 0
        %v749 = vsel %vm522, %v724, 0
        %v752 = vsel %vm522, %v725, 0
        %v755 = vsel %vm522, %v726, 0
        %v758 = vsel %vm522, %v727, 0
        %760 = vmatpush.msra.mxu0 0.0
        %761 = vmatpush.msra.mxu0 0.0
        %762 = vmatpush.msra.mxu0 0.0
        %763 = vmatpush.msra.mxu0 0.0
        %764 = vmatpush.msra.mxu0 0.0
        %765 = vmatpush.msra.mxu0 0.0
        %766 = vmatpush.msra.mxu0 0.0
        %767 = vmatpush.msra.mxu0 0.0
        %768 = vmatpush.msra.mxu0 0.0
        %769 = vmatpush.msra.mxu0 0.0
        %770 = vmatpush.msra.mxu0 0.0
        %771 = vmatpush.msra.mxu0 0.0
        %772 = vmatpush.msra.mxu0 %v731
        %773 = vmatpush.msra.mxu0 %v730
        %774 = vmatpush.msra.mxu0 %v729
        %775 = vmatpush.msra.mxu0 %v728
        %776 = vmatmul.f32.gmra.mxu0 %v737
        %v777 = vpop.f32.mrf.mxu0
        %v778 = vadd.f32 %v734, %v777
        %779 = vmatmul.f32.gmra.mxu0 %v740
        %v780 = vpop.f32.mrf.mxu0
        %v781 = vadd.f32 %v734, %v780
        %782 = vmatmul.f32.gmra.mxu0 %v743
        %v783 = vpop.f32.mrf.mxu0
        %v784 = vadd.f32 %v734, %v783
        %785 = vmatmul.f32.gmra.mxu0 %v746
        %v786 = vpop.f32.mrf.mxu0
        %v787 = vadd.f32 %v734, %v786
        %788 = vmatmul.f32.gmra.mxu0 %v749
        %v789 = vpop.f32.mrf.mxu0
        %v790 = vadd.f32 %v734, %v789
        %791 = vmatmul.f32.gmra.mxu0 %v752
        %v792 = vpop.f32.mrf.mxu0
        %v793 = vadd.f32 %v734, %v792
        %794 = vmatmul.f32.gmra.mxu0 %v755
        %v795 = vpop.f32.mrf.mxu0
        %v796 = vadd.f32 %v734, %v795
        %797 = vmatmul.f32.gmra.mxu0 %v758
        %v798 = vpop.f32.mrf.mxu0
        %v799 = vadd.f32 %v734, %v798
        %800 = vdwg.mxu0
        %v801 = vmul.f32 %v778, 0.35355338
        %v802 = vmul.f32 %v781, 0.35355338
        %v803 = vmul.f32 %v784, 0.35355338
        %v804 = vmul.f32 %v787, 0.35355338
        %v805 = vmul.f32 %v790, 0.35355338
        %v806 = vmul.f32 %v793, 0.35355338
        %v807 = vmul.f32 %v796, 0.35355338
        %v808 = vmul.f32 %v799, 0.35355338
        %v809 = vld [vmem:[%s1] sm:$0xff]
        %v810 = vld [vmem:[%s1 + $0x8] sm:$0xff]
        %v811 = vld [vmem:[%s1 + $0x10] sm:$0xff]
        %v812 = vld [vmem:[%s1 + $0x18] sm:$0xff]
        %v813 = vld [vmem:[%s1 + $0x20] sm:$0xff]
        %v814 = vld [vmem:[%s1 + $0x28] sm:$0xff]
        %v815 = vld [vmem:[%s1 + $0x30] sm:$0xff]
        %v816 = vld [vmem:[%s1 + $0x38] sm:$0xff]
        %825 = vrot.lane.b32.xlu0 %v778, 96
        %v826 = vpop.permute.xlu0 %825
        %827 = vrot.lane.b32.xlu0 %v781, 96
        %v828 = vpop.permute.xlu0 %827
        %829 = vrot.lane.b32.xlu0 %v784, 96
        %v830 = vpop.permute.xlu0 %829
        %831 = vrot.lane.b32.xlu0 %v787, 96
        %v832 = vpop.permute.xlu0 %831
        %833 = vrot.lane.b32.xlu0 %v790, 96
        %v834 = vpop.permute.xlu0 %833
        %835 = vrot.lane.b32.xlu0 %v793, 96
        %v836 = vpop.permute.xlu0 %835
        %837 = vrot.lane.b32.xlu0 %v796, 96
        %v838 = vpop.permute.xlu0 %837
        %839 = vrot.lane.b32.xlu0 %v799, 96
        %v840 = vpop.permute.xlu0 %839
        %vm841 = vcmask 64512
        %v843 = vsel %vm841, %v801, 0
        %v846 = vsel %vm841, %v802, 0
        %v849 = vsel %vm841, %v803, 0
        %v852 = vsel %vm841, %v804, 0
        %v855 = vsel %vm841, %v805, 0
        %v858 = vsel %vm841, %v806, 0
        %v861 = vsel %vm841, %v807, 0
        %v864 = vsel %vm841, %v808, 0
        %v866 = vsel %vm841, %v826, 0
        %v868 = vsel %vm841, %v828, 0
        %v870 = vsel %vm841, %v830, 0
        %v872 = vsel %vm841, %v832, 0
        %v874 = vsel %vm841, %v834, 0
        %v876 = vsel %vm841, %v836, 0
        %v878 = vsel %vm841, %v838, 0
        %v880 = vsel %vm841, %v840, 0
        %882 = vmatpush.xpose.msra.mxu0 0.0
        %883 = vmatpush.xpose.msra.mxu0 0.0
        %884 = vmatpush.xpose.msra.mxu0 0.0
        %885 = vmatpush.xpose.msra.mxu0 0.0
        %886 = vmatpush.xpose.msra.mxu0 0.0
        %887 = vmatpush.xpose.msra.mxu0 0.0
        %888 = vmatpush.xpose.msra.mxu0 0.0
        %889 = vmatpush.xpose.msra.mxu0 0.0
        %890 = vmatpush.xpose.msra.mxu0 %v880
        %891 = vmatpush.xpose.msra.mxu0 %v878
        %892 = vmatpush.xpose.msra.mxu0 %v876
        %893 = vmatpush.xpose.msra.mxu0 %v874
        %894 = vmatpush.xpose.msra.mxu0 %v872
        %895 = vmatpush.xpose.msra.mxu0 %v870
        %896 = vmatpush.xpose.msra.mxu0 %v868
        %897 = vmatpush.xpose.msra.mxu0 %v866
        %898 = vmatmul.f32.gmra.mxu0 %v843
        %v899 = vpop.f32.mrf.mxu0
        %v900 = vadd.f32 %v809, %v899
        %901 = vmatmul.f32.gmra.mxu0 %v846
        %v902 = vpop.f32.mrf.mxu0
        %v903 = vadd.f32 %v810, %v902
        %904 = vmatmul.f32.gmra.mxu0 %v849
        %v905 = vpop.f32.mrf.mxu0
        %v906 = vadd.f32 %v811, %v905
        %907 = vmatmul.f32.gmra.mxu0 %v852
        %v908 = vpop.f32.mrf.mxu0
        %v909 = vadd.f32 %v812, %v908
        %910 = vmatmul.f32.gmra.mxu0 %v855
        %v911 = vpop.f32.mrf.mxu0
        %v912 = vadd.f32 %v813, %v911
        %913 = vmatmul.f32.gmra.mxu0 %v858
        %v914 = vpop.f32.mrf.mxu0
        %v915 = vadd.f32 %v814, %v914
        %916 = vmatmul.f32.gmra.mxu0 %v861
        %v917 = vpop.f32.mrf.mxu0
        %v918 = vadd.f32 %v815, %v917
        %919 = vmatmul.f32.gmra.mxu0 %v864
        %v920 = vpop.f32.mrf.mxu0
        %v921 = vadd.f32 %v816, %v920
        %922 = vdwg.mxu0
        %vm923 = vcmask 523264
        %v924 = vsel %vm923, %v900, -inf
        %925 = vmax.xlane.f32.xlu0 %v924
        %v926 = vpop.xlane.xlu0 %925
        %v927 = vsel %vm923, %v903, -inf
        %928 = vmax.xlane.f32.xlu0 %v927
        %v929 = vpop.xlane.xlu0 %928
        %v930 = vsel %vm923, %v906, -inf
        %931 = vmax.xlane.f32.xlu0 %v930
        %v932 = vpop.xlane.xlu0 %931
        %v933 = vsel %vm923, %v909, -inf
        %934 = vmax.xlane.f32.xlu0 %v933
        %v935 = vpop.xlane.xlu0 %934
        %v936 = vsel %vm923, %v912, -inf
        %937 = vmax.xlane.f32.xlu0 %v936
        %v938 = vpop.xlane.xlu0 %937
        %v939 = vsel %vm923, %v915, -inf
        %940 = vmax.xlane.f32.xlu0 %v939
        %v941 = vpop.xlane.xlu0 %940
        %v942 = vsel %vm923, %v918, -inf
        %943 = vmax.xlane.f32.xlu0 %v942
        %v944 = vpop.xlane.xlu0 %943
        %v945 = vsel %vm923, %v921, -inf
        %946 = vmax.xlane.f32.xlu0 %v945
        %v947 = vpop.xlane.xlu0 %946
        %v948 = vsub.f32 %v900, %v926
        %v949 = vsub.f32 %v903, %v929
        %v950 = vsub.f32 %v906, %v932
        %v951 = vsub.f32 %v909, %v935
        %v952 = vsub.f32 %v912, %v938
        %v953 = vsub.f32 %v915, %v941
        %v954 = vsub.f32 %v918, %v944
        %v955 = vsub.f32 %v921, %v947
        %v956 = vmul.f32 %v948, 1.442695
        %v957 = vpow.pop %v956
        %v958 = vmul.f32 %v949, 1.442695
        %v959 = vpow.pop %v958
        %v960 = vmul.f32 %v950, 1.442695
        %v961 = vpow.pop %v960
        %v962 = vmul.f32 %v951, 1.442695
        %v963 = vpow.pop %v962
        %v964 = vmul.f32 %v952, 1.442695
        %v965 = vpow.pop %v964
        %v966 = vmul.f32 %v953, 1.442695
        %v967 = vpow.pop %v966
        %v968 = vmul.f32 %v954, 1.442695
        %v969 = vpow.pop %v968
        %v970 = vmul.f32 %v955, 1.442695
        %v971 = vpow.pop %v970
        %v972 = vsel %vm923, %v957, 0.0
        %973 = vadd.xlane.f32.xlu0 %v972
        %v974 = vpop.xlane.xlu0 %973
        %v975 = vsel %vm923, %v959, 0.0
        %976 = vadd.xlane.f32.xlu0 %v975
        %v977 = vpop.xlane.xlu0 %976
        %v978 = vsel %vm923, %v961, 0.0
        %979 = vadd.xlane.f32.xlu0 %v978
        %v980 = vpop.xlane.xlu0 %979
        %v981 = vsel %vm923, %v963, 0.0
        %982 = vadd.xlane.f32.xlu0 %v981
        %v983 = vpop.xlane.xlu0 %982
        %v984 = vsel %vm923, %v965, 0.0
        %985 = vadd.xlane.f32.xlu0 %v984
        %v986 = vpop.xlane.xlu0 %985
        %v987 = vsel %vm923, %v967, 0.0
        %988 = vadd.xlane.f32.xlu0 %v987
        %v989 = vpop.xlane.xlu0 %988
        %v990 = vsel %vm923, %v969, 0.0
        %991 = vadd.xlane.f32.xlu0 %v990
        %v992 = vpop.xlane.xlu0 %991
        %v993 = vsel %vm923, %v971, 0.0
        %994 = vadd.xlane.f32.xlu0 %v993
        %v995 = vpop.xlane.xlu0 %994
        %v996 = vrcp.pop %v974
        %v997 = vmul.f32 %v974, %v996
        %v998 = vsub.f32 1.0, %v997
        %v999 = vmul.f32 %v996, %v998
        %v1000 = vadd.f32 %v996, %v999
        %vm1001 = vweird.f32 %v974
        %vm1002 = vweird.f32 %v996
        %vm1003 = vmor %vm1001, %vm1002
        %v1004 = vsel %vm1003, %v996, %v1000
        %v1005 = vand.u32 2147483647, %v974
        %vm1006 = vcmp.eq.f32.partialorder %v1005, 8.507059e+37
        %v1007 = vand.u32 %v974, 2147483648
        %v1008 = vor.u32 1.1754944e-38, %v1007
        %v1009 = vsel %vm1006, %v1008, %v1004
        %v1010 = vrcp.pop %v977
        %v1011 = vmul.f32 %v977, %v1010
        %v1012 = vsub.f32 1.0, %v1011
        %v1013 = vmul.f32 %v1010, %v1012
        %v1014 = vadd.f32 %v1010, %v1013
        %vm1015 = vweird.f32 %v977
        %vm1016 = vweird.f32 %v1010
        %vm1017 = vmor %vm1015, %vm1016
        %v1018 = vsel %vm1017, %v1010, %v1014
        %v1019 = vand.u32 2147483647, %v977
        %vm1020 = vcmp.eq.f32.partialorder %v1019, 8.507059e+37
        %v1021 = vand.u32 %v977, 2147483648
        %v1022 = vor.u32 1.1754944e-38, %v1021
        %v1023 = vsel %vm1020, %v1022, %v1018
        %v1024 = vrcp.pop %v980
        %v1025 = vmul.f32 %v980, %v1024
        %v1026 = vsub.f32 1.0, %v1025
        %v1027 = vmul.f32 %v1024, %v1026
        %v1028 = vadd.f32 %v1024, %v1027
        %vm1029 = vweird.f32 %v980
        %vm1030 = vweird.f32 %v1024
        %vm1031 = vmor %vm1029, %vm1030
        %v1032 = vsel %vm1031, %v1024, %v1028
        %v1033 = vand.u32 2147483647, %v980
        %vm1034 = vcmp.eq.f32.partialorder %v1033, 8.507059e+37
        %v1035 = vand.u32 %v980, 2147483648
        %v1036 = vor.u32 1.1754944e-38, %v1035
        %v1037 = vsel %vm1034, %v1036, %v1032
        %v1038 = vrcp.pop %v983
        %v1039 = vmul.f32 %v983, %v1038
        %v1040 = vsub.f32 1.0, %v1039
        %v1041 = vmul.f32 %v1038, %v1040
        %v1042 = vadd.f32 %v1038, %v1041
        %vm1043 = vweird.f32 %v983
        %vm1044 = vweird.f32 %v1038
        %vm1045 = vmor %vm1043, %vm1044
        %v1046 = vsel %vm1045, %v1038, %v1042
        %v1047 = vand.u32 2147483647, %v983
        %vm1048 = vcmp.eq.f32.partialorder %v1047, 8.507059e+37
        %v1049 = vand.u32 %v983, 2147483648
        %v1050 = vor.u32 1.1754944e-38, %v1049
        %v1051 = vsel %vm1048, %v1050, %v1046
        %v1052 = vrcp.pop %v986
        %v1053 = vmul.f32 %v986, %v1052
        %v1054 = vsub.f32 1.0, %v1053
        %v1055 = vmul.f32 %v1052, %v1054
        %v1056 = vadd.f32 %v1052, %v1055
        %vm1057 = vweird.f32 %v986
        %vm1058 = vweird.f32 %v1052
        %vm1059 = vmor %vm1057, %vm1058
        %v1060 = vsel %vm1059, %v1052, %v1056
        %v1061 = vand.u32 2147483647, %v986
        %vm1062 = vcmp.eq.f32.partialorder %v1061, 8.507059e+37
        %v1063 = vand.u32 %v986, 2147483648
        %v1064 = vor.u32 1.1754944e-38, %v1063
        %v1065 = vsel %vm1062, %v1064, %v1060
        %v1066 = vrcp.pop %v989
        %v1067 = vmul.f32 %v989, %v1066
        %v1068 = vsub.f32 1.0, %v1067
        %v1069 = vmul.f32 %v1066, %v1068
        %v1070 = vadd.f32 %v1066, %v1069
        %vm1071 = vweird.f32 %v989
        %vm1072 = vweird.f32 %v1066
        %vm1073 = vmor %vm1071, %vm1072
        %v1074 = vsel %vm1073, %v1066, %v1070
        %v1075 = vand.u32 2147483647, %v989
        %vm1076 = vcmp.eq.f32.partialorder %v1075, 8.507059e+37
        %v1077 = vand.u32 %v989, 2147483648
        %v1078 = vor.u32 1.1754944e-38, %v1077
        %v1079 = vsel %vm1076, %v1078, %v1074
        %v1080 = vrcp.pop %v992
        %v1081 = vmul.f32 %v992, %v1080
        %v1082 = vsub.f32 1.0, %v1081
        %v1083 = vmul.f32 %v1080, %v1082
        %v1084 = vadd.f32 %v1080, %v1083
        %vm1085 = vweird.f32 %v992
        %vm1086 = vweird.f32 %v1080
        %vm1087 = vmor %vm1085, %vm1086
        %v1088 = vsel %vm1087, %v1080, %v1084
        %v1089 = vand.u32 2147483647, %v992
        %vm1090 = vcmp.eq.f32.partialorder %v1089, 8.507059e+37
        %v1091 = vand.u32 %v992, 2147483648
        %v1092 = vor.u32 1.1754944e-38, %v1091
        %v1093 = vsel %vm1090, %v1092, %v1088
        %v1094 = vrcp.pop %v995
        %v1095 = vmul.f32 %v995, %v1094
        %v1096 = vsub.f32 1.0, %v1095
        %v1097 = vmul.f32 %v1094, %v1096
        %v1098 = vadd.f32 %v1094, %v1097
        %vm1099 = vweird.f32 %v995
        %vm1100 = vweird.f32 %v1094
        %vm1101 = vmor %vm1099, %vm1100
        %v1102 = vsel %vm1101, %v1094, %v1098
        %v1103 = vand.u32 2147483647, %v995
        %vm1104 = vcmp.eq.f32.partialorder %v1103, 8.507059e+37
        %v1105 = vand.u32 %v995, 2147483648
        %v1106 = vor.u32 1.1754944e-38, %v1105
        %v1107 = vsel %vm1104, %v1106, %v1102
        %v1108 = vmul.f32 %v957, %v1009
        %v1109 = vmul.f32 %v959, %v1023
        %v1110 = vmul.f32 %v961, %v1037
        %v1111 = vmul.f32 %v963, %v1051
        %v1112 = vmul.f32 %v965, %v1065
        %v1113 = vmul.f32 %v967, %v1079
        %v1114 = vmul.f32 %v969, %v1093
        %v1115 = vmul.f32 %v971, %v1107
        %1116 = vrot.lane.b32.xlu0 %v778, 64
        %v1117 = vpop.permute.xlu0 %1116
        %1118 = vrot.lane.b32.xlu0 %v781, 64
        %v1119 = vpop.permute.xlu0 %1118
        %1120 = vrot.lane.b32.xlu0 %v784, 64
        %v1121 = vpop.permute.xlu0 %1120
        %1122 = vrot.lane.b32.xlu0 %v787, 64
        %v1123 = vpop.permute.xlu0 %1122
        %1124 = vrot.lane.b32.xlu0 %v790, 64
        %v1125 = vpop.permute.xlu0 %1124
        %1126 = vrot.lane.b32.xlu0 %v793, 64
        %v1127 = vpop.permute.xlu0 %1126
        %1128 = vrot.lane.b32.xlu0 %v796, 64
        %v1129 = vpop.permute.xlu0 %1128
        %1130 = vrot.lane.b32.xlu0 %v799, 64
        %v1131 = vpop.permute.xlu0 %1130
        %v1141 = vsel %vm923, %v1108, 0
        %v1144 = vsel %vm923, %v1109, 0
        %v1147 = vsel %vm923, %v1110, 0
        %v1150 = vsel %vm923, %v1111, 0
        %v1153 = vsel %vm923, %v1112, 0
        %v1156 = vsel %vm923, %v1113, 0
        %v1159 = vsel %vm923, %v1114, 0
        %v1162 = vsel %vm923, %v1115, 0
        %1164 = vmatpush.msra.mxu0 0.0
        %1165 = vmatpush.msra.mxu0 0.0
        %1166 = vmatpush.msra.mxu0 0.0
        %1167 = vmatpush.msra.mxu0 0.0
        %1168 = vmatpush.msra.mxu0 0.0
        %1169 = vmatpush.msra.mxu0 0.0
        %1170 = vmatpush.msra.mxu0 0.0
        %1171 = vmatpush.msra.mxu0 0.0
        %1172 = vmatpush.msra.mxu0 %v1131
        %1173 = vmatpush.msra.mxu0 %v1129
        %1174 = vmatpush.msra.mxu0 %v1127
        %1175 = vmatpush.msra.mxu0 %v1125
        %1176 = vmatpush.msra.mxu0 %v1123
        %1177 = vmatpush.msra.mxu0 %v1121
        %1178 = vmatpush.msra.mxu0 %v1119
        %1179 = vmatpush.msra.mxu0 %v1117
        %1180 = vmatmul.f32.gmra.mxu0 %v1141
        %v1181 = vpop.f32.mrf.mxu0
        %v1182 = vadd.f32 0.0, %v1181
        %1183 = vmatmul.f32.gmra.mxu0 %v1144
        %v1184 = vpop.f32.mrf.mxu0
        %v1185 = vadd.f32 0.0, %v1184
        %1186 = vmatmul.f32.gmra.mxu0 %v1147
        %v1187 = vpop.f32.mrf.mxu0
        %v1188 = vadd.f32 0.0, %v1187
        %1189 = vmatmul.f32.gmra.mxu0 %v1150
        %v1190 = vpop.f32.mrf.mxu0
        %v1191 = vadd.f32 0.0, %v1190
        %1192 = vmatmul.f32.gmra.mxu0 %v1153
        %v1193 = vpop.f32.mrf.mxu0
        %v1194 = vadd.f32 0.0, %v1193
        %1195 = vmatmul.f32.gmra.mxu0 %v1156
        %v1196 = vpop.f32.mrf.mxu0
        %v1197 = vadd.f32 0.0, %v1196
        %1198 = vmatmul.f32.gmra.mxu0 %v1159
        %v1199 = vpop.f32.mrf.mxu0
        %v1200 = vadd.f32 0.0, %v1199
        %1201 = vmatmul.f32.gmra.mxu0 %v1162
        %v1202 = vpop.f32.mrf.mxu0
        %v1203 = vadd.f32 0.0, %v1202
        %1204 = vdwg.mxu0
        %s1205 = scalar_lea.vmem %s1, 64
        %v1206 = vld [vmem:[%s1205] sm:$0xff]
        %v1207 = vld [vmem:[%s1205 + $0x8] sm:$0xff]
        %v1208 = vld [vmem:[%s1205 + $0x10] sm:$0xff]
        %v1209 = vld [vmem:[%s1205 + $0x18] sm:$0xff]
        %v1210 = vld [vmem:[%s1205 + $0x20] sm:$0xff]
        %v1211 = vld [vmem:[%s1205 + $0x28] sm:$0xff]
        %v1212 = vld [vmem:[%s1205 + $0x30] sm:$0xff]
        %v1213 = vld [vmem:[%s1205 + $0x38] sm:$0xff]
        %1214 = vrot.lane.b32.xlu0 %v801, 120
        %v1215 = vpop.permute.xlu0 %1214
        %1216 = vrot.lane.b32.xlu0 %v802, 120
        %v1217 = vpop.permute.xlu0 %1216
        %1218 = vrot.lane.b32.xlu0 %v803, 120
        %v1219 = vpop.permute.xlu0 %1218
        %1220 = vrot.lane.b32.xlu0 %v804, 120
        %v1221 = vpop.permute.xlu0 %1220
        %1222 = vrot.lane.b32.xlu0 %v805, 120
        %v1223 = vpop.permute.xlu0 %1222
        %1224 = vrot.lane.b32.xlu0 %v806, 120
        %v1225 = vpop.permute.xlu0 %1224
        %1226 = vrot.lane.b32.xlu0 %v807, 120
        %v1227 = vpop.permute.xlu0 %1226
        %1228 = vrot.lane.b32.xlu0 %v808, 120
        %v1229 = vpop.permute.xlu0 %1228
        %1230 = vrot.lane.b32.xlu0 %v778, 88
        %v1231 = vpop.permute.xlu0 %1230
        %1232 = vrot.lane.b32.xlu0 %v781, 88
        %v1233 = vpop.permute.xlu0 %1232
        %1234 = vrot.lane.b32.xlu0 %v784, 88
        %v1235 = vpop.permute.xlu0 %1234
        %1236 = vrot.lane.b32.xlu0 %v787, 88
        %v1237 = vpop.permute.xlu0 %1236
        %1238 = vrot.lane.b32.xlu0 %v790, 88
        %v1239 = vpop.permute.xlu0 %1238
        %1240 = vrot.lane.b32.xlu0 %v793, 88
        %v1241 = vpop.permute.xlu0 %1240
        %1242 = vrot.lane.b32.xlu0 %v796, 88
        %v1243 = vpop.permute.xlu0 %1242
        %1244 = vrot.lane.b32.xlu0 %v799, 88
        %v1245 = vpop.permute.xlu0 %1244
        %v1246 = vsel %vm841, %v1215, 0
        %v1248 = vsel %vm841, %v1217, 0
        %v1250 = vsel %vm841, %v1219, 0
        %v1252 = vsel %vm841, %v1221, 0
        %v1254 = vsel %vm841, %v1223, 0
        %v1256 = vsel %vm841, %v1225, 0
        %v1258 = vsel %vm841, %v1227, 0
        %v1260 = vsel %vm841, %v1229, 0
        %v1262 = vsel %vm841, %v1231, 0
        %v1264 = vsel %vm841, %v1233, 0
        %v1266 = vsel %vm841, %v1235, 0
        %v1268 = vsel %vm841, %v1237, 0
        %v1270 = vsel %vm841, %v1239, 0
        %v1272 = vsel %vm841, %v1241, 0
        %v1274 = vsel %vm841, %v1243, 0
        %v1276 = vsel %vm841, %v1245, 0
        %1278 = vmatpush.xpose.msra.mxu0 0.0
        %1279 = vmatpush.xpose.msra.mxu0 0.0
        %1280 = vmatpush.xpose.msra.mxu0 0.0
        %1281 = vmatpush.xpose.msra.mxu0 0.0
        %1282 = vmatpush.xpose.msra.mxu0 0.0
        %1283 = vmatpush.xpose.msra.mxu0 0.0
        %1284 = vmatpush.xpose.msra.mxu0 0.0
        %1285 = vmatpush.xpose.msra.mxu0 0.0
        %1286 = vmatpush.xpose.msra.mxu0 %v1276
        %1287 = vmatpush.xpose.msra.mxu0 %v1274
        %1288 = vmatpush.xpose.msra.mxu0 %v1272
        %1289 = vmatpush.xpose.msra.mxu0 %v1270
        %1290 = vmatpush.xpose.msra.mxu0 %v1268
        %1291 = vmatpush.xpose.msra.mxu0 %v1266
        %1292 = vmatpush.xpose.msra.mxu0 %v1264
        %1293 = vmatpush.xpose.msra.mxu0 %v1262
        %1294 = vmatmul.f32.gmra.mxu0 %v1246
        %v1295 = vpop.f32.mrf.mxu0
        %v1296 = vadd.f32 %v1206, %v1295
        %1297 = vmatmul.f32.gmra.mxu0 %v1248
        %v1298 = vpop.f32.mrf.mxu0
        %v1299 = vadd.f32 %v1207, %v1298
        %1300 = vmatmul.f32.gmra.mxu0 %v1250
        %v1301 = vpop.f32.mrf.mxu0
        %v1302 = vadd.f32 %v1208, %v1301
        %1303 = vmatmul.f32.gmra.mxu0 %v1252
        %v1304 = vpop.f32.mrf.mxu0
        %v1305 = vadd.f32 %v1209, %v1304
        %1306 = vmatmul.f32.gmra.mxu0 %v1254
        %v1307 = vpop.f32.mrf.mxu0
        %v1308 = vadd.f32 %v1210, %v1307
        %1309 = vmatmul.f32.gmra.mxu0 %v1256
        %v1310 = vpop.f32.mrf.mxu0
        %v1311 = vadd.f32 %v1211, %v1310
        %1312 = vmatmul.f32.gmra.mxu0 %v1258
        %v1313 = vpop.f32.mrf.mxu0
        %v1314 = vadd.f32 %v1212, %v1313
        %1315 = vmatmul.f32.gmra.mxu0 %v1260
        %v1316 = vpop.f32.mrf.mxu0
        %v1317 = vadd.f32 %v1213, %v1316
        %1318 = vdwg.mxu0
        %v1319 = vsel %vm923, %v1296, -inf
        %1320 = vmax.xlane.f32.xlu0 %v1319
        %v1321 = vpop.xlane.xlu0 %1320
        %v1322 = vsel %vm923, %v1299, -inf
        %1323 = vmax.xlane.f32.xlu0 %v1322
        %v1324 = vpop.xlane.xlu0 %1323
        %v1325 = vsel %vm923, %v1302, -inf
        %1326 = vmax.xlane.f32.xlu0 %v1325
        %v1327 = vpop.xlane.xlu0 %1326
        %v1328 = vsel %vm923, %v1305, -inf
        %1329 = vmax.xlane.f32.xlu0 %v1328
        %v1330 = vpop.xlane.xlu0 %1329
        %v1331 = vsel %vm923, %v1308, -inf
        %1332 = vmax.xlane.f32.xlu0 %v1331
        %v1333 = vpop.xlane.xlu0 %1332
        %v1334 = vsel %vm923, %v1311, -inf
        %1335 = vmax.xlane.f32.xlu0 %v1334
        %v1336 = vpop.xlane.xlu0 %1335
        %v1337 = vsel %vm923, %v1314, -inf
        %1338 = vmax.xlane.f32.xlu0 %v1337
        %v1339 = vpop.xlane.xlu0 %1338
        %v1340 = vsel %vm923, %v1317, -inf
        %1341 = vmax.xlane.f32.xlu0 %v1340
        %v1342 = vpop.xlane.xlu0 %1341
        %v1343 = vsub.f32 %v1296, %v1321
        %v1344 = vsub.f32 %v1299, %v1324
        %v1345 = vsub.f32 %v1302, %v1327
        %v1346 = vsub.f32 %v1305, %v1330
        %v1347 = vsub.f32 %v1308, %v1333
        %v1348 = vsub.f32 %v1311, %v1336
        %v1349 = vsub.f32 %v1314, %v1339
        %v1350 = vsub.f32 %v1317, %v1342
        %v1351 = vmul.f32 %v1343, 1.442695
        %v1352 = vpow.pop %v1351
        %v1353 = vmul.f32 %v1344, 1.442695
        %v1354 = vpow.pop %v1353
        %v1355 = vmul.f32 %v1345, 1.442695
        %v1356 = vpow.pop %v1355
        %v1357 = vmul.f32 %v1346, 1.442695
        %v1358 = vpow.pop %v1357
        %v1359 = vmul.f32 %v1347, 1.442695
        %v1360 = vpow.pop %v1359
        %v1361 = vmul.f32 %v1348, 1.442695
        %v1362 = vpow.pop %v1361
        %v1363 = vmul.f32 %v1349, 1.442695
        %v1364 = vpow.pop %v1363
        %v1365 = vmul.f32 %v1350, 1.442695
        %v1366 = vpow.pop %v1365
        %v1367 = vsel %vm923, %v1352, 0.0
        %1368 = vadd.xlane.f32.xlu0 %v1367
        %v1369 = vpop.xlane.xlu0 %1368
        %v1370 = vsel %vm923, %v1354, 0.0
        %1371 = vadd.xlane.f32.xlu0 %v1370
        %v1372 = vpop.xlane.xlu0 %1371
        %v1373 = vsel %vm923, %v1356, 0.0
        %1374 = vadd.xlane.f32.xlu0 %v1373
        %v1375 = vpop.xlane.xlu0 %1374
        %v1376 = vsel %vm923, %v1358, 0.0
        %1377 = vadd.xlane.f32.xlu0 %v1376
        %v1378 = vpop.xlane.xlu0 %1377
        %v1379 = vsel %vm923, %v1360, 0.0
        %1380 = vadd.xlane.f32.xlu0 %v1379
        %v1381 = vpop.xlane.xlu0 %1380
        %v1382 = vsel %vm923, %v1362, 0.0
        %1383 = vadd.xlane.f32.xlu0 %v1382
        %v1384 = vpop.xlane.xlu0 %1383
        %v1385 = vsel %vm923, %v1364, 0.0
        %1386 = vadd.xlane.f32.xlu0 %v1385
        %v1387 = vpop.xlane.xlu0 %1386
        %v1388 = vsel %vm923, %v1366, 0.0
        %1389 = vadd.xlane.f32.xlu0 %v1388
        %v1390 = vpop.xlane.xlu0 %1389
        %v1391 = vrcp.pop %v1369
        %v1392 = vmul.f32 %v1369, %v1391
        %v1393 = vsub.f32 1.0, %v1392
        %v1394 = vmul.f32 %v1391, %v1393
        %v1395 = vadd.f32 %v1391, %v1394
        %vm1396 = vweird.f32 %v1369
        %vm1397 = vweird.f32 %v1391
        %vm1398 = vmor %vm1396, %vm1397
        %v1399 = vsel %vm1398, %v1391, %v1395
        %v1400 = vand.u32 2147483647, %v1369
        %vm1401 = vcmp.eq.f32.partialorder %v1400, 8.507059e+37
        %v1402 = vand.u32 %v1369, 2147483648
        %v1403 = vor.u32 1.1754944e-38, %v1402
        %v1404 = vsel %vm1401, %v1403, %v1399
        %v1405 = vrcp.pop %v1372
        %v1406 = vmul.f32 %v1372, %v1405
        %v1407 = vsub.f32 1.0, %v1406
        %v1408 = vmul.f32 %v1405, %v1407
        %v1409 = vadd.f32 %v1405, %v1408
        %vm1410 = vweird.f32 %v1372
        %vm1411 = vweird.f32 %v1405
        %vm1412 = vmor %vm1410, %vm1411
        %v1413 = vsel %vm1412, %v1405, %v1409
        %v1414 = vand.u32 2147483647, %v1372
        %vm1415 = vcmp.eq.f32.partialorder %v1414, 8.507059e+37
        %v1416 = vand.u32 %v1372, 2147483648
        %v1417 = vor.u32 1.1754944e-38, %v1416
        %v1418 = vsel %vm1415, %v1417, %v1413
        %v1419 = vrcp.pop %v1375
        %v1420 = vmul.f32 %v1375, %v1419
        %v1421 = vsub.f32 1.0, %v1420
        %v1422 = vmul.f32 %v1419, %v1421
        %v1423 = vadd.f32 %v1419, %v1422
        %vm1424 = vweird.f32 %v1375
        %vm1425 = vweird.f32 %v1419
        %vm1426 = vmor %vm1424, %vm1425
        %v1427 = vsel %vm1426, %v1419, %v1423
        %v1428 = vand.u32 2147483647, %v1375
        %vm1429 = vcmp.eq.f32.partialorder %v1428, 8.507059e+37
        %v1430 = vand.u32 %v1375, 2147483648
        %v1431 = vor.u32 1.1754944e-38, %v1430
        %v1432 = vsel %vm1429, %v1431, %v1427
        %v1433 = vrcp.pop %v1378
        %v1434 = vmul.f32 %v1378, %v1433
        %v1435 = vsub.f32 1.0, %v1434
        %v1436 = vmul.f32 %v1433, %v1435
        %v1437 = vadd.f32 %v1433, %v1436
        %vm1438 = vweird.f32 %v1378
        %vm1439 = vweird.f32 %v1433
        %vm1440 = vmor %vm1438, %vm1439
        %v1441 = vsel %vm1440, %v1433, %v1437
        %v1442 = vand.u32 2147483647, %v1378
        %vm1443 = vcmp.eq.f32.partialorder %v1442, 8.507059e+37
        %v1444 = vand.u32 %v1378, 2147483648
        %v1445 = vor.u32 1.1754944e-38, %v1444
        %v1446 = vsel %vm1443, %v1445, %v1441
        %v1447 = vrcp.pop %v1381
        %v1448 = vmul.f32 %v1381, %v1447
        %v1449 = vsub.f32 1.0, %v1448
        %v1450 = vmul.f32 %v1447, %v1449
        %v1451 = vadd.f32 %v1447, %v1450
        %vm1452 = vweird.f32 %v1381
        %vm1453 = vweird.f32 %v1447
        %vm1454 = vmor %vm1452, %vm1453
        %v1455 = vsel %vm1454, %v1447, %v1451
        %v1456 = vand.u32 2147483647, %v1381
        %vm1457 = vcmp.eq.f32.partialorder %v1456, 8.507059e+37
        %v1458 = vand.u32 %v1381, 2147483648
        %v1459 = vor.u32 1.1754944e-38, %v1458
        %v1460 = vsel %vm1457, %v1459, %v1455
        %v1461 = vrcp.pop %v1384
        %v1462 = vmul.f32 %v1384, %v1461
        %v1463 = vsub.f32 1.0, %v1462
        %v1464 = vmul.f32 %v1461, %v1463
        %v1465 = vadd.f32 %v1461, %v1464
        %vm1466 = vweird.f32 %v1384
        %vm1467 = vweird.f32 %v1461
        %vm1468 = vmor %vm1466, %vm1467
        %v1469 = vsel %vm1468, %v1461, %v1465
        %v1470 = vand.u32 2147483647, %v1384
        %vm1471 = vcmp.eq.f32.partialorder %v1470, 8.507059e+37
        %v1472 = vand.u32 %v1384, 2147483648
        %v1473 = vor.u32 1.1754944e-38, %v1472
        %v1474 = vsel %vm1471, %v1473, %v1469
        %v1475 = vrcp.pop %v1387
        %v1476 = vmul.f32 %v1387, %v1475
        %v1477 = vsub.f32 1.0, %v1476
        %v1478 = vmul.f32 %v1475, %v1477
        %v1479 = vadd.f32 %v1475, %v1478
        %vm1480 = vweird.f32 %v1387
        %vm1481 = vweird.f32 %v1475
        %vm1482 = vmor %vm1480, %vm1481
        %v1483 = vsel %vm1482, %v1475, %v1479
        %v1484 = vand.u32 2147483647, %v1387
        %vm1485 = vcmp.eq.f32.partialorder %v1484, 8.507059e+37
        %v1486 = vand.u32 %v1387, 2147483648
        %v1487 = vor.u32 1.1754944e-38, %v1486
        %v1488 = vsel %vm1485, %v1487, %v1483
        %v1489 = vrcp.pop %v1390
        %v1490 = vmul.f32 %v1390, %v1489
        %v1491 = vsub.f32 1.0, %v1490
        %v1492 = vmul.f32 %v1489, %v1491
        %v1493 = vadd.f32 %v1489, %v1492
        %vm1494 = vweird.f32 %v1390
        %vm1495 = vweird.f32 %v1489
        %vm1496 = vmor %vm1494, %vm1495
        %v1497 = vsel %vm1496, %v1489, %v1493
        %v1498 = vand.u32 2147483647, %v1390
        %vm1499 = vcmp.eq.f32.partialorder %v1498, 8.507059e+37
        %v1500 = vand.u32 %v1390, 2147483648
        %v1501 = vor.u32 1.1754944e-38, %v1500
        %v1502 = vsel %vm1499, %v1501, %v1497
        %v1503 = vmul.f32 %v1352, %v1404
        %v1504 = vmul.f32 %v1354, %v1418
        %v1505 = vmul.f32 %v1356, %v1432
        %v1506 = vmul.f32 %v1358, %v1446
        %v1507 = vmul.f32 %v1360, %v1460
        %v1508 = vmul.f32 %v1362, %v1474
        %v1509 = vmul.f32 %v1364, %v1488
        %v1510 = vmul.f32 %v1366, %v1502
        %1511 = vrot.lane.b32.xlu0 %v778, 56
        %v1512 = vpop.permute.xlu0 %1511
        %1513 = vrot.lane.b32.xlu0 %v781, 56
        %v1514 = vpop.permute.xlu0 %1513
        %1515 = vrot.lane.b32.xlu0 %v784, 56
        %v1516 = vpop.permute.xlu0 %1515
        %1517 = vrot.lane.b32.xlu0 %v787, 56
        %v1518 = vpop.permute.xlu0 %1517
        %1519 = vrot.lane.b32.xlu0 %v790, 56
        %v1520 = vpop.permute.xlu0 %1519
        %1521 = vrot.lane.b32.xlu0 %v793, 56
        %v1522 = vpop.permute.xlu0 %1521
        %1523 = vrot.lane.b32.xlu0 %v796, 56
        %v1524 = vpop.permute.xlu0 %1523
        %1525 = vrot.lane.b32.xlu0 %v799, 56
        %v1526 = vpop.permute.xlu0 %1525
        %v1536 = vsel %vm923, %v1503, 0
        %v1539 = vsel %vm923, %v1504, 0
        %v1542 = vsel %vm923, %v1505, 0
        %v1545 = vsel %vm923, %v1506, 0
        %v1548 = vsel %vm923, %v1507, 0
        %v1551 = vsel %vm923, %v1508, 0
        %v1554 = vsel %vm923, %v1509, 0
        %v1557 = vsel %vm923, %v1510, 0
        %1559 = vmatpush.msra.mxu0 0.0
        %1560 = vmatpush.msra.mxu0 0.0
        %1561 = vmatpush.msra.mxu0 0.0
        %1562 = vmatpush.msra.mxu0 0.0
        %1563 = vmatpush.msra.mxu0 0.0
        %1564 = vmatpush.msra.mxu0 0.0
        %1565 = vmatpush.msra.mxu0 0.0
        %1566 = vmatpush.msra.mxu0 0.0
        %1567 = vmatpush.msra.mxu0 %v1526
        %1568 = vmatpush.msra.mxu0 %v1524
        %1569 = vmatpush.msra.mxu0 %v1522
        %1570 = vmatpush.msra.mxu0 %v1520
        %1571 = vmatpush.msra.mxu0 %v1518
        %1572 = vmatpush.msra.mxu0 %v1516
        %1573 = vmatpush.msra.mxu0 %v1514
        %1574 = vmatpush.msra.mxu0 %v1512
        %1575 = vmatmul.f32.gmra.mxu0 %v1536
        %v1576 = vpop.f32.mrf.mxu0
        %v1577 = vadd.f32 0.0, %v1576
        %1578 = vmatmul.f32.gmra.mxu0 %v1539
        %v1579 = vpop.f32.mrf.mxu0
        %v1580 = vadd.f32 0.0, %v1579
        %1581 = vmatmul.f32.gmra.mxu0 %v1542
        %v1582 = vpop.f32.mrf.mxu0
        %v1583 = vadd.f32 0.0, %v1582
        %1584 = vmatmul.f32.gmra.mxu0 %v1545
        %v1585 = vpop.f32.mrf.mxu0
        %v1586 = vadd.f32 0.0, %v1585
        %1587 = vmatmul.f32.gmra.mxu0 %v1548
        %v1588 = vpop.f32.mrf.mxu0
        %v1589 = vadd.f32 0.0, %v1588
        %1590 = vmatmul.f32.gmra.mxu0 %v1551
        %v1591 = vpop.f32.mrf.mxu0
        %v1592 = vadd.f32 0.0, %v1591
        %1593 = vmatmul.f32.gmra.mxu0 %v1554
        %v1594 = vpop.f32.mrf.mxu0
        %v1595 = vadd.f32 0.0, %v1594
        %1596 = vmatmul.f32.gmra.mxu0 %v1557
        %v1597 = vpop.f32.mrf.mxu0
        %v1598 = vadd.f32 0.0, %v1597
        %1599 = vdwg.mxu0
        %s1600 = scalar_lea.vmem %s1, 128
        %v1601 = vld [vmem:[%s1600] sm:$0xff]
        %v1602 = vld [vmem:[%s1600 + $0x8] sm:$0xff]
        %v1603 = vld [vmem:[%s1600 + $0x10] sm:$0xff]
        %v1604 = vld [vmem:[%s1600 + $0x18] sm:$0xff]
        %v1605 = vld [vmem:[%s1600 + $0x20] sm:$0xff]
        %v1606 = vld [vmem:[%s1600 + $0x28] sm:$0xff]
        %v1607 = vld [vmem:[%s1600 + $0x30] sm:$0xff]
        %v1608 = vld [vmem:[%s1600 + $0x38] sm:$0xff]
        %1609 = vrot.lane.b32.xlu0 %v801, 112
        %v1610 = vpop.permute.xlu0 %1609
        %1611 = vrot.lane.b32.xlu0 %v802, 112
        %v1612 = vpop.permute.xlu0 %1611
        %1613 = vrot.lane.b32.xlu0 %v803, 112
        %v1614 = vpop.permute.xlu0 %1613
        %1615 = vrot.lane.b32.xlu0 %v804, 112
        %v1616 = vpop.permute.xlu0 %1615
        %1617 = vrot.lane.b32.xlu0 %v805, 112
        %v1618 = vpop.permute.xlu0 %1617
        %1619 = vrot.lane.b32.xlu0 %v806, 112
        %v1620 = vpop.permute.xlu0 %1619
        %1621 = vrot.lane.b32.xlu0 %v807, 112
        %v1622 = vpop.permute.xlu0 %1621
        %1623 = vrot.lane.b32.xlu0 %v808, 112
        %v1624 = vpop.permute.xlu0 %1623
        %1625 = vrot.lane.b32.xlu0 %v778, 80
        %v1626 = vpop.permute.xlu0 %1625
        %1627 = vrot.lane.b32.xlu0 %v781, 80
        %v1628 = vpop.permute.xlu0 %1627
        %1629 = vrot.lane.b32.xlu0 %v784, 80
        %v1630 = vpop.permute.xlu0 %1629
        %1631 = vrot.lane.b32.xlu0 %v787, 80
        %v1632 = vpop.permute.xlu0 %1631
        %1633 = vrot.lane.b32.xlu0 %v790, 80
        %v1634 = vpop.permute.xlu0 %1633
        %1635 = vrot.lane.b32.xlu0 %v793, 80
        %v1636 = vpop.permute.xlu0 %1635
        %1637 = vrot.lane.b32.xlu0 %v796, 80
        %v1638 = vpop.permute.xlu0 %1637
        %1639 = vrot.lane.b32.xlu0 %v799, 80
        %v1640 = vpop.permute.xlu0 %1639
        %v1641 = vsel %vm841, %v1610, 0
        %v1643 = vsel %vm841, %v1612, 0
        %v1645 = vsel %vm841, %v1614, 0
        %v1647 = vsel %vm841, %v1616, 0
        %v1649 = vsel %vm841, %v1618, 0
        %v1651 = vsel %vm841, %v1620, 0
        %v1653 = vsel %vm841, %v1622, 0
        %v1655 = vsel %vm841, %v1624, 0
        %v1657 = vsel %vm841, %v1626, 0
        %v1659 = vsel %vm841, %v1628, 0
        %v1661 = vsel %vm841, %v1630, 0
        %v1663 = vsel %vm841, %v1632, 0
        %v1665 = vsel %vm841, %v1634, 0
        %v1667 = vsel %vm841, %v1636, 0
        %v1669 = vsel %vm841, %v1638, 0
        %v1671 = vsel %vm841, %v1640, 0
        %1673 = vmatpush.xpose.msra.mxu0 0.0
        %1674 = vmatpush.xpose.msra.mxu0 0.0
        %1675 = vmatpush.xpose.msra.mxu0 0.0
        %1676 = vmatpush.xpose.msra.mxu0 0.0
        %1677 = vmatpush.xpose.msra.mxu0 0.0
        %1678 = vmatpush.xpose.msra.mxu0 0.0
        %1679 = vmatpush.xpose.msra.mxu0 0.0
        %1680 = vmatpush.xpose.msra.mxu0 0.0
        %1681 = vmatpush.xpose.msra.mxu0 %v1671
        %1682 = vmatpush.xpose.msra.mxu0 %v1669
        %1683 = vmatpush.xpose.msra.mxu0 %v1667
        %1684 = vmatpush.xpose.msra.mxu0 %v1665
        %1685 = vmatpush.xpose.msra.mxu0 %v1663
        %1686 = vmatpush.xpose.msra.mxu0 %v1661
        %1687 = vmatpush.xpose.msra.mxu0 %v1659
        %1688 = vmatpush.xpose.msra.mxu0 %v1657
        %1689 = vmatmul.f32.gmra.mxu0 %v1641
        %v1690 = vpop.f32.mrf.mxu0
        %v1691 = vadd.f32 %v1601, %v1690
        %1692 = vmatmul.f32.gmra.mxu0 %v1643
        %v1693 = vpop.f32.mrf.mxu0
        %v1694 = vadd.f32 %v1602, %v1693
        %1695 = vmatmul.f32.gmra.mxu0 %v1645
        %v1696 = vpop.f32.mrf.mxu0
        %v1697 = vadd.f32 %v1603, %v1696
        %1698 = vmatmul.f32.gmra.mxu0 %v1647
        %v1699 = vpop.f32.mrf.mxu0
        %v1700 = vadd.f32 %v1604, %v1699
        %1701 = vmatmul.f32.gmra.mxu0 %v1649
        %v1702 = vpop.f32.mrf.mxu0
        %v1703 = vadd.f32 %v1605, %v1702
        %1704 = vmatmul.f32.gmra.mxu0 %v1651
        %v1705 = vpop.f32.mrf.mxu0
        %v1706 = vadd.f32 %v1606, %v1705
        %1707 = vmatmul.f32.gmra.mxu0 %v1653
        %v1708 = vpop.f32.mrf.mxu0
        %v1709 = vadd.f32 %v1607, %v1708
        %1710 = vmatmul.f32.gmra.mxu0 %v1655
        %v1711 = vpop.f32.mrf.mxu0
        %v1712 = vadd.f32 %v1608, %v1711
        %1713 = vdwg.mxu0
        %v1714 = vsel %vm923, %v1691, -inf
        %1715 = vmax.xlane.f32.xlu0 %v1714
        %v1716 = vpop.xlane.xlu0 %1715
        %v1717 = vsel %vm923, %v1694, -inf
        %1718 = vmax.xlane.f32.xlu0 %v1717
        %v1719 = vpop.xlane.xlu0 %1718
        %v1720 = vsel %vm923, %v1697, -inf
        %1721 = vmax.xlane.f32.xlu0 %v1720
        %v1722 = vpop.xlane.xlu0 %1721
        %v1723 = vsel %vm923, %v1700, -inf
        %1724 = vmax.xlane.f32.xlu0 %v1723
        %v1725 = vpop.xlane.xlu0 %1724
        %v1726 = vsel %vm923, %v1703, -inf
        %1727 = vmax.xlane.f32.xlu0 %v1726
        %v1728 = vpop.xlane.xlu0 %1727
        %v1729 = vsel %vm923, %v1706, -inf
        %1730 = vmax.xlane.f32.xlu0 %v1729
        %v1731 = vpop.xlane.xlu0 %1730
        %v1732 = vsel %vm923, %v1709, -inf
        %1733 = vmax.xlane.f32.xlu0 %v1732
        %v1734 = vpop.xlane.xlu0 %1733
        %v1735 = vsel %vm923, %v1712, -inf
        %1736 = vmax.xlane.f32.xlu0 %v1735
        %v1737 = vpop.xlane.xlu0 %1736
        %v1738 = vsub.f32 %v1691, %v1716
        %v1739 = vsub.f32 %v1694, %v1719
        %v1740 = vsub.f32 %v1697, %v1722
        %v1741 = vsub.f32 %v1700, %v1725
        %v1742 = vsub.f32 %v1703, %v1728
        %v1743 = vsub.f32 %v1706, %v1731
        %v1744 = vsub.f32 %v1709, %v1734
        %v1745 = vsub.f32 %v1712, %v1737
        %v1746 = vmul.f32 %v1738, 1.442695
        %v1747 = vpow.pop %v1746
        %v1748 = vmul.f32 %v1739, 1.442695
        %v1749 = vpow.pop %v1748
        %v1750 = vmul.f32 %v1740, 1.442695
        %v1751 = vpow.pop %v1750
        %v1752 = vmul.f32 %v1741, 1.442695
        %v1753 = vpow.pop %v1752
        %v1754 = vmul.f32 %v1742, 1.442695
        %v1755 = vpow.pop %v1754
        %v1756 = vmul.f32 %v1743, 1.442695
        %v1757 = vpow.pop %v1756
        %v1758 = vmul.f32 %v1744, 1.442695
        %v1759 = vpow.pop %v1758
        %v1760 = vmul.f32 %v1745, 1.442695
        %v1761 = vpow.pop %v1760
        %v1762 = vsel %vm923, %v1747, 0.0
        %1763 = vadd.xlane.f32.xlu0 %v1762
        %v1764 = vpop.xlane.xlu0 %1763
        %v1765 = vsel %vm923, %v1749, 0.0
        %1766 = vadd.xlane.f32.xlu0 %v1765
        %v1767 = vpop.xlane.xlu0 %1766
        %v1768 = vsel %vm923, %v1751, 0.0
        %1769 = vadd.xlane.f32.xlu0 %v1768
        %v1770 = vpop.xlane.xlu0 %1769
        %v1771 = vsel %vm923, %v1753, 0.0
        %1772 = vadd.xlane.f32.xlu0 %v1771
        %v1773 = vpop.xlane.xlu0 %1772
        %v1774 = vsel %vm923, %v1755, 0.0
        %1775 = vadd.xlane.f32.xlu0 %v1774
        %v1776 = vpop.xlane.xlu0 %1775
        %v1777 = vsel %vm923, %v1757, 0.0
        %1778 = vadd.xlane.f32.xlu0 %v1777
        %v1779 = vpop.xlane.xlu0 %1778
        %v1780 = vsel %vm923, %v1759, 0.0
        %1781 = vadd.xlane.f32.xlu0 %v1780
        %v1782 = vpop.xlane.xlu0 %1781
        %v1783 = vsel %vm923, %v1761, 0.0
        %1784 = vadd.xlane.f32.xlu0 %v1783
        %v1785 = vpop.xlane.xlu0 %1784
        %v1786 = vrcp.pop %v1764
        %v1787 = vmul.f32 %v1764, %v1786
        %v1788 = vsub.f32 1.0, %v1787
        %v1789 = vmul.f32 %v1786, %v1788
        %v1790 = vadd.f32 %v1786, %v1789
        %vm1791 = vweird.f32 %v1764
        %vm1792 = vweird.f32 %v1786
        %vm1793 = vmor %vm1791, %vm1792
        %v1794 = vsel %vm1793, %v1786, %v1790
        %v1795 = vand.u32 2147483647, %v1764
        %vm1796 = vcmp.eq.f32.partialorder %v1795, 8.507059e+37
        %v1797 = vand.u32 %v1764, 2147483648
        %v1798 = vor.u32 1.1754944e-38, %v1797
        %v1799 = vsel %vm1796, %v1798, %v1794
        %v1800 = vrcp.pop %v1767
        %v1801 = vmul.f32 %v1767, %v1800
        %v1802 = vsub.f32 1.0, %v1801
        %v1803 = vmul.f32 %v1800, %v1802
        %v1804 = vadd.f32 %v1800, %v1803
        %vm1805 = vweird.f32 %v1767
        %vm1806 = vweird.f32 %v1800
        %vm1807 = vmor %vm1805, %vm1806
        %v1808 = vsel %vm1807, %v1800, %v1804
        %v1809 = vand.u32 2147483647, %v1767
        %vm1810 = vcmp.eq.f32.partialorder %v1809, 8.507059e+37
        %v1811 = vand.u32 %v1767, 2147483648
        %v1812 = vor.u32 1.1754944e-38, %v1811
        %v1813 = vsel %vm1810, %v1812, %v1808
        %v1814 = vrcp.pop %v1770
        %v1815 = vmul.f32 %v1770, %v1814
        %v1816 = vsub.f32 1.0, %v1815
        %v1817 = vmul.f32 %v1814, %v1816
        %v1818 = vadd.f32 %v1814, %v1817
        %vm1819 = vweird.f32 %v1770
        %vm1820 = vweird.f32 %v1814
        %vm1821 = vmor %vm1819, %vm1820
        %v1822 = vsel %vm1821, %v1814, %v1818
        %v1823 = vand.u32 2147483647, %v1770
        %vm1824 = vcmp.eq.f32.partialorder %v1823, 8.507059e+37
        %v1825 = vand.u32 %v1770, 2147483648
        %v1826 = vor.u32 1.1754944e-38, %v1825
        %v1827 = vsel %vm1824, %v1826, %v1822
        %v1828 = vrcp.pop %v1773
        %v1829 = vmul.f32 %v1773, %v1828
        %v1830 = vsub.f32 1.0, %v1829
        %v1831 = vmul.f32 %v1828, %v1830
        %v1832 = vadd.f32 %v1828, %v1831
        %vm1833 = vweird.f32 %v1773
        %vm1834 = vweird.f32 %v1828
        %vm1835 = vmor %vm1833, %vm1834
        %v1836 = vsel %vm1835, %v1828, %v1832
        %v1837 = vand.u32 2147483647, %v1773
        %vm1838 = vcmp.eq.f32.partialorder %v1837, 8.507059e+37
        %v1839 = vand.u32 %v1773, 2147483648
        %v1840 = vor.u32 1.1754944e-38, %v1839
        %v1841 = vsel %vm1838, %v1840, %v1836
        %v1842 = vrcp.pop %v1776
        %v1843 = vmul.f32 %v1776, %v1842
        %v1844 = vsub.f32 1.0, %v1843
        %v1845 = vmul.f32 %v1842, %v1844
        %v1846 = vadd.f32 %v1842, %v1845
        %vm1847 = vweird.f32 %v1776
        %vm1848 = vweird.f32 %v1842
        %vm1849 = vmor %vm1847, %vm1848
        %v1850 = vsel %vm1849, %v1842, %v1846
        %v1851 = vand.u32 2147483647, %v1776
        %vm1852 = vcmp.eq.f32.partialorder %v1851, 8.507059e+37
        %v1853 = vand.u32 %v1776, 2147483648
        %v1854 = vor.u32 1.1754944e-38, %v1853
        %v1855 = vsel %vm1852, %v1854, %v1850
        %v1856 = vrcp.pop %v1779
        %v1857 = vmul.f32 %v1779, %v1856
        %v1858 = vsub.f32 1.0, %v1857
        %v1859 = vmul.f32 %v1856, %v1858
        %v1860 = vadd.f32 %v1856, %v1859
        %vm1861 = vweird.f32 %v1779
        %vm1862 = vweird.f32 %v1856
        %vm1863 = vmor %vm1861, %vm1862
        %v1864 = vsel %vm1863, %v1856, %v1860
        %v1865 = vand.u32 2147483647, %v1779
        %vm1866 = vcmp.eq.f32.partialorder %v1865, 8.507059e+37
        %v1867 = vand.u32 %v1779, 2147483648
        %v1868 = vor.u32 1.1754944e-38, %v1867
        %v1869 = vsel %vm1866, %v1868, %v1864
        %v1870 = vrcp.pop %v1782
        %v1871 = vmul.f32 %v1782, %v1870
        %v1872 = vsub.f32 1.0, %v1871
        %v1873 = vmul.f32 %v1870, %v1872
        %v1874 = vadd.f32 %v1870, %v1873
        %vm1875 = vweird.f32 %v1782
        %vm1876 = vweird.f32 %v1870
        %vm1877 = vmor %vm1875, %vm1876
        %v1878 = vsel %vm1877, %v1870, %v1874
        %v1879 = vand.u32 2147483647, %v1782
        %vm1880 = vcmp.eq.f32.partialorder %v1879, 8.507059e+37
        %v1881 = vand.u32 %v1782, 2147483648
        %v1882 = vor.u32 1.1754944e-38, %v1881
        %v1883 = vsel %vm1880, %v1882, %v1878
        %v1884 = vrcp.pop %v1785
        %v1885 = vmul.f32 %v1785, %v1884
        %v1886 = vsub.f32 1.0, %v1885
        %v1887 = vmul.f32 %v1884, %v1886
        %v1888 = vadd.f32 %v1884, %v1887
        %vm1889 = vweird.f32 %v1785
        %vm1890 = vweird.f32 %v1884
        %vm1891 = vmor %vm1889, %vm1890
        %v1892 = vsel %vm1891, %v1884, %v1888
        %v1893 = vand.u32 2147483647, %v1785
        %vm1894 = vcmp.eq.f32.partialorder %v1893, 8.507059e+37
        %v1895 = vand.u32 %v1785, 2147483648
        %v1896 = vor.u32 1.1754944e-38, %v1895
        %v1897 = vsel %vm1894, %v1896, %v1892
        %v1898 = vmul.f32 %v1747, %v1799
        %v1899 = vmul.f32 %v1749, %v1813
        %v1900 = vmul.f32 %v1751, %v1827
        %v1901 = vmul.f32 %v1753, %v1841
        %v1902 = vmul.f32 %v1755, %v1855
        %v1903 = vmul.f32 %v1757, %v1869
        %v1904 = vmul.f32 %v1759, %v1883
        %v1905 = vmul.f32 %v1761, %v1897
        %1906 = vrot.lane.b32.xlu0 %v778, 48
        %v1907 = vpop.permute.xlu0 %1906
        %1908 = vrot.lane.b32.xlu0 %v781, 48
        %v1909 = vpop.permute.xlu0 %1908
        %1910 = vrot.lane.b32.xlu0 %v784, 48
        %v1911 = vpop.permute.xlu0 %1910
        %1912 = vrot.lane.b32.xlu0 %v787, 48
        %v1913 = vpop.permute.xlu0 %1912
        %1914 = vrot.lane.b32.xlu0 %v790, 48
        %v1915 = vpop.permute.xlu0 %1914
        %1916 = vrot.lane.b32.xlu0 %v793, 48
        %v1917 = vpop.permute.xlu0 %1916
        %1918 = vrot.lane.b32.xlu0 %v796, 48
        %v1919 = vpop.permute.xlu0 %1918
        %1920 = vrot.lane.b32.xlu0 %v799, 48
        %v1921 = vpop.permute.xlu0 %1920
        %v1931 = vsel %vm923, %v1898, 0
        %v1934 = vsel %vm923, %v1899, 0
        %v1937 = vsel %vm923, %v1900, 0
        %v1940 = vsel %vm923, %v1901, 0
        %v1943 = vsel %vm923, %v1902, 0
        %v1946 = vsel %vm923, %v1903, 0
        %v1949 = vsel %vm923, %v1904, 0
        %v1952 = vsel %vm923, %v1905, 0
        %1954 = vmatpush.msra.mxu0 0.0
        %1955 = vmatpush.msra.mxu0 0.0
        %1956 = vmatpush.msra.mxu0 0.0
        %1957 = vmatpush.msra.mxu0 0.0
        %1958 = vmatpush.msra.mxu0 0.0
        %1959 = vmatpush.msra.mxu0 0.0
        %1960 = vmatpush.msra.mxu0 0.0
        %1961 = vmatpush.msra.mxu0 0.0
        %1962 = vmatpush.msra.mxu0 %v1921
        %1963 = vmatpush.msra.mxu0 %v1919
        %1964 = vmatpush.msra.mxu0 %v1917
        %1965 = vmatpush.msra.mxu0 %v1915
        %1966 = vmatpush.msra.mxu0 %v1913
        %1967 = vmatpush.msra.mxu0 %v1911
        %1968 = vmatpush.msra.mxu0 %v1909
        %1969 = vmatpush.msra.mxu0 %v1907
        %1970 = vmatmul.f32.gmra.mxu0 %v1931
        %v1971 = vpop.f32.mrf.mxu0
        %v1972 = vadd.f32 0.0, %v1971
        %1973 = vmatmul.f32.gmra.mxu0 %v1934
        %v1974 = vpop.f32.mrf.mxu0
        %v1975 = vadd.f32 0.0, %v1974
        %1976 = vmatmul.f32.gmra.mxu0 %v1937
        %v1977 = vpop.f32.mrf.mxu0
        %v1978 = vadd.f32 0.0, %v1977
        %1979 = vmatmul.f32.gmra.mxu0 %v1940
        %v1980 = vpop.f32.mrf.mxu0
        %v1981 = vadd.f32 0.0, %v1980
        %1982 = vmatmul.f32.gmra.mxu0 %v1943
        %v1983 = vpop.f32.mrf.mxu0
        %v1984 = vadd.f32 0.0, %v1983
        %1985 = vmatmul.f32.gmra.mxu0 %v1946
        %v1986 = vpop.f32.mrf.mxu0
        %v1987 = vadd.f32 0.0, %v1986
        %1988 = vmatmul.f32.gmra.mxu0 %v1949
        %v1989 = vpop.f32.mrf.mxu0
        %v1990 = vadd.f32 0.0, %v1989
        %1991 = vmatmul.f32.gmra.mxu0 %v1952
        %v1992 = vpop.f32.mrf.mxu0
        %v1993 = vadd.f32 0.0, %v1992
        %1994 = vdwg.mxu0
        %s1995 = scalar_lea.vmem %s1, 192
        %v1996 = vld [vmem:[%s1995] sm:$0xff]
        %v1997 = vld [vmem:[%s1995 + $0x8] sm:$0xff]
        %v1998 = vld [vmem:[%s1995 + $0x10] sm:$0xff]
        %v1999 = vld [vmem:[%s1995 + $0x18] sm:$0xff]
        %v2000 = vld [vmem:[%s1995 + $0x20] sm:$0xff]
        %v2001 = vld [vmem:[%s1995 + $0x28] sm:$0xff]
        %v2002 = vld [vmem:[%s1995 + $0x30] sm:$0xff]
        %v2003 = vld [vmem:[%s1995 + $0x38] sm:$0xff]
        %2004 = vrot.lane.b32.xlu0 %v801, 104
        %v2005 = vpop.permute.xlu0 %2004
        %2006 = vrot.lane.b32.xlu0 %v802, 104
        %v2007 = vpop.permute.xlu0 %2006
        %2008 = vrot.lane.b32.xlu0 %v803, 104
        %v2009 = vpop.permute.xlu0 %2008
        %2010 = vrot.lane.b32.xlu0 %v804, 104
        %v2011 = vpop.permute.xlu0 %2010
        %2012 = vrot.lane.b32.xlu0 %v805, 104
        %v2013 = vpop.permute.xlu0 %2012
        %2014 = vrot.lane.b32.xlu0 %v806, 104
        %v2015 = vpop.permute.xlu0 %2014
        %2016 = vrot.lane.b32.xlu0 %v807, 104
        %v2017 = vpop.permute.xlu0 %2016
        %2018 = vrot.lane.b32.xlu0 %v808, 104
        %v2019 = vpop.permute.xlu0 %2018
        %2020 = vrot.lane.b32.xlu0 %v778, 72
        %v2021 = vpop.permute.xlu0 %2020
        %2022 = vrot.lane.b32.xlu0 %v781, 72
        %v2023 = vpop.permute.xlu0 %2022
        %2024 = vrot.lane.b32.xlu0 %v784, 72
        %v2025 = vpop.permute.xlu0 %2024
        %2026 = vrot.lane.b32.xlu0 %v787, 72
        %v2027 = vpop.permute.xlu0 %2026
        %2028 = vrot.lane.b32.xlu0 %v790, 72
        %v2029 = vpop.permute.xlu0 %2028
        %2030 = vrot.lane.b32.xlu0 %v793, 72
        %v2031 = vpop.permute.xlu0 %2030
        %2032 = vrot.lane.b32.xlu0 %v796, 72
        %v2033 = vpop.permute.xlu0 %2032
        %2034 = vrot.lane.b32.xlu0 %v799, 72
        %v2035 = vpop.permute.xlu0 %2034
        %v2036 = vsel %vm841, %v2005, 0
        %v2038 = vsel %vm841, %v2007, 0
        %v2040 = vsel %vm841, %v2009, 0
        %v2042 = vsel %vm841, %v2011, 0
        %v2044 = vsel %vm841, %v2013, 0
        %v2046 = vsel %vm841, %v2015, 0
        %v2048 = vsel %vm841, %v2017, 0
        %v2050 = vsel %vm841, %v2019, 0
        %v2052 = vsel %vm841, %v2021, 0
        %v2054 = vsel %vm841, %v2023, 0
        %v2056 = vsel %vm841, %v2025, 0
        %v2058 = vsel %vm841, %v2027, 0
        %v2060 = vsel %vm841, %v2029, 0
        %v2062 = vsel %vm841, %v2031, 0
        %v2064 = vsel %vm841, %v2033, 0
        %v2066 = vsel %vm841, %v2035, 0
        %2068 = vmatpush.xpose.msra.mxu0 0.0
        %2069 = vmatpush.xpose.msra.mxu0 0.0
        %2070 = vmatpush.xpose.msra.mxu0 0.0
        %2071 = vmatpush.xpose.msra.mxu0 0.0
        %2072 = vmatpush.xpose.msra.mxu0 0.0
        %2073 = vmatpush.xpose.msra.mxu0 0.0
        %2074 = vmatpush.xpose.msra.mxu0 0.0
        %2075 = vmatpush.xpose.msra.mxu0 0.0
        %2076 = vmatpush.xpose.msra.mxu0 %v2066
        %2077 = vmatpush.xpose.msra.mxu0 %v2064
        %2078 = vmatpush.xpose.msra.mxu0 %v2062
        %2079 = vmatpush.xpose.msra.mxu0 %v2060
        %2080 = vmatpush.xpose.msra.mxu0 %v2058
        %2081 = vmatpush.xpose.msra.mxu0 %v2056
        %2082 = vmatpush.xpose.msra.mxu0 %v2054
        %2083 = vmatpush.xpose.msra.mxu0 %v2052
        %2084 = vmatmul.f32.gmra.mxu0 %v2036
        %v2085 = vpop.f32.mrf.mxu0
        %v2086 = vadd.f32 %v1996, %v2085
        %2087 = vmatmul.f32.gmra.mxu0 %v2038
        %v2088 = vpop.f32.mrf.mxu0
        %v2089 = vadd.f32 %v1997, %v2088
        %2090 = vmatmul.f32.gmra.mxu0 %v2040
        %v2091 = vpop.f32.mrf.mxu0
        %v2092 = vadd.f32 %v1998, %v2091
        %2093 = vmatmul.f32.gmra.mxu0 %v2042
        %v2094 = vpop.f32.mrf.mxu0
        %v2095 = vadd.f32 %v1999, %v2094
        %2096 = vmatmul.f32.gmra.mxu0 %v2044
        %v2097 = vpop.f32.mrf.mxu0
        %v2098 = vadd.f32 %v2000, %v2097
        %2099 = vmatmul.f32.gmra.mxu0 %v2046
        %v2100 = vpop.f32.mrf.mxu0
        %v2101 = vadd.f32 %v2001, %v2100
        %2102 = vmatmul.f32.gmra.mxu0 %v2048
        %v2103 = vpop.f32.mrf.mxu0
        %v2104 = vadd.f32 %v2002, %v2103
        %2105 = vmatmul.f32.gmra.mxu0 %v2050
        %v2106 = vpop.f32.mrf.mxu0
        %v2107 = vadd.f32 %v2003, %v2106
        %2108 = vdwg.mxu0
        %v2109 = vsel %vm923, %v2086, -inf
        %2110 = vmax.xlane.f32.xlu0 %v2109
        %v2111 = vpop.xlane.xlu0 %2110
        %v2112 = vsel %vm923, %v2089, -inf
        %2113 = vmax.xlane.f32.xlu0 %v2112
        %v2114 = vpop.xlane.xlu0 %2113
        %v2115 = vsel %vm923, %v2092, -inf
        %2116 = vmax.xlane.f32.xlu0 %v2115
        %v2117 = vpop.xlane.xlu0 %2116
        %v2118 = vsel %vm923, %v2095, -inf
        %2119 = vmax.xlane.f32.xlu0 %v2118
        %v2120 = vpop.xlane.xlu0 %2119
        %v2121 = vsel %vm923, %v2098, -inf
        %2122 = vmax.xlane.f32.xlu0 %v2121
        %v2123 = vpop.xlane.xlu0 %2122
        %v2124 = vsel %vm923, %v2101, -inf
        %2125 = vmax.xlane.f32.xlu0 %v2124
        %v2126 = vpop.xlane.xlu0 %2125
        %v2127 = vsel %vm923, %v2104, -inf
        %2128 = vmax.xlane.f32.xlu0 %v2127
        %v2129 = vpop.xlane.xlu0 %2128
        %v2130 = vsel %vm923, %v2107, -inf
        %2131 = vmax.xlane.f32.xlu0 %v2130
        %v2132 = vpop.xlane.xlu0 %2131
        %v2133 = vsub.f32 %v2086, %v2111
        %v2134 = vsub.f32 %v2089, %v2114
        %v2135 = vsub.f32 %v2092, %v2117
        %v2136 = vsub.f32 %v2095, %v2120
        %v2137 = vsub.f32 %v2098, %v2123
        %v2138 = vsub.f32 %v2101, %v2126
        %v2139 = vsub.f32 %v2104, %v2129
        %v2140 = vsub.f32 %v2107, %v2132
        %v2141 = vmul.f32 %v2133, 1.442695
        %v2142 = vpow.pop %v2141
        %v2143 = vmul.f32 %v2134, 1.442695
        %v2144 = vpow.pop %v2143
        %v2145 = vmul.f32 %v2135, 1.442695
        %v2146 = vpow.pop %v2145
        %v2147 = vmul.f32 %v2136, 1.442695
        %v2148 = vpow.pop %v2147
        %v2149 = vmul.f32 %v2137, 1.442695
        %v2150 = vpow.pop %v2149
        %v2151 = vmul.f32 %v2138, 1.442695
        %v2152 = vpow.pop %v2151
        %v2153 = vmul.f32 %v2139, 1.442695
        %v2154 = vpow.pop %v2153
        %v2155 = vmul.f32 %v2140, 1.442695
        %v2156 = vpow.pop %v2155
        %v2157 = vsel %vm923, %v2142, 0.0
        %2158 = vadd.xlane.f32.xlu0 %v2157
        %v2159 = vpop.xlane.xlu0 %2158
        %v2160 = vsel %vm923, %v2144, 0.0
        %2161 = vadd.xlane.f32.xlu0 %v2160
        %v2162 = vpop.xlane.xlu0 %2161
        %v2163 = vsel %vm923, %v2146, 0.0
        %2164 = vadd.xlane.f32.xlu0 %v2163
        %v2165 = vpop.xlane.xlu0 %2164
        %v2166 = vsel %vm923, %v2148, 0.0
        %2167 = vadd.xlane.f32.xlu0 %v2166
        %v2168 = vpop.xlane.xlu0 %2167
        %v2169 = vsel %vm923, %v2150, 0.0
        %2170 = vadd.xlane.f32.xlu0 %v2169
        %v2171 = vpop.xlane.xlu0 %2170
        %v2172 = vsel %vm923, %v2152, 0.0
        %2173 = vadd.xlane.f32.xlu0 %v2172
        %v2174 = vpop.xlane.xlu0 %2173
        %v2175 = vsel %vm923, %v2154, 0.0
        %2176 = vadd.xlane.f32.xlu0 %v2175
        %v2177 = vpop.xlane.xlu0 %2176
        %v2178 = vsel %vm923, %v2156, 0.0
        %2179 = vadd.xlane.f32.xlu0 %v2178
        %v2180 = vpop.xlane.xlu0 %2179
        %v2181 = vrcp.pop %v2159
        %v2182 = vmul.f32 %v2159, %v2181
        %v2183 = vsub.f32 1.0, %v2182
        %v2184 = vmul.f32 %v2181, %v2183
        %v2185 = vadd.f32 %v2181, %v2184
        %vm2186 = vweird.f32 %v2159
        %vm2187 = vweird.f32 %v2181
        %vm2188 = vmor %vm2186, %vm2187
        %v2189 = vsel %vm2188, %v2181, %v2185
        %v2190 = vand.u32 2147483647, %v2159
        %vm2191 = vcmp.eq.f32.partialorder %v2190, 8.507059e+37
        %v2192 = vand.u32 %v2159, 2147483648
        %v2193 = vor.u32 1.1754944e-38, %v2192
        %v2194 = vsel %vm2191, %v2193, %v2189
        %v2195 = vrcp.pop %v2162
        %v2196 = vmul.f32 %v2162, %v2195
        %v2197 = vsub.f32 1.0, %v2196
        %v2198 = vmul.f32 %v2195, %v2197
        %v2199 = vadd.f32 %v2195, %v2198
        %vm2200 = vweird.f32 %v2162
        %vm2201 = vweird.f32 %v2195
        %vm2202 = vmor %vm2200, %vm2201
        %v2203 = vsel %vm2202, %v2195, %v2199
        %v2204 = vand.u32 2147483647, %v2162
        %vm2205 = vcmp.eq.f32.partialorder %v2204, 8.507059e+37
        %v2206 = vand.u32 %v2162, 2147483648
        %v2207 = vor.u32 1.1754944e-38, %v2206
        %v2208 = vsel %vm2205, %v2207, %v2203
        %v2209 = vrcp.pop %v2165
        %v2210 = vmul.f32 %v2165, %v2209
        %v2211 = vsub.f32 1.0, %v2210
        %v2212 = vmul.f32 %v2209, %v2211
        %v2213 = vadd.f32 %v2209, %v2212
        %vm2214 = vweird.f32 %v2165
        %vm2215 = vweird.f32 %v2209
        %vm2216 = vmor %vm2214, %vm2215
        %v2217 = vsel %vm2216, %v2209, %v2213
        %v2218 = vand.u32 2147483647, %v2165
        %vm2219 = vcmp.eq.f32.partialorder %v2218, 8.507059e+37
        %v2220 = vand.u32 %v2165, 2147483648
        %v2221 = vor.u32 1.1754944e-38, %v2220
        %v2222 = vsel %vm2219, %v2221, %v2217
        %v2223 = vrcp.pop %v2168
        %v2224 = vmul.f32 %v2168, %v2223
        %v2225 = vsub.f32 1.0, %v2224
        %v2226 = vmul.f32 %v2223, %v2225
        %v2227 = vadd.f32 %v2223, %v2226
        %vm2228 = vweird.f32 %v2168
        %vm2229 = vweird.f32 %v2223
        %vm2230 = vmor %vm2228, %vm2229
        %v2231 = vsel %vm2230, %v2223, %v2227
        %v2232 = vand.u32 2147483647, %v2168
        %vm2233 = vcmp.eq.f32.partialorder %v2232, 8.507059e+37
        %v2234 = vand.u32 %v2168, 2147483648
        %v2235 = vor.u32 1.1754944e-38, %v2234
        %v2236 = vsel %vm2233, %v2235, %v2231
        %v2237 = vrcp.pop %v2171
        %v2238 = vmul.f32 %v2171, %v2237
        %v2239 = vsub.f32 1.0, %v2238
        %v2240 = vmul.f32 %v2237, %v2239
        %v2241 = vadd.f32 %v2237, %v2240
        %vm2242 = vweird.f32 %v2171
        %vm2243 = vweird.f32 %v2237
        %vm2244 = vmor %vm2242, %vm2243
        %v2245 = vsel %vm2244, %v2237, %v2241
        %v2246 = vand.u32 2147483647, %v2171
        %vm2247 = vcmp.eq.f32.partialorder %v2246, 8.507059e+37
        %v2248 = vand.u32 %v2171, 2147483648
        %v2249 = vor.u32 1.1754944e-38, %v2248
        %v2250 = vsel %vm2247, %v2249, %v2245
        %v2251 = vrcp.pop %v2174
        %v2252 = vmul.f32 %v2174, %v2251
        %v2253 = vsub.f32 1.0, %v2252
        %v2254 = vmul.f32 %v2251, %v2253
        %v2255 = vadd.f32 %v2251, %v2254
        %vm2256 = vweird.f32 %v2174
        %vm2257 = vweird.f32 %v2251
        %vm2258 = vmor %vm2256, %vm2257
        %v2259 = vsel %vm2258, %v2251, %v2255
        %v2260 = vand.u32 2147483647, %v2174
        %vm2261 = vcmp.eq.f32.partialorder %v2260, 8.507059e+37
        %v2262 = vand.u32 %v2174, 2147483648
        %v2263 = vor.u32 1.1754944e-38, %v2262
        %v2264 = vsel %vm2261, %v2263, %v2259
        %v2265 = vrcp.pop %v2177
        %v2266 = vmul.f32 %v2177, %v2265
        %v2267 = vsub.f32 1.0, %v2266
        %v2268 = vmul.f32 %v2265, %v2267
        %v2269 = vadd.f32 %v2265, %v2268
        %vm2270 = vweird.f32 %v2177
        %vm2271 = vweird.f32 %v2265
        %vm2272 = vmor %vm2270, %vm2271
        %v2273 = vsel %vm2272, %v2265, %v2269
        %v2274 = vand.u32 2147483647, %v2177
        %vm2275 = vcmp.eq.f32.partialorder %v2274, 8.507059e+37
        %v2276 = vand.u32 %v2177, 2147483648
        %v2277 = vor.u32 1.1754944e-38, %v2276
        %v2278 = vsel %vm2275, %v2277, %v2273
        %v2279 = vrcp.pop %v2180
        %v2280 = vmul.f32 %v2180, %v2279
        %v2281 = vsub.f32 1.0, %v2280
        %v2282 = vmul.f32 %v2279, %v2281
        %v2283 = vadd.f32 %v2279, %v2282
        %vm2284 = vweird.f32 %v2180
        %vm2285 = vweird.f32 %v2279
        %vm2286 = vmor %vm2284, %vm2285
        %v2287 = vsel %vm2286, %v2279, %v2283
        %v2288 = vand.u32 2147483647, %v2180
        %vm2289 = vcmp.eq.f32.partialorder %v2288, 8.507059e+37
        %v2290 = vand.u32 %v2180, 2147483648
        %v2291 = vor.u32 1.1754944e-38, %v2290
        %v2292 = vsel %vm2289, %v2291, %v2287
        %v2293 = vmul.f32 %v2142, %v2194
        %v2294 = vmul.f32 %v2144, %v2208
        %v2295 = vmul.f32 %v2146, %v2222
        %v2296 = vmul.f32 %v2148, %v2236
        %v2297 = vmul.f32 %v2150, %v2250
        %v2298 = vmul.f32 %v2152, %v2264
        %v2299 = vmul.f32 %v2154, %v2278
        %v2300 = vmul.f32 %v2156, %v2292
        %2301 = vrot.lane.b32.xlu0 %v778, 40
        %v2302 = vpop.permute.xlu0 %2301
        %2303 = vrot.lane.b32.xlu0 %v781, 40
        %v2304 = vpop.permute.xlu0 %2303
        %2305 = vrot.lane.b32.xlu0 %v784, 40
        %v2306 = vpop.permute.xlu0 %2305
        %2307 = vrot.lane.b32.xlu0 %v787, 40
        %v2308 = vpop.permute.xlu0 %2307
        %2309 = vrot.lane.b32.xlu0 %v790, 40
        %v2310 = vpop.permute.xlu0 %2309
        %2311 = vrot.lane.b32.xlu0 %v793, 40
        %v2312 = vpop.permute.xlu0 %2311
        %2313 = vrot.lane.b32.xlu0 %v796, 40
        %v2314 = vpop.permute.xlu0 %2313
        %2315 = vrot.lane.b32.xlu0 %v799, 40
        %v2316 = vpop.permute.xlu0 %2315
        %v2326 = vsel %vm923, %v2293, 0
        %v2329 = vsel %vm923, %v2294, 0
        %v2332 = vsel %vm923, %v2295, 0
        %v2335 = vsel %vm923, %v2296, 0
        %v2338 = vsel %vm923, %v2297, 0
        %v2341 = vsel %vm923, %v2298, 0
        %v2344 = vsel %vm923, %v2299, 0
        %v2347 = vsel %vm923, %v2300, 0
        %2349 = vmatpush.msra.mxu0 0.0
        %2350 = vmatpush.msra.mxu0 0.0
        %2351 = vmatpush.msra.mxu0 0.0
        %2352 = vmatpush.msra.mxu0 0.0
        %2353 = vmatpush.msra.mxu0 0.0
        %2354 = vmatpush.msra.mxu0 0.0
        %2355 = vmatpush.msra.mxu0 0.0
        %2356 = vmatpush.msra.mxu0 0.0
        %2357 = vmatpush.msra.mxu0 %v2316
        %2358 = vmatpush.msra.mxu0 %v2314
        %2359 = vmatpush.msra.mxu0 %v2312
        %2360 = vmatpush.msra.mxu0 %v2310
        %2361 = vmatpush.msra.mxu0 %v2308
        %2362 = vmatpush.msra.mxu0 %v2306
        %2363 = vmatpush.msra.mxu0 %v2304
        %2364 = vmatpush.msra.mxu0 %v2302
        %2365 = vmatmul.f32.gmra.mxu0 %v2326
        %v2366 = vpop.f32.mrf.mxu0
        %v2367 = vadd.f32 0.0, %v2366
        %2368 = vmatmul.f32.gmra.mxu0 %v2329
        %v2369 = vpop.f32.mrf.mxu0
        %v2370 = vadd.f32 0.0, %v2369
        %2371 = vmatmul.f32.gmra.mxu0 %v2332
        %v2372 = vpop.f32.mrf.mxu0
        %v2373 = vadd.f32 0.0, %v2372
        %2374 = vmatmul.f32.gmra.mxu0 %v2335
        %v2375 = vpop.f32.mrf.mxu0
        %v2376 = vadd.f32 0.0, %v2375
        %2377 = vmatmul.f32.gmra.mxu0 %v2338
        %v2378 = vpop.f32.mrf.mxu0
        %v2379 = vadd.f32 0.0, %v2378
        %2380 = vmatmul.f32.gmra.mxu0 %v2341
        %v2381 = vpop.f32.mrf.mxu0
        %v2382 = vadd.f32 0.0, %v2381
        %2383 = vmatmul.f32.gmra.mxu0 %v2344
        %v2384 = vpop.f32.mrf.mxu0
        %v2385 = vadd.f32 0.0, %v2384
        %2386 = vmatmul.f32.gmra.mxu0 %v2347
        %v2387 = vpop.f32.mrf.mxu0
        %v2388 = vadd.f32 0.0, %v2387
        %2389 = vdwg.mxu0
        %2398 = vrot.lane.b32.xlu0 %v1577, 8
        %v2399 = vpop.permute.xlu0 %2398
        %2400 = vrot.lane.b32.xlu0 %v1580, 8
        %v2401 = vpop.permute.xlu0 %2400
        %2402 = vrot.lane.b32.xlu0 %v1583, 8
        %v2403 = vpop.permute.xlu0 %2402
        %2404 = vrot.lane.b32.xlu0 %v1586, 8
        %v2405 = vpop.permute.xlu0 %2404
        %2406 = vrot.lane.b32.xlu0 %v1589, 8
        %v2407 = vpop.permute.xlu0 %2406
        %2408 = vrot.lane.b32.xlu0 %v1592, 8
        %v2409 = vpop.permute.xlu0 %2408
        %2410 = vrot.lane.b32.xlu0 %v1595, 8
        %v2411 = vpop.permute.xlu0 %2410
        %2412 = vrot.lane.b32.xlu0 %v1598, 8
        %v2413 = vpop.permute.xlu0 %2412
        %2430 = vrot.lane.b32.xlu0 %v1972, 16
        %v2431 = vpop.permute.xlu0 %2430
        %2432 = vrot.lane.b32.xlu0 %v1975, 16
        %v2433 = vpop.permute.xlu0 %2432
        %2434 = vrot.lane.b32.xlu0 %v1978, 16
        %v2435 = vpop.permute.xlu0 %2434
        %2436 = vrot.lane.b32.xlu0 %v1981, 16
        %v2437 = vpop.permute.xlu0 %2436
        %2438 = vrot.lane.b32.xlu0 %v1984, 16
        %v2439 = vpop.permute.xlu0 %2438
        %2440 = vrot.lane.b32.xlu0 %v1987, 16
        %v2441 = vpop.permute.xlu0 %2440
        %2442 = vrot.lane.b32.xlu0 %v1990, 16
        %v2443 = vpop.permute.xlu0 %2442
        %2444 = vrot.lane.b32.xlu0 %v1993, 16
        %v2445 = vpop.permute.xlu0 %2444
        %2462 = vrot.lane.b32.xlu0 %v2367, 24
        %v2463 = vpop.permute.xlu0 %2462
        %2464 = vrot.lane.b32.xlu0 %v2370, 24
        %v2465 = vpop.permute.xlu0 %2464
        %2466 = vrot.lane.b32.xlu0 %v2373, 24
        %v2467 = vpop.permute.xlu0 %2466
        %2468 = vrot.lane.b32.xlu0 %v2376, 24
        %v2469 = vpop.permute.xlu0 %2468
        %2470 = vrot.lane.b32.xlu0 %v2379, 24
        %v2471 = vpop.permute.xlu0 %2470
        %2472 = vrot.lane.b32.xlu0 %v2382, 24
        %v2473 = vpop.permute.xlu0 %2472
        %2474 = vrot.lane.b32.xlu0 %v2385, 24
        %v2475 = vpop.permute.xlu0 %2474
        %2476 = vrot.lane.b32.xlu0 %v2388, 24
        %v2477 = vpop.permute.xlu0 %2476
        %v2486 = vsel %vm841, %v1182, %v2399
        %v2487 = vsel %vm841, %v1185, %v2401
        %v2488 = vsel %vm841, %v1188, %v2403
        %v2489 = vsel %vm841, %v1191, %v2405
        %v2490 = vsel %vm841, %v1194, %v2407
        %v2491 = vsel %vm841, %v1197, %v2409
        %v2492 = vsel %vm841, %v1200, %v2411
        %v2493 = vsel %vm841, %v1203, %v2413
        %vm2494 = vcmask 130048
        %v2495 = vsel %vm2494, %v2486, %v2431
        %v2496 = vsel %vm2494, %v2487, %v2433
        %v2497 = vsel %vm2494, %v2488, %v2435
        %v2498 = vsel %vm2494, %v2489, %v2437
        %v2499 = vsel %vm2494, %v2490, %v2439
        %v2500 = vsel %vm2494, %v2491, %v2441
        %v2501 = vsel %vm2494, %v2492, %v2443
        %v2502 = vsel %vm2494, %v2493, %v2445
        %vm2503 = vcmask 195584
        %v2504 = vsel %vm2503, %v2495, %v2463
        %v2505 = vsel %vm2503, %v2496, %v2465
        %v2506 = vsel %vm2503, %v2497, %v2467
        %v2507 = vsel %vm2503, %v2498, %v2469
        %v2508 = vsel %vm2503, %v2499, %v2471
        %v2509 = vsel %vm2503, %v2500, %v2473
        %v2510 = vsel %vm2503, %v2501, %v2475
        %v2511 = vsel %vm2503, %v2502, %v2477
        %v2512 = vld [vmem:[%s6] sm:$0xff]
        %v2513 = vld [vmem:[%s6 + $0x8] sm:$0xff]
        %v2514 = vld [vmem:[%s6 + $0x10] sm:$0xff]
        %v2515 = vld [vmem:[%s6 + $0x18] sm:$0xff]
        %v2516 = vld [vmem:[%s7] sm:$0x1]
        %v2518 = vperm.slane %v2516, 0
        %v2521 = vsel %vm522, %v2504, 0
        %v2524 = vsel %vm522, %v2505, 0
        %v2527 = vsel %vm522, %v2506, 0
        %v2530 = vsel %vm522, %v2507, 0
        %v2533 = vsel %vm522, %v2508, 0
        %v2536 = vsel %vm522, %v2509, 0
        %v2539 = vsel %vm522, %v2510, 0
        %v2542 = vsel %vm522, %v2511, 0
        %2544 = vmatpush.msra.mxu0 0.0
        %2545 = vmatpush.msra.mxu0 0.0
        %2546 = vmatpush.msra.mxu0 0.0
        %2547 = vmatpush.msra.mxu0 0.0
        %2548 = vmatpush.msra.mxu0 0.0
        %2549 = vmatpush.msra.mxu0 0.0
        %2550 = vmatpush.msra.mxu0 0.0
        %2551 = vmatpush.msra.mxu0 0.0
        %2552 = vmatpush.msra.mxu0 0.0
        %2553 = vmatpush.msra.mxu0 0.0
        %2554 = vmatpush.msra.mxu0 0.0
        %2555 = vmatpush.msra.mxu0 0.0
        %2556 = vmatpush.msra.mxu0 %v2515
        %2557 = vmatpush.msra.mxu0 %v2514
        %2558 = vmatpush.msra.mxu0 %v2513
        %2559 = vmatpush.msra.mxu0 %v2512
        %2560 = vmatmul.f32.gmra.mxu0 %v2521
        %v2561 = vpop.f32.mrf.mxu0
        %v2562 = vadd.f32 %v2518, %v2561
        %2563 = vmatmul.f32.gmra.mxu0 %v2524
        %v2564 = vpop.f32.mrf.mxu0
        %v2565 = vadd.f32 %v2518, %v2564
        %2566 = vmatmul.f32.gmra.mxu0 %v2527
        %v2567 = vpop.f32.mrf.mxu0
        %v2568 = vadd.f32 %v2518, %v2567
        %2569 = vmatmul.f32.gmra.mxu0 %v2530
        %v2570 = vpop.f32.mrf.mxu0
        %v2571 = vadd.f32 %v2518, %v2570
        %2572 = vmatmul.f32.gmra.mxu0 %v2533
        %v2573 = vpop.f32.mrf.mxu0
        %v2574 = vadd.f32 %v2518, %v2573
        %2575 = vmatmul.f32.gmra.mxu0 %v2536
        %v2576 = vpop.f32.mrf.mxu0
        %v2577 = vadd.f32 %v2518, %v2576
        %2578 = vmatmul.f32.gmra.mxu0 %v2539
        %v2579 = vpop.f32.mrf.mxu0
        %v2580 = vadd.f32 %v2518, %v2579
        %2581 = vmatmul.f32.gmra.mxu0 %v2542
        %v2582 = vpop.f32.mrf.mxu0
        %v2583 = vadd.f32 %v2518, %v2582
        %2584 = vdwg.mxu0
        %v2585 = vadd.f32 %v512, %v2562
        %v2586 = vadd.f32 %v513, %v2565
        %v2587 = vadd.f32 %v514, %v2568
        %v2588 = vadd.f32 %v515, %v2571
        %v2589 = vadd.f32 %v516, %v2574
        %v2590 = vadd.f32 %v517, %v2577
        %v2591 = vadd.f32 %v518, %v2580
        %v2592 = vadd.f32 %v519, %v2583
        %v2593 = vld [vmem:[%s8] sm:$0x1]
        %v2594 = vld [vmem:[%s9] sm:$0x1]
        %v2595 = vsel %vm522, %v2585, 0.0
        %2596 = vadd.xlane.f32.xlu0 %v2595
        %v2597 = vpop.xlane.xlu0 %2596
        %v2598 = vsel %vm522, %v2586, 0.0
        %2599 = vadd.xlane.f32.xlu0 %v2598
        %v2600 = vpop.xlane.xlu0 %2599
        %v2601 = vsel %vm522, %v2587, 0.0
        %2602 = vadd.xlane.f32.xlu0 %v2601
        %v2603 = vpop.xlane.xlu0 %2602
        %v2604 = vsel %vm522, %v2588, 0.0
        %2605 = vadd.xlane.f32.xlu0 %v2604
        %v2606 = vpop.xlane.xlu0 %2605
        %v2607 = vsel %vm522, %v2589, 0.0
        %2608 = vadd.xlane.f32.xlu0 %v2607
        %v2609 = vpop.xlane.xlu0 %2608
        %v2610 = vsel %vm522, %v2590, 0.0
        %2611 = vadd.xlane.f32.xlu0 %v2610
        %v2612 = vpop.xlane.xlu0 %2611
        %v2613 = vsel %vm522, %v2591, 0.0
        %2614 = vadd.xlane.f32.xlu0 %v2613
        %v2615 = vpop.xlane.xlu0 %2614
        %v2616 = vsel %vm522, %v2592, 0.0
        %2617 = vadd.xlane.f32.xlu0 %v2616
        %v2618 = vpop.xlane.xlu0 %2617
        %v2619 = vmul.f32 %v2597, %v553
        %v2620 = vmul.f32 %v2600, %v553
        %v2621 = vmul.f32 %v2603, %v553
        %v2622 = vmul.f32 %v2606, %v553
        %v2623 = vmul.f32 %v2609, %v553
        %v2624 = vmul.f32 %v2612, %v553
        %v2625 = vmul.f32 %v2615, %v553
        %v2626 = vmul.f32 %v2618, %v553
        %v2627 = vsub.f32 %v2585, %v2619
        %v2628 = vsub.f32 %v2586, %v2620
        %v2629 = vsub.f32 %v2587, %v2621
        %v2630 = vsub.f32 %v2588, %v2622
        %v2631 = vsub.f32 %v2589, %v2623
        %v2632 = vsub.f32 %v2590, %v2624
        %v2633 = vsub.f32 %v2591, %v2625
        %v2634 = vsub.f32 %v2592, %v2626
        %v2635 = vmul.f32 %v2627, %v2627
        %v2636 = vmul.f32 %v2628, %v2628
        %v2637 = vmul.f32 %v2629, %v2629
        %v2638 = vmul.f32 %v2630, %v2630
        %v2639 = vmul.f32 %v2631, %v2631
        %v2640 = vmul.f32 %v2632, %v2632
        %v2641 = vmul.f32 %v2633, %v2633
        %v2642 = vmul.f32 %v2634, %v2634
        %v2643 = vsel %vm522, %v2635, 0.0
        %2644 = vadd.xlane.f32.xlu0 %v2643
        %v2645 = vpop.xlane.xlu0 %2644
        %v2646 = vsel %vm522, %v2636, 0.0
        %2647 = vadd.xlane.f32.xlu0 %v2646
        %v2648 = vpop.xlane.xlu0 %2647
        %v2649 = vsel %vm522, %v2637, 0.0
        %2650 = vadd.xlane.f32.xlu0 %v2649
        %v2651 = vpop.xlane.xlu0 %2650
        %v2652 = vsel %vm522, %v2638, 0.0
        %2653 = vadd.xlane.f32.xlu0 %v2652
        %v2654 = vpop.xlane.xlu0 %2653
        %v2655 = vsel %vm522, %v2639, 0.0
        %2656 = vadd.xlane.f32.xlu0 %v2655
        %v2657 = vpop.xlane.xlu0 %2656
        %v2658 = vsel %vm522, %v2640, 0.0
        %2659 = vadd.xlane.f32.xlu0 %v2658
        %v2660 = vpop.xlane.xlu0 %2659
        %v2661 = vsel %vm522, %v2641, 0.0
        %2662 = vadd.xlane.f32.xlu0 %v2661
        %v2663 = vpop.xlane.xlu0 %2662
        %v2664 = vsel %vm522, %v2642, 0.0
        %2665 = vadd.xlane.f32.xlu0 %v2664
        %v2666 = vpop.xlane.xlu0 %2665
        %v2667 = vmul.f32 %v2645, %v553
        %v2668 = vmul.f32 %v2648, %v553
        %v2669 = vmul.f32 %v2651, %v553
        %v2670 = vmul.f32 %v2654, %v553
        %v2671 = vmul.f32 %v2657, %v553
        %v2672 = vmul.f32 %v2660, %v553
        %v2673 = vmul.f32 %v2663, %v553
        %v2674 = vmul.f32 %v2666, %v553
        %v2675 = vadd.f32 %v2667, 1e-05
        %v2676 = vadd.f32 %v2668, 1e-05
        %v2677 = vadd.f32 %v2669, 1e-05
        %v2678 = vadd.f32 %v2670, 1e-05
        %v2679 = vadd.f32 %v2671, 1e-05
        %v2680 = vadd.f32 %v2672, 1e-05
        %v2681 = vadd.f32 %v2673, 1e-05
        %v2682 = vadd.f32 %v2674, 1e-05
        %v2683 = vrsqrt.pop %v2675
        %v2684 = vmul.f32 %v2683, %v2675
        %v2685 = vmul.f32 %v2684, %v2683
        %v2686 = vmul.f32 0.5, %v2685
        %v2687 = vsub.f32 1.5, %v2686
        %v2688 = vmul.f32 %v2683, %v2687
        %vm2689 = vweird.f32 %v2675
        %vm2690 = vweird.f32 %v2683
        %vm2691 = vmor %vm2689, %vm2690
        %v2692 = vsel %vm2691, %v2683, %v2688
        %v2693 = vrsqrt.pop %v2676
        %v2694 = vmul.f32 %v2693, %v2676
        %v2695 = vmul.f32 %v2694, %v2693
        %v2696 = vmul.f32 0.5, %v2695
        %v2697 = vsub.f32 1.5, %v2696
        %v2698 = vmul.f32 %v2693, %v2697
        %vm2699 = vweird.f32 %v2676
        %vm2700 = vweird.f32 %v2693
        %vm2701 = vmor %vm2699, %vm2700
        %v2702 = vsel %vm2701, %v2693, %v2698
        %v2703 = vrsqrt.pop %v2677
        %v2704 = vmul.f32 %v2703, %v2677
        %v2705 = vmul.f32 %v2704, %v2703
        %v2706 = vmul.f32 0.5, %v2705
        %v2707 = vsub.f32 1.5, %v2706
        %v2708 = vmul.f32 %v2703, %v2707
        %vm2709 = vweird.f32 %v2677
        %vm2710 = vweird.f32 %v2703
        %vm2711 = vmor %vm2709, %vm2710
        %v2712 = vsel %vm2711, %v2703, %v2708
        %v2713 = vrsqrt.pop %v2678
        %v2714 = vmul.f32 %v2713, %v2678
        %v2715 = vmul.f32 %v2714, %v2713
        %v2716 = vmul.f32 0.5, %v2715
        %v2717 = vsub.f32 1.5, %v2716
        %v2718 = vmul.f32 %v2713, %v2717
        %vm2719 = vweird.f32 %v2678
        %vm2720 = vweird.f32 %v2713
        %vm2721 = vmor %vm2719, %vm2720
        %v2722 = vsel %vm2721, %v2713, %v2718
        %v2723 = vrsqrt.pop %v2679
        %v2724 = vmul.f32 %v2723, %v2679
        %v2725 = vmul.f32 %v2724, %v2723
        %v2726 = vmul.f32 0.5, %v2725
        %v2727 = vsub.f32 1.5, %v2726
        %v2728 = vmul.f32 %v2723, %v2727
        %vm2729 = vweird.f32 %v2679
        %vm2730 = vweird.f32 %v2723
        %vm2731 = vmor %vm2729, %vm2730
        %v2732 = vsel %vm2731, %v2723, %v2728
        %v2733 = vrsqrt.pop %v2680
        %v2734 = vmul.f32 %v2733, %v2680
        %v2735 = vmul.f32 %v2734, %v2733
        %v2736 = vmul.f32 0.5, %v2735
        %v2737 = vsub.f32 1.5, %v2736
        %v2738 = vmul.f32 %v2733, %v2737
        %vm2739 = vweird.f32 %v2680
        %vm2740 = vweird.f32 %v2733
        %vm2741 = vmor %vm2739, %vm2740
        %v2742 = vsel %vm2741, %v2733, %v2738
        %v2743 = vrsqrt.pop %v2681
        %v2744 = vmul.f32 %v2743, %v2681
        %v2745 = vmul.f32 %v2744, %v2743
        %v2746 = vmul.f32 0.5, %v2745
        %v2747 = vsub.f32 1.5, %v2746
        %v2748 = vmul.f32 %v2743, %v2747
        %vm2749 = vweird.f32 %v2681
        %vm2750 = vweird.f32 %v2743
        %vm2751 = vmor %vm2749, %vm2750
        %v2752 = vsel %vm2751, %v2743, %v2748
        %v2753 = vrsqrt.pop %v2682
        %v2754 = vmul.f32 %v2753, %v2682
        %v2755 = vmul.f32 %v2754, %v2753
        %v2756 = vmul.f32 0.5, %v2755
        %v2757 = vsub.f32 1.5, %v2756
        %v2758 = vmul.f32 %v2753, %v2757
        %vm2759 = vweird.f32 %v2682
        %vm2760 = vweird.f32 %v2753
        %vm2761 = vmor %vm2759, %vm2760
        %v2762 = vsel %vm2761, %v2753, %v2758
        %v2763 = vmul.f32 %v2627, %v2692
        %v2764 = vmul.f32 %v2628, %v2702
        %v2765 = vmul.f32 %v2629, %v2712
        %v2766 = vmul.f32 %v2630, %v2722
        %v2767 = vmul.f32 %v2631, %v2732
        %v2768 = vmul.f32 %v2632, %v2742
        %v2769 = vmul.f32 %v2633, %v2752
        %v2770 = vmul.f32 %v2634, %v2762
        %v2772 = vperm.slane %v2593, 0
        %v2774 = vmul.f32 %v2763, %v2772
        %v2775 = vmul.f32 %v2764, %v2772
        %v2776 = vmul.f32 %v2765, %v2772
        %v2777 = vmul.f32 %v2766, %v2772
        %v2778 = vmul.f32 %v2767, %v2772
        %v2779 = vmul.f32 %v2768, %v2772
        %v2780 = vmul.f32 %v2769, %v2772
        %v2781 = vmul.f32 %v2770, %v2772
        %v2783 = vperm.slane %v2594, 0
        %v2785 = vadd.f32 %v2774, %v2783
        %v2786 = vadd.f32 %v2775, %v2783
        %v2787 = vadd.f32 %v2776, %v2783
        %v2788 = vadd.f32 %v2777, %v2783
        %v2789 = vadd.f32 %v2778, %v2783
        %v2790 = vadd.f32 %v2779, %v2783
        %v2791 = vadd.f32 %v2780, %v2783
        %v2792 = vadd.f32 %v2781, %v2783
        %v2793 = vld [vmem:[#allocation7] sm:$0xff]
        %v2794 = vld [vmem:[#allocation7 + $0x8] sm:$0xff]
        %v2795 = vld [vmem:[#allocation7 + $0x10] sm:$0xff]
        %v2796 = vld [vmem:[#allocation7 + $0x18] sm:$0xff]
        %v2797 = vld [vmem:[%s11] sm:$0x1]
        %v2799 = vperm.slane %v2797, 0
        %v2802 = vsel %vm522, %v2785, 0
        %v2805 = vsel %vm522, %v2786, 0
        %v2808 = vsel %vm522, %v2787, 0
        %v2811 = vsel %vm522, %v2788, 0
        %v2814 = vsel %vm522, %v2789, 0
        %v2817 = vsel %vm522, %v2790, 0
        %v2820 = vsel %vm522, %v2791, 0
        %v2823 = vsel %vm522, %v2792, 0
        %2825 = vmatpush.msra.mxu0 0.0
        %2826 = vmatpush.msra.mxu0 0.0
        %2827 = vmatpush.msra.mxu0 0.0
        %2828 = vmatpush.msra.mxu0 0.0
        %2829 = vmatpush.msra.mxu0 0.0
        %2830 = vmatpush.msra.mxu0 0.0
        %2831 = vmatpush.msra.mxu0 0.0
        %2832 = vmatpush.msra.mxu0 0.0
        %2833 = vmatpush.msra.mxu0 0.0
        %2834 = vmatpush.msra.mxu0 0.0
        %2835 = vmatpush.msra.mxu0 0.0
        %2836 = vmatpush.msra.mxu0 0.0
        %2837 = vmatpush.msra.mxu0 %v2796
        %2838 = vmatpush.msra.mxu0 %v2795
        %2839 = vmatpush.msra.mxu0 %v2794
        %2840 = vmatpush.msra.mxu0 %v2793
        %2841 = vmatmul.f32.gmra.mxu0 %v2802
        %v2842 = vpop.f32.mrf.mxu0
        %v2843 = vadd.f32 %v2799, %v2842
        %2844 = vmatmul.f32.gmra.mxu0 %v2805
        %v2845 = vpop.f32.mrf.mxu0
        %v2846 = vadd.f32 %v2799, %v2845
        %2847 = vmatmul.f32.gmra.mxu0 %v2808
        %v2848 = vpop.f32.mrf.mxu0
        %v2849 = vadd.f32 %v2799, %v2848
        %2850 = vmatmul.f32.gmra.mxu0 %v2811
        %v2851 = vpop.f32.mrf.mxu0
        %v2852 = vadd.f32 %v2799, %v2851
        %2853 = vmatmul.f32.gmra.mxu0 %v2814
        %v2854 = vpop.f32.mrf.mxu0
        %v2855 = vadd.f32 %v2799, %v2854
        %2856 = vmatmul.f32.gmra.mxu0 %v2817
        %v2857 = vpop.f32.mrf.mxu0
        %v2858 = vadd.f32 %v2799, %v2857
        %2859 = vmatmul.f32.gmra.mxu0 %v2820
        %v2860 = vpop.f32.mrf.mxu0
        %v2861 = vadd.f32 %v2799, %v2860
        %2862 = vmatmul.f32.gmra.mxu0 %v2823
        %v2863 = vpop.f32.mrf.mxu0
        %v2864 = vadd.f32 %v2799, %v2863
        %2865 = vdwg.mxu0
        %v2866 = vmul.f32 %v2843, 0.5
        %v2867 = vmul.f32 %v2846, 0.5
        %v2868 = vmul.f32 %v2849, 0.5
        %v2869 = vmul.f32 %v2852, 0.5
        %v2870 = vmul.f32 %v2855, 0.5
        %v2871 = vmul.f32 %v2858, 0.5
        %v2872 = vmul.f32 %v2861, 0.5
        %v2873 = vmul.f32 %v2864, 0.5
        %v2874 = vmul.f32 %v2843, 0.70710677
        %v2875 = vmul.f32 %v2846, 0.70710677
        %v2876 = vmul.f32 %v2849, 0.70710677
        %v2877 = vmul.f32 %v2852, 0.70710677
        %v2878 = vmul.f32 %v2855, 0.70710677
        %v2879 = vmul.f32 %v2858, 0.70710677
        %v2880 = vmul.f32 %v2861, 0.70710677
        %v2881 = vmul.f32 %v2864, 0.70710677
        %v2882 = vmul.f32 %v2874, %v2874
        %v2883 = vmin.f32 16.0, %v2882
        %v2884 = vmul.f32 %v2883, 2.1237322e-06
        %v2885 = vadd.f32 %v2884, 0.00028619796
        %v2886 = vmul.f32 %v2883, %v2885
        %v2887 = vadd.f32 %v2886, 0.0036580483
        %v2888 = vmul.f32 %v2883, %v2887
        %v2889 = vadd.f32 %v2888, 0.05243302
        %v2890 = vmul.f32 %v2883, %v2889
        %v2891 = vadd.f32 %v2890, 0.18741608
        %v2892 = vmul.f32 %v2883, %v2891
        %v2893 = vadd.f32 %v2892, 1.1283791
        %v2894 = vmul.f32 %v2874, %v2893
        %v2895 = vmul.f32 %v2883, 3.8918573e-05
        %v2896 = vadd.f32 %v2895, 0.001143296
        %v2897 = vmul.f32 %v2883, %v2896
        %v2898 = vadd.f32 %v2897, 0.014752088
        %v2899 = vmul.f32 %v2883, %v2898
        %v2900 = vadd.f32 %v2899, 0.112945676
        %v2901 = vmul.f32 %v2883, %v2900
        %v2902 = vadd.f32 %v2901, 0.4994258
        %v2903 = vmul.f32 %v2883, %v2902
        %v2904 = vadd.f32 %v2903, 1.0
        %v2905 = vrcp.pop %v2904
        %v2906 = vmul.f32 %v2904, %v2905
        %v2907 = vsub.f32 1.0, %v2906
        %v2908 = vmul.f32 %v2905, %v2907
        %v2909 = vadd.f32 %v2905, %v2908
        %vm2910 = vweird.f32 %v2904
        %vm2911 = vweird.f32 %v2905
        %vm2912 = vmor %vm2910, %vm2911
        %v2913 = vsel %vm2912, %v2905, %v2909
        %v2914 = vand.u32 2147483647, %v2904
        %vm2915 = vcmp.eq.f32.partialorder %v2914, 8.507059e+37
        %v2916 = vand.u32 %v2904, 2147483648
        %v2917 = vor.u32 1.1754944e-38, %v2916
        %v2918 = vsel %vm2915, %v2917, %v2913
        %v2919 = vmul.f32 %v2894, %v2918
        %v2920 = vmin.f32 %v2919, 1.0
        %v2921 = vmax.f32 %v2920, -1.0
        %v2922 = vmul.f32 %v2875, %v2875
        %v2923 = vmin.f32 16.0, %v2922
        %v2924 = vmul.f32 %v2923, 2.1237322e-06
        %v2925 = vadd.f32 %v2924, 0.00028619796
        %v2926 = vmul.f32 %v2923, %v2925
        %v2927 = vadd.f32 %v2926, 0.0036580483
        %v2928 = vmul.f32 %v2923, %v2927
        %v2929 = vadd.f32 %v2928, 0.05243302
        %v2930 = vmul.f32 %v2923, %v2929
        %v2931 = vadd.f32 %v2930, 0.18741608
        %v2932 = vmul.f32 %v2923, %v2931
        %v2933 = vadd.f32 %v2932, 1.1283791
        %v2934 = vmul.f32 %v2875, %v2933
        %v2935 = vmul.f32 %v2923, 3.8918573e-05
        %v2936 = vadd.f32 %v2935, 0.001143296
        %v2937 = vmul.f32 %v2923, %v2936
        %v2938 = vadd.f32 %v2937, 0.014752088
        %v2939 = vmul.f32 %v2923, %v2938
        %v2940 = vadd.f32 %v2939, 0.112945676
        %v2941 = vmul.f32 %v2923, %v2940
        %v2942 = vadd.f32 %v2941, 0.4994258
        %v2943 = vmul.f32 %v2923, %v2942
        %v2944 = vadd.f32 %v2943, 1.0
        %v2945 = vrcp.pop %v2944
        %v2946 = vmul.f32 %v2944, %v2945
        %v2947 = vsub.f32 1.0, %v2946
        %v2948 = vmul.f32 %v2945, %v2947
        %v2949 = vadd.f32 %v2945, %v2948
        %vm2950 = vweird.f32 %v2944
        %vm2951 = vweird.f32 %v2945
        %vm2952 = vmor %vm2950, %vm2951
        %v2953 = vsel %vm2952, %v2945, %v2949
        %v2954 = vand.u32 2147483647, %v2944
        %vm2955 = vcmp.eq.f32.partialorder %v2954, 8.507059e+37
        %v2956 = vand.u32 %v2944, 2147483648
        %v2957 = vor.u32 1.1754944e-38, %v2956
        %v2958 = vsel %vm2955, %v2957, %v2953
        %v2959 = vmul.f32 %v2934, %v2958
        %v2960 = vmin.f32 %v2959, 1.0
        %v2961 = vmax.f32 %v2960, -1.0
        %v2962 = vmul.f32 %v2876, %v2876
        %v2963 = vmin.f32 16.0, %v2962
        %v2964 = vmul.f32 %v2963, 2.1237322e-06
        %v2965 = vadd.f32 %v2964, 0.00028619796
        %v2966 = vmul.f32 %v2963, %v2965
        %v2967 = vadd.f32 %v2966, 0.0036580483
        %v2968 = vmul.f32 %v2963, %v2967
        %v2969 = vadd.f32 %v2968, 0.05243302
        %v2970 = vmul.f32 %v2963, %v2969
        %v2971 = vadd.f32 %v2970, 0.18741608
        %v2972 = vmul.f32 %v2963, %v2971
        %v2973 = vadd.f32 %v2972, 1.1283791
        %v2974 = vmul.f32 %v2876, %v2973
        %v2975 = vmul.f32 %v2963, 3.8918573e-05
        %v2976 = vadd.f32 %v2975, 0.001143296
        %v2977 = vmul.f32 %v2963, %v2976
        %v2978 = vadd.f32 %v2977, 0.014752088
        %v2979 = vmul.f32 %v2963, %v2978
        %v2980 = vadd.f32 %v2979, 0.112945676
        %v2981 = vmul.f32 %v2963, %v2980
        %v2982 = vadd.f32 %v2981, 0.4994258
        %v2983 = vmul.f32 %v2963, %v2982
        %v2984 = vadd.f32 %v2983, 1.0
        %v2985 = vrcp.pop %v2984
        %v2986 = vmul.f32 %v2984, %v2985
        %v2987 = vsub.f32 1.0, %v2986
        %v2988 = vmul.f32 %v2985, %v2987
        %v2989 = vadd.f32 %v2985, %v2988
        %vm2990 = vweird.f32 %v2984
        %vm2991 = vweird.f32 %v2985
        %vm2992 = vmor %vm2990, %vm2991
        %v2993 = vsel %vm2992, %v2985, %v2989
        %v2994 = vand.u32 2147483647, %v2984
        %vm2995 = vcmp.eq.f32.partialorder %v2994, 8.507059e+37
        %v2996 = vand.u32 %v2984, 2147483648
        %v2997 = vor.u32 1.1754944e-38, %v2996
        %v2998 = vsel %vm2995, %v2997, %v2993
        %v2999 = vmul.f32 %v2974, %v2998
        %v3000 = vmin.f32 %v2999, 1.0
        %v3001 = vmax.f32 %v3000, -1.0
        %v3002 = vmul.f32 %v2877, %v2877
        %v3003 = vmin.f32 16.0, %v3002
        %v3004 = vmul.f32 %v3003, 2.1237322e-06
        %v3005 = vadd.f32 %v3004, 0.00028619796
        %v3006 = vmul.f32 %v3003, %v3005
        %v3007 = vadd.f32 %v3006, 0.0036580483
        %v3008 = vmul.f32 %v3003, %v3007
        %v3009 = vadd.f32 %v3008, 0.05243302
        %v3010 = vmul.f32 %v3003, %v3009
        %v3011 = vadd.f32 %v3010, 0.18741608
        %v3012 = vmul.f32 %v3003, %v3011
        %v3013 = vadd.f32 %v3012, 1.1283791
        %v3014 = vmul.f32 %v2877, %v3013
        %v3015 = vmul.f32 %v3003, 3.8918573e-05
        %v3016 = vadd.f32 %v3015, 0.001143296
        %v3017 = vmul.f32 %v3003, %v3016
        %v3018 = vadd.f32 %v3017, 0.014752088
        %v3019 = vmul.f32 %v3003, %v3018
        %v3020 = vadd.f32 %v3019, 0.112945676
        %v3021 = vmul.f32 %v3003, %v3020
        %v3022 = vadd.f32 %v3021, 0.4994258
        %v3023 = vmul.f32 %v3003, %v3022
        %v3024 = vadd.f32 %v3023, 1.0
        %v3025 = vrcp.pop %v3024
        %v3026 = vmul.f32 %v3024, %v3025
        %v3027 = vsub.f32 1.0, %v3026
        %v3028 = vmul.f32 %v3025, %v3027
        %v3029 = vadd.f32 %v3025, %v3028
        %vm3030 = vweird.f32 %v3024
        %vm3031 = vweird.f32 %v3025
        %vm3032 = vmor %vm3030, %vm3031
        %v3033 = vsel %vm3032, %v3025, %v3029
        %v3034 = vand.u32 2147483647, %v3024
        %vm3035 = vcmp.eq.f32.partialorder %v3034, 8.507059e+37
        %v3036 = vand.u32 %v3024, 2147483648
        %v3037 = vor.u32 1.1754944e-38, %v3036
        %v3038 = vsel %vm3035, %v3037, %v3033
        %v3039 = vmul.f32 %v3014, %v3038
        %v3040 = vmin.f32 %v3039, 1.0
        %v3041 = vmax.f32 %v3040, -1.0
        %v3042 = vmul.f32 %v2878, %v2878
        %v3043 = vmin.f32 16.0, %v3042
        %v3044 = vmul.f32 %v3043, 2.1237322e-06
        %v3045 = vadd.f32 %v3044, 0.00028619796
        %v3046 = vmul.f32 %v3043, %v3045
        %v3047 = vadd.f32 %v3046, 0.0036580483
        %v3048 = vmul.f32 %v3043, %v3047
        %v3049 = vadd.f32 %v3048, 0.05243302
        %v3050 = vmul.f32 %v3043, %v3049
        %v3051 = vadd.f32 %v3050, 0.18741608
        %v3052 = vmul.f32 %v3043, %v3051
        %v3053 = vadd.f32 %v3052, 1.1283791
        %v3054 = vmul.f32 %v2878, %v3053
        %v3055 = vmul.f32 %v3043, 3.8918573e-05
        %v3056 = vadd.f32 %v3055, 0.001143296
        %v3057 = vmul.f32 %v3043, %v3056
        %v3058 = vadd.f32 %v3057, 0.014752088
        %v3059 = vmul.f32 %v3043, %v3058
        %v3060 = vadd.f32 %v3059, 0.112945676
        %v3061 = vmul.f32 %v3043, %v3060
        %v3062 = vadd.f32 %v3061, 0.4994258
        %v3063 = vmul.f32 %v3043, %v3062
        %v3064 = vadd.f32 %v3063, 1.0
        %v3065 = vrcp.pop %v3064
        %v3066 = vmul.f32 %v3064, %v3065
        %v3067 = vsub.f32 1.0, %v3066
        %v3068 = vmul.f32 %v3065, %v3067
        %v3069 = vadd.f32 %v3065, %v3068
        %vm3070 = vweird.f32 %v3064
        %vm3071 = vweird.f32 %v3065
        %vm3072 = vmor %vm3070, %vm3071
        %v3073 = vsel %vm3072, %v3065, %v3069
        %v3074 = vand.u32 2147483647, %v3064
        %vm3075 = vcmp.eq.f32.partialorder %v3074, 8.507059e+37
        %v3076 = vand.u32 %v3064, 2147483648
        %v3077 = vor.u32 1.1754944e-38, %v3076
        %v3078 = vsel %vm3075, %v3077, %v3073
        %v3079 = vmul.f32 %v3054, %v3078
        %v3080 = vmin.f32 %v3079, 1.0
        %v3081 = vmax.f32 %v3080, -1.0
        %v3082 = vmul.f32 %v2879, %v2879
        %v3083 = vmin.f32 16.0, %v3082
        %v3084 = vmul.f32 %v3083, 2.1237322e-06
        %v3085 = vadd.f32 %v3084, 0.00028619796
        %v3086 = vmul.f32 %v3083, %v3085
        %v3087 = vadd.f32 %v3086, 0.0036580483
        %v3088 = vmul.f32 %v3083, %v3087
        %v3089 = vadd.f32 %v3088, 0.05243302
        %v3090 = vmul.f32 %v3083, %v3089
        %v3091 = vadd.f32 %v3090, 0.18741608
        %v3092 = vmul.f32 %v3083, %v3091
        %v3093 = vadd.f32 %v3092, 1.1283791
        %v3094 = vmul.f32 %v2879, %v3093
        %v3095 = vmul.f32 %v3083, 3.8918573e-05
        %v3096 = vadd.f32 %v3095, 0.001143296
        %v3097 = vmul.f32 %v3083, %v3096
        %v3098 = vadd.f32 %v3097, 0.014752088
        %v3099 = vmul.f32 %v3083, %v3098
        %v3100 = vadd.f32 %v3099, 0.112945676
        %v3101 = vmul.f32 %v3083, %v3100
        %v3102 = vadd.f32 %v3101, 0.4994258
        %v3103 = vmul.f32 %v3083, %v3102
        %v3104 = vadd.f32 %v3103, 1.0
        %v3105 = vrcp.pop %v3104
        %v3106 = vmul.f32 %v3104, %v3105
        %v3107 = vsub.f32 1.0, %v3106
        %v3108 = vmul.f32 %v3105, %v3107
        %v3109 = vadd.f32 %v3105, %v3108
        %vm3110 = vweird.f32 %v3104
        %vm3111 = vweird.f32 %v3105
        %vm3112 = vmor %vm3110, %vm3111
        %v3113 = vsel %vm3112, %v3105, %v3109
        %v3114 = vand.u32 2147483647, %v3104
        %vm3115 = vcmp.eq.f32.partialorder %v3114, 8.507059e+37
        %v3116 = vand.u32 %v3104, 2147483648
        %v3117 = vor.u32 1.1754944e-38, %v3116
        %v3118 = vsel %vm3115, %v3117, %v3113
        %v3119 = vmul.f32 %v3094, %v3118
        %v3120 = vmin.f32 %v3119, 1.0
        %v3121 = vmax.f32 %v3120, -1.0
        %v3122 = vmul.f32 %v2880, %v2880
        %v3123 = vmin.f32 16.0, %v3122
        %v3124 = vmul.f32 %v3123, 2.1237322e-06
        %v3125 = vadd.f32 %v3124, 0.00028619796
        %v3126 = vmul.f32 %v3123, %v3125
        %v3127 = vadd.f32 %v3126, 0.0036580483
        %v3128 = vmul.f32 %v3123, %v3127
        %v3129 = vadd.f32 %v3128, 0.05243302
        %v3130 = vmul.f32 %v3123, %v3129
        %v3131 = vadd.f32 %v3130, 0.18741608
        %v3132 = vmul.f32 %v3123, %v3131
        %v3133 = vadd.f32 %v3132, 1.1283791
        %v3134 = vmul.f32 %v2880, %v3133
        %v3135 = vmul.f32 %v3123, 3.8918573e-05
        %v3136 = vadd.f32 %v3135, 0.001143296
        %v3137 = vmul.f32 %v3123, %v3136
        %v3138 = vadd.f32 %v3137, 0.014752088
        %v3139 = vmul.f32 %v3123, %v3138
        %v3140 = vadd.f32 %v3139, 0.112945676
        %v3141 = vmul.f32 %v3123, %v3140
        %v3142 = vadd.f32 %v3141, 0.4994258
        %v3143 = vmul.f32 %v3123, %v3142
        %v3144 = vadd.f32 %v3143, 1.0
        %v3145 = vrcp.pop %v3144
        %v3146 = vmul.f32 %v3144, %v3145
        %v3147 = vsub.f32 1.0, %v3146
        %v3148 = vmul.f32 %v3145, %v3147
        %v3149 = vadd.f32 %v3145, %v3148
        %vm3150 = vweird.f32 %v3144
        %vm3151 = vweird.f32 %v3145
        %vm3152 = vmor %vm3150, %vm3151
        %v3153 = vsel %vm3152, %v3145, %v3149
        %v3154 = vand.u32 2147483647, %v3144
        %vm3155 = vcmp.eq.f32.partialorder %v3154, 8.507059e+37
        %v3156 = vand.u32 %v3144, 2147483648
        %v3157 = vor.u32 1.1754944e-38, %v3156
        %v3158 = vsel %vm3155, %v3157, %v3153
        %v3159 = vmul.f32 %v3134, %v3158
        %v3160 = vmin.f32 %v3159, 1.0
        %v3161 = vmax.f32 %v3160, -1.0
        %v3162 = vmul.f32 %v2881, %v2881
        %v3163 = vmin.f32 16.0, %v3162
        %v3164 = vmul.f32 %v3163, 2.1237322e-06
        %v3165 = vadd.f32 %v3164, 0.00028619796
        %v3166 = vmul.f32 %v3163, %v3165
        %v3167 = vadd.f32 %v3166, 0.0036580483
        %v3168 = vmul.f32 %v3163, %v3167
        %v3169 = vadd.f32 %v3168, 0.05243302
        %v3170 = vmul.f32 %v3163, %v3169
        %v3171 = vadd.f32 %v3170, 0.18741608
        %v3172 = vmul.f32 %v3163, %v3171
        %v3173 = vadd.f32 %v3172, 1.1283791
        %v3174 = vmul.f32 %v2881, %v3173
        %v3175 = vmul.f32 %v3163, 3.8918573e-05
        %v3176 = vadd.f32 %v3175, 0.001143296
        %v3177 = vmul.f32 %v3163, %v3176
        %v3178 = vadd.f32 %v3177, 0.014752088
        %v3179 = vmul.f32 %v3163, %v3178
        %v3180 = vadd.f32 %v3179, 0.112945676
        %v3181 = vmul.f32 %v3163, %v3180
        %v3182 = vadd.f32 %v3181, 0.4994258
        %v3183 = vmul.f32 %v3163, %v3182
        %v3184 = vadd.f32 %v3183, 1.0
        %v3185 = vrcp.pop %v3184
        %v3186 = vmul.f32 %v3184, %v3185
        %v3187 = vsub.f32 1.0, %v3186
        %v3188 = vmul.f32 %v3185, %v3187
        %v3189 = vadd.f32 %v3185, %v3188
        %vm3190 = vweird.f32 %v3184
        %vm3191 = vweird.f32 %v3185
        %vm3192 = vmor %vm3190, %vm3191
        %v3193 = vsel %vm3192, %v3185, %v3189
        %v3194 = vand.u32 2147483647, %v3184
        %vm3195 = vcmp.eq.f32.partialorder %v3194, 8.507059e+37
        %v3196 = vand.u32 %v3184, 2147483648
        %v3197 = vor.u32 1.1754944e-38, %v3196
        %v3198 = vsel %vm3195, %v3197, %v3193
        %v3199 = vmul.f32 %v3174, %v3198
        %v3200 = vmin.f32 %v3199, 1.0
        %v3201 = vmax.f32 %v3200, -1.0
        %v3202 = vadd.f32 %v2921, 1.0
        %v3203 = vadd.f32 %v2961, 1.0
        %v3204 = vadd.f32 %v3001, 1.0
        %v3205 = vadd.f32 %v3041, 1.0
        %v3206 = vadd.f32 %v3081, 1.0
        %v3207 = vadd.f32 %v3121, 1.0
        %v3208 = vadd.f32 %v3161, 1.0
        %v3209 = vadd.f32 %v3201, 1.0
        %v3210 = vmul.f32 %v2866, %v3202
        %v3211 = vmul.f32 %v2867, %v3203
        %v3212 = vmul.f32 %v2868, %v3204
        %v3213 = vmul.f32 %v2869, %v3205
        %v3214 = vmul.f32 %v2870, %v3206
        %v3215 = vmul.f32 %v2871, %v3207
        %v3216 = vmul.f32 %v2872, %v3208
        %v3217 = vmul.f32 %v2873, %v3209
        %v3218 = vld [vmem:[%s12] sm:$0xff]
        %v3219 = vld [vmem:[%s12 + $0x8] sm:$0xff]
        %v3220 = vld [vmem:[%s12 + $0x10] sm:$0xff]
        %v3221 = vld [vmem:[%s12 + $0x18] sm:$0xff]
        %v3222 = vld [vmem:[%s12 + $0x20] sm:$0xff]
        %v3223 = vld [vmem:[%s12 + $0x28] sm:$0xff]
        %v3224 = vld [vmem:[%s12 + $0x30] sm:$0xff]
        %v3225 = vld [vmem:[%s12 + $0x38] sm:$0xff]
        %v3226 = vld [vmem:[%s12 + $0x40] sm:$0xff]
        %v3227 = vld [vmem:[%s12 + $0x48] sm:$0xff]
        %v3228 = vld [vmem:[%s12 + $0x50] sm:$0xff]
        %v3229 = vld [vmem:[%s12 + $0x58] sm:$0xff]
        %v3230 = vld [vmem:[%s12 + $0x60] sm:$0xff]
        %v3231 = vld [vmem:[%s12 + $0x68] sm:$0xff]
        %v3232 = vld [vmem:[%s12 + $0x70] sm:$0xff]
        %v3233 = vld [vmem:[%s12 + $0x78] sm:$0xff]
        %v3234 = vld [vmem:[%s13] sm:$0x1]
        %v3236 = vperm.slane %v3234, 0
        %3238 = vmatpush.msra.mxu0 %v3233
        %3239 = vmatpush.msra.mxu0 %v3232
        %3240 = vmatpush.msra.mxu0 %v3231
        %3241 = vmatpush.msra.mxu0 %v3230
        %3242 = vmatpush.msra.mxu0 %v3229
        %3243 = vmatpush.msra.mxu0 %v3228
        %3244 = vmatpush.msra.mxu0 %v3227
        %3245 = vmatpush.msra.mxu0 %v3226
        %3246 = vmatpush.msra.mxu0 %v3225
        %3247 = vmatpush.msra.mxu0 %v3224
        %3248 = vmatpush.msra.mxu0 %v3223
        %3249 = vmatpush.msra.mxu0 %v3222
        %3250 = vmatpush.msra.mxu0 %v3221
        %3251 = vmatpush.msra.mxu0 %v3220
        %3252 = vmatpush.msra.mxu0 %v3219
        %3253 = vmatpush.msra.mxu0 %v3218
        %3254 = vmatmul.f32.gmra.mxu0 %v3210
        %v3255 = vpop.f32.mrf.mxu0
        %v3256 = vadd.f32 %v3236, %v3255
        %3257 = vmatmul.f32.gmra.mxu0 %v3211
        %v3258 = vpop.f32.mrf.mxu0
        %v3259 = vadd.f32 %v3236, %v3258
        %3260 = vmatmul.f32.gmra.mxu0 %v3212
        %v3261 = vpop.f32.mrf.mxu0
        %v3262 = vadd.f32 %v3236, %v3261
        %3263 = vmatmul.f32.gmra.mxu0 %v3213
        %v3264 = vpop.f32.mrf.mxu0
        %v3265 = vadd.f32 %v3236, %v3264
        %3266 = vmatmul.f32.gmra.mxu0 %v3214
        %v3267 = vpop.f32.mrf.mxu0
        %v3268 = vadd.f32 %v3236, %v3267
        %3269 = vmatmul.f32.gmra.mxu0 %v3215
        %v3270 = vpop.f32.mrf.mxu0
        %v3271 = vadd.f32 %v3236, %v3270
        %3272 = vmatmul.f32.gmra.mxu0 %v3216
        %v3273 = vpop.f32.mrf.mxu0
        %v3274 = vadd.f32 %v3236, %v3273
        %3275 = vmatmul.f32.gmra.mxu0 %v3217
        %v3276 = vpop.f32.mrf.mxu0
        %v3277 = vadd.f32 %v3236, %v3276
        %3278 = vdwg.mxu0
        %v3279 = vadd.f32 %v2585, %v3256
        %v3280 = vadd.f32 %v2586, %v3259
        %v3281 = vadd.f32 %v2587, %v3262
        %v3282 = vadd.f32 %v2588, %v3265
        %v3283 = vadd.f32 %v2589, %v3268
        %v3284 = vadd.f32 %v2590, %v3271
        %v3285 = vadd.f32 %v2591, %v3274
        %v3286 = vadd.f32 %v2592, %v3277
        %3287 = vxpose.xlu0.b32.start [1/16] %v3279, 128
        %3288 = vxpose.xlu0.b32.cont [2/16] %v3280, 128
        %3289 = vxpose.xlu0.b32.cont [3/16] %v3281, 128
        %3290 = vxpose.xlu0.b32.cont [4/16] %v3282, 128
        %3291 = vxpose.xlu0.b32.cont [5/16] %v3283, 128
        %3292 = vxpose.xlu0.b32.cont [6/16] %v3284, 128
        %3293 = vxpose.xlu0.b32.cont [7/16] %v3285, 128
        %3294 = vxpose.xlu0.b32.cont [8/16] %v3286, 128
        %3295 = vxpose.xlu0.b32.cont [9/16] 0.0, 128
        %3296 = vxpose.xlu0.b32.cont [10/16] 0.0, 128
        %3297 = vxpose.xlu0.b32.cont [11/16] 0.0, 128
        %3298 = vxpose.xlu0.b32.cont [12/16] 0.0, 128
        %3299 = vxpose.xlu0.b32.cont [13/16] 0.0, 128
        %3300 = vxpose.xlu0.b32.cont [14/16] 0.0, 128
        %3301 = vxpose.xlu0.b32.cont [15/16] 0.0, 128
        %3302 = vxpose.xlu0.b32.end [16/16] 0.0, 128
        %v3303 = vpop.trf.xlu0
        %v3304 = vpop.trf.xlu0
        %v3305 = vpop.trf.xlu0
        %v3306 = vpop.trf.xlu0
        %v3307 = vpop.trf.xlu0
        %v3308 = vpop.trf.xlu0
        %v3309 = vpop.trf.xlu0
        %v3310 = vpop.trf.xlu0
        %v3311 = vpop.trf.xlu0
        %v3312 = vpop.trf.xlu0
        %v3313 = vpop.trf.xlu0
        %v3314 = vpop.trf.xlu0
        %v3315 = vpop.trf.xlu0
        %v3316 = vpop.trf.xlu0
        %v3317 = vpop.trf.xlu0
        %v3318 = vpop.trf.xlu0
        %3319 = vst.msk [vmem:[%s506] sm:$0xff] %vm923, %v3303
        %3320 = vst.msk [vmem:[%s506 + $0x8] sm:$0xff] %vm923, %v3304
        %3321 = vst.msk [vmem:[%s506 + $0x10] sm:$0xff] %vm923, %v3305
        %3322 = vst.msk [vmem:[%s506 + $0x18] sm:$0xff] %vm923, %v3306
        %s3323 = sand.u32 %s337, 1
        %s3324 = scalar_lea.sflag [#allocation4], %s3323
        %s3325 = sand.u32 %s337, 1
        %s3326 = smul.addr %s3325, 32
        %s3327 = scalar_lea.vmem [#allocation8], %s3326
        // Predicated region
        $region89: #{tpu_custom_call.1} parent=75 // pred_check
          %p3328 = pneg %p347
        $region90: #{tpu_custom_call.1} parent=75 // pred_check_branch
          %3330 = sbr.rel (%p3328) target = $region92
        $region91: #{tpu_custom_call.1} parent=75 // pred_region
          %3332 = vsyncadd %s3324, 0
          %s3333 = smul.addr %s30, 4
          %s3334 = smul.addr %s3333, 8
          %s3335 = scalar_lea.hbm %s14, %s3334
          %s3336 = sshll.u32 %s3327, 4
          %s3337 = int_to_ptr.vmem [resolvable:$true] %s3336
          %s3338 = sshll.u32 %s3335, 4
          %s3339 = int_to_ptr.hbm [resolvable:$true] %s3338
          %3344 = dma.vmem_to_hbm [thread:$0]  %s3337, 512, %s3339, %s3324, 128, 128, 8
        $region92: #{tpu_custom_call.1} parent=75 // pred_fallthru
          _
      $region76: #{tpu_custom_call.1} parent=5 // pred_fallthru
        _
      %p3345 = scmp.le.s32.totalorder 2, %s25
      // Predicated region
      $region93: #{tpu_custom_call.1} parent=5 // pred_check
        %p3346 = pneg %p3345
      $region94: #{tpu_custom_call.1} parent=5 // pred_check_branch
        %3348 = sbr.rel (%p3346) target = $region96
      $region95: #{tpu_custom_call.1} parent=5 // pred_region
        %s3349 = ssub.s32 %s25, 2
        // Predicated region
        $region97: #{tpu_custom_call.1} parent=95 // pred_check
          %p3350 = pneg %p353
        $region98: #{tpu_custom_call.1} parent=95 // pred_check_branch
          %3352 = sbr.rel (%p3350) target = $region100
        $region99: #{tpu_custom_call.1} parent=95 // pred_region
          %s3353 = sand.u32 %s338, 1
          %s3354 = scalar_lea.sflag [#allocation4], %s3353
          %s3355 = sand.u32 %s338, 1
          %s3356 = smul.addr %s3355, 32
          %s3357 = scalar_lea.vmem [#allocation8], %s3356
          %3359 = dma.done %s3354, 512
        $region100: #{tpu_custom_call.1} parent=95 // pred_fallthru
          _
      $region96: #{tpu_custom_call.1} parent=5 // pred_fallthru
        _
    $region6: #{tpu_custom_call.1} parent=1 // loop_footer
      %s29 = sadd.s32 1, %s25
    $region7: #{tpu_custom_call.1} parent=1 // loop_footer_branch
      %24 = sbr.rel target = $region3
    $region8: #{tpu_custom_call.1} parent=1 // loop_exit
      _
    %3360 = vsyncpa [#allocation3], 1
    %s3361 = scalar_lea.sflag [#allocation3], 1
    %3362 = vsyncpa %s3361, 1
    %3363 = vsyncpa [#allocation6], 1
    %3364 = vsyncpa [#allocation4], 1
    %s3365 = scalar_lea.sflag [#allocation4], 1
    %3366 = vsyncpa %s3365, 1

</llo_original>
